<compile_context>
chip_gen: v6e
topology: v6e:2x2x1
jax: 0.10.0
libtpu: 0.0.40
codegen_flags: <defaults>
</compile_context>

<pallas_src>
import math
import jax
import jax.numpy as jnp
from jax.experimental import pallas as pl
from jax.experimental.pallas import tpu as pltpu

# --- small roberta-like config ------------------------------------------------
VOCAB = 64
PAD_ID = 1          # config.pad_token_id
B = 2               # batch
S = 8               # sequence length
D = 32              # hidden_size (d_model / "width")
H = 4               # num_attention_heads
HEAD_DIM = D // H
FFN = 64            # intermediate_size
LAYERS = 2          # num_hidden_layers
OUT_DIM = 16        # output_dim
PROJ_HID = (D + OUT_DIM) // 2   # proj == 'mlp' hidden size
OUT_PAD = 128       # lane-dense output slab width (sliced to OUT_DIM outside)
LN_EPS = 1e-5
PARAMS_PER_LAYER = 16


def _layernorm(x, gamma, beta):
    mu = jnp.mean(x, axis=-1, keepdims=True)
    var = jnp.mean((x - mu) ** 2, axis=-1, keepdims=True)
    return (x - mu) * jax.lax.rsqrt(var + LN_EPS) * gamma + beta


def _gelu(x):
    # TODO(synk): PyTorch nn.GELU / HF "gelu" use exact erf; tanh approximation
    # used here for Mosaic-supported transcendentals.
    return jax.nn.gelu(x, approximate=True)


# --- single fused Pallas kernel: all layers + pooler + projection -------------
def fused_encoder_kernel(h0_ref, bias_ref, mask3_ref, *rest):
    n_lw = LAYERS * PARAMS_PER_LAYER
    layer_refs = rest[:n_lw]
    wp1_ref = rest[n_lw]          # (D, PROJ_HID)      bf16
    wp2_ref = rest[n_lw + 1]      # (PROJ_HID, OUT_PAD) bf16, zero-padded cols
    out_ref = rest[n_lw + 2]      # (B, OUT_PAD)        f32
    ctx_ref = rest[n_lw + 3]      # VMEM scratch (B, S, D) f32

    scale = 1.0 / math.sqrt(HEAD_DIM)

    # residual stream kept flattened: (B*S, D) f32, resident in VMEM/vregs
    h = h0_ref[...].reshape(B * S, D)

    # additive key mask, broadcast ONCE (reused across all heads & layers)
    bias_b = jnp.broadcast_to(bias_ref[...], (B, S, S))          # (B, S, S) f32

    for l in range(LAYERS):                                      # static unroll
        (wq, bq, wk, bk, wv, bv, wo, bo,
         ln1_g, ln1_b, w1, b1, w2, b2, ln2_g, ln2_b) = \
            layer_refs[l * PARAMS_PER_LAYER:(l + 1) * PARAMS_PER_LAYER]

        x = h
        xb = x.astype(jnp.bfloat16)
        q = jnp.dot(xb, wq[...], preferred_element_type=jnp.float32) + bq[...]
        k = jnp.dot(xb, wk[...], preferred_element_type=jnp.float32) + bk[...]
        v = jnp.dot(xb, wv[...], preferred_element_type=jnp.float32) + bv[...]
        q = q * scale                                            # hoisted scaling
        q3 = q.reshape(B, S, D)
        k3 = k.reshape(B, S, D)
        v3 = v.reshape(B, S, D)

        for hh in range(H):                                      # static head loop
            sl = slice(hh * HEAD_DIM, (hh + 1) * HEAD_DIM)
            # batched over B, contraction on last dims -> no transposes
            s = jnp.einsum('bqd,bkd->bqk', q3[:, :, sl], k3[:, :, sl],
                           preferred_element_type=jnp.float32) + bias_b
            s = s - jnp.max(s, axis=-1, keepdims=True)
            p = jnp.exp(s)
            p = p * pl.reciprocal(jnp.sum(p, axis=-1, keepdims=True), approx=True)
            # write head output at a static lane slice (no concatenate)
            ctx_ref[:, :, sl] = jnp.einsum('bqk,bkd->bqd', p, v3[:, :, sl],
                                           preferred_element_type=jnp.float32)

        ctx = ctx_ref[...].reshape(B * S, D).astype(jnp.bfloat16)
        attn_out = jnp.dot(ctx, wo[...], preferred_element_type=jnp.float32) + bo[...]
        h1 = _layernorm(x + attn_out, ln1_g[...], ln1_b[...])

        ff = jnp.dot(h1.astype(jnp.bfloat16), w1[...],
                     preferred_element_type=jnp.float32) + b1[...]
        ff = _gelu(ff)
        ff = jnp.dot(ff.astype(jnp.bfloat16), w2[...],
                     preferred_element_type=jnp.float32) + b2[...]
        h = _layernorm(h1 + ff, ln2_g[...], ln2_b[...])

    # --- masked mean pooling (vectorized over batch) + MLP projection ---------
    h3 = h.reshape(B, S, D)
    m3 = mask3_ref[...]                                          # (B, S, 1) f32
    num = jnp.sum(h3 * m3, axis=1)                               # (B, D)
    den = jnp.maximum(jnp.sum(m3, axis=1), 1.0)                  # clamp: all-pad rows
    pooled = num * pl.reciprocal(den, approx=True)               # (B, D)

    z = jnp.dot(pooled.astype(jnp.bfloat16), wp1_ref[...],
                preferred_element_type=jnp.float32)
    z = _gelu(z)
    # lane-dense (B, 128) store; true output lives in the first OUT_DIM lanes
    out_ref[...] = jnp.dot(z.astype(jnp.bfloat16), wp2_ref[...],
                           preferred_element_type=jnp.float32)


def run_fused(h0, bias, mask3, layer_flat, wp1, wp2p):
    # No grid: total state is a few hundred KB, the whole forward runs as one
    # grid step with every array resident in VMEM (default whole-array blocks).
    return pl.pallas_call(
        fused_encoder_kernel,
        out_shape=jax.ShapeDtypeStruct((B, OUT_PAD), jnp.float32),
        scratch_shapes=[pltpu.VMEM((B, S, D), jnp.float32)],
    )(h0, bias, mask3, *layer_flat, wp1, wp2p)


# --- plain-JAX glue: embeddings + param init ----------------------------------
def embed(x, params):
    mask = (x != PAD_ID).astype(jnp.int32)                 # attn_mask = (x != pad_token_id)
    # roberta-style position ids: cumsum of mask offset by padding_idx
    pos_ids = jnp.cumsum(mask, axis=1) * mask + PAD_ID
    e = (params['word_emb'][x]
         + params['pos_emb'][pos_ids]
         + params['type_emb'][0])
    mu = e.mean(-1, keepdims=True)
    var = ((e - mu) ** 2).mean(-1, keepdims=True)
    e = (e - mu) / jnp.sqrt(var + LN_EPS) * params['emb_ln_g'] + params['emb_ln_b']
    return e.astype(jnp.float32), mask


def init_params(key):
    ks = jax.random.split(key, 8)

    def nrm(k, shape, scale=0.02, dtype=jnp.float32):
        return (jax.random.normal(k, shape, jnp.float32) * scale).astype(dtype)

    # proj == 'mlp': Linear(D, PROJ_HID, bias=False) -> GELU -> Linear(PROJ_HID, OUT_DIM, bias=False)
    w2 = nrm(ks[4], (PROJ_HID, OUT_DIM))
    w2_pad = jnp.zeros((PROJ_HID, OUT_PAD), jnp.float32).at[:, :OUT_DIM].set(w2)

    params = {
        'word_emb': nrm(ks[0], (VOCAB, D)),
        'pos_emb':  nrm(ks[1], (S + PAD_ID + 2, D)),
        'type_emb': nrm(ks[2], (1, D)),
        'emb_ln_g': jnp.ones((D,), jnp.float32),
        'emb_ln_b': jnp.zeros((D,), jnp.float32),
        'proj_w1':  nrm(ks[3], (D, PROJ_HID), dtype=jnp.bfloat16),
        'proj_w2p': w2_pad.astype(jnp.bfloat16),          # zero-padded to 128 lanes
        'layers': [],
    }
    for l in range(LAYERS):
        lk = jax.random.split(ks[5 + l], 6)
        params['layers'].append({
            'wq': nrm(lk[0], (D, D), dtype=jnp.bfloat16), 'bq': jnp.zeros((1, D), jnp.float32),
            'wk': nrm(lk[1], (D, D), dtype=jnp.bfloat16), 'bk': jnp.zeros((1, D), jnp.float32),
            'wv': nrm(lk[2], (D, D), dtype=jnp.bfloat16), 'bv': jnp.zeros((1, D), jnp.float32),
            'wo': nrm(lk[3], (D, D), dtype=jnp.bfloat16), 'bo': jnp.zeros((1, D), jnp.float32),
            'ln1_g': jnp.ones((1, D), jnp.float32), 'ln1_b': jnp.zeros((1, D), jnp.float32),
            'w1': nrm(lk[4], (D, FFN), dtype=jnp.bfloat16), 'b1': jnp.zeros((1, FFN), jnp.float32),
            'w2': nrm(lk[5], (FFN, D), dtype=jnp.bfloat16), 'b2': jnp.zeros((1, D), jnp.float32),
            'ln2_g': jnp.ones((1, D), jnp.float32), 'ln2_b': jnp.zeros((1, D), jnp.float32),
        })
    return params


def forward(x, params):
    h0, mask = embed(x, params)
    maskf = mask.astype(jnp.float32)
    bias = ((1.0 - maskf) * -1e9).reshape(B, 1, S)        # additive attention mask (key axis), f32
    mask3 = maskf.reshape(B, S, 1)                        # pooling mask

    layer_flat = []
    for lp in params['layers']:
        layer_flat += [lp['wq'], lp['bq'], lp['wk'], lp['bk'], lp['wv'], lp['bv'],
                       lp['wo'], lp['bo'], lp['ln1_g'], lp['ln1_b'],
                       lp['w1'], lp['b1'], lp['w2'], lp['b2'], lp['ln2_g'], lp['ln2_b']]

    out_pad = run_fused(h0, bias, mask3, layer_flat, params['proj_w1'], params['proj_w2p'])
    return out_pad[:, :OUT_DIM]


if __name__ == "__main__":
    key = jax.random.PRNGKey(0)
    pkey, xkey = jax.random.split(key)
    params = init_params(pkey)

    x = jax.random.randint(xkey, (B, S), 0, VOCAB, dtype=jnp.int32)
    # avoid accidental pad ids in the prefix, then force real padding at the tail
    x = jnp.where(x == PAD_ID, PAD_ID + 1, x)
    x = x.at[:, -2:].set(PAD_ID)

    out = jax.jit(forward)(x, params)
    jax.block_until_ready(out)
    assert out.shape == (B, OUT_DIM) and out.dtype == jnp.float32
    print("KERNEL_OK")
</pallas_src>

<mosaic_0001>
module attributes {stable_mosaic.version = 11 : i64} {
  func.func @fused_encoder_kernel(%arg0: memref<2x8x32xf32, #tpu.memory_space<vmem>>, %arg1: memref<2x1x8xf32, #tpu.memory_space<vmem>>, %arg2: memref<2x8x1xf32, #tpu.memory_space<vmem>>, %arg3: memref<32x32xbf16, #tpu.memory_space<vmem>>, %arg4: memref<1x32xf32, #tpu.memory_space<vmem>>, %arg5: memref<32x32xbf16, #tpu.memory_space<vmem>>, %arg6: memref<1x32xf32, #tpu.memory_space<vmem>>, %arg7: memref<32x32xbf16, #tpu.memory_space<vmem>>, %arg8: memref<1x32xf32, #tpu.memory_space<vmem>>, %arg9: memref<32x32xbf16, #tpu.memory_space<vmem>>, %arg10: memref<1x32xf32, #tpu.memory_space<vmem>>, %arg11: memref<1x32xf32, #tpu.memory_space<vmem>>, %arg12: memref<1x32xf32, #tpu.memory_space<vmem>>, %arg13: memref<32x64xbf16, #tpu.memory_space<vmem>>, %arg14: memref<1x64xf32, #tpu.memory_space<vmem>>, %arg15: memref<64x32xbf16, #tpu.memory_space<vmem>>, %arg16: memref<1x32xf32, #tpu.memory_space<vmem>>, %arg17: memref<1x32xf32, #tpu.memory_space<vmem>>, %arg18: memref<1x32xf32, #tpu.memory_space<vmem>>, %arg19: memref<32x32xbf16, #tpu.memory_space<vmem>>, %arg20: memref<1x32xf32, #tpu.memory_space<vmem>>, %arg21: memref<32x32xbf16, #tpu.memory_space<vmem>>, %arg22: memref<1x32xf32, #tpu.memory_space<vmem>>, %arg23: memref<32x32xbf16, #tpu.memory_space<vmem>>, %arg24: memref<1x32xf32, #tpu.memory_space<vmem>>, %arg25: memref<32x32xbf16, #tpu.memory_space<vmem>>, %arg26: memref<1x32xf32, #tpu.memory_space<vmem>>, %arg27: memref<1x32xf32, #tpu.memory_space<vmem>>, %arg28: memref<1x32xf32, #tpu.memory_space<vmem>>, %arg29: memref<32x64xbf16, #tpu.memory_space<vmem>>, %arg30: memref<1x64xf32, #tpu.memory_space<vmem>>, %arg31: memref<64x32xbf16, #tpu.memory_space<vmem>>, %arg32: memref<1x32xf32, #tpu.memory_space<vmem>>, %arg33: memref<1x32xf32, #tpu.memory_space<vmem>>, %arg34: memref<1x32xf32, #tpu.memory_space<vmem>>, %arg35: memref<32x24xbf16, #tpu.memory_space<vmem>>, %arg36: memref<24x128xbf16, #tpu.memory_space<vmem>>, %arg37: memref<2x128xf32, #tpu.memory_space<vmem>>, %arg38: memref<2x8x32xf32, #tpu.memory_space<vmem>>) attributes {dimension_semantics = [], scalar_prefetch = 0 : i64, scratch_operands = 1 : i64, tpu.core_type = #tpu.core_type<tc>} {
    %c0 = arith.constant 0 : index
    %c0_0 = arith.constant 0 : index
    %c0_1 = arith.constant 0 : index
    %0 = vector.load %arg0[%c0, %c0_0, %c0_1] : memref<2x8x32xf32, #tpu.memory_space<vmem>>, vector<2x8x32xf32>
    %1 = vector.shape_cast %0 : vector<2x8x32xf32> to vector<16x32xf32>
    %c0_2 = arith.constant 0 : index
    %c0_3 = arith.constant 0 : index
    %c0_4 = arith.constant 0 : index
    %2 = vector.load %arg1[%c0_2, %c0_3, %c0_4] : memref<2x1x8xf32, #tpu.memory_space<vmem>>, vector<2x1x8xf32>
    %3 = vector.shape_cast %2 : vector<2x1x8xf32> to vector<2x1x8xf32>
    %4 = vector.broadcast %3 : vector<2x1x8xf32> to vector<2x8x8xf32>
    %5 = arith.truncf %1 : vector<16x32xf32> to vector<16x32xbf16>
    %c0_5 = arith.constant 0 : index
    %c0_6 = arith.constant 0 : index
    %6 = vector.load %arg3[%c0_5, %c0_6] : memref<32x32xbf16, #tpu.memory_space<vmem>>, vector<32x32xbf16>
    %cst = arith.constant dense<0.000000e+00> : vector<16x32xf32>
    %7 = tpu.matmul %5, %6, %cst {dimension_numbers = #tpu.dot_dimension_numbers<[1], [0], [0], [1], [0, 0, 1, 1], [], []>} : vector<16x32xbf16>, vector<32x32xbf16>, vector<16x32xf32> -> vector<16x32xf32>
    %c0_7 = arith.constant 0 : index
    %c0_8 = arith.constant 0 : index
    %8 = vector.load %arg4[%c0_7, %c0_8] : memref<1x32xf32, #tpu.memory_space<vmem>>, vector<1x32xf32>
    %9 = vector.broadcast %8 : vector<1x32xf32> to vector<16x32xf32>
    %10 = arith.addf %7, %9 : vector<16x32xf32>
    %c0_9 = arith.constant 0 : index
    %c0_10 = arith.constant 0 : index
    %11 = vector.load %arg5[%c0_9, %c0_10] : memref<32x32xbf16, #tpu.memory_space<vmem>>, vector<32x32xbf16>
    %cst_11 = arith.constant dense<0.000000e+00> : vector<16x32xf32>
    %12 = tpu.matmul %5, %11, %cst_11 {dimension_numbers = #tpu.dot_dimension_numbers<[1], [0], [0], [1], [0, 0, 1, 1], [], []>} : vector<16x32xbf16>, vector<32x32xbf16>, vector<16x32xf32> -> vector<16x32xf32>
    %c0_12 = arith.constant 0 : index
    %c0_13 = arith.constant 0 : index
    %13 = vector.load %arg6[%c0_12, %c0_13] : memref<1x32xf32, #tpu.memory_space<vmem>>, vector<1x32xf32>
    %14 = vector.broadcast %13 : vector<1x32xf32> to vector<16x32xf32>
    %15 = arith.addf %12, %14 : vector<16x32xf32>
    %c0_14 = arith.constant 0 : index
    %c0_15 = arith.constant 0 : index
    %16 = vector.load %arg7[%c0_14, %c0_15] : memref<32x32xbf16, #tpu.memory_space<vmem>>, vector<32x32xbf16>
    %cst_16 = arith.constant dense<0.000000e+00> : vector<16x32xf32>
    %17 = tpu.matmul %5, %16, %cst_16 {dimension_numbers = #tpu.dot_dimension_numbers<[1], [0], [0], [1], [0, 0, 1, 1], [], []>} : vector<16x32xbf16>, vector<32x32xbf16>, vector<16x32xf32> -> vector<16x32xf32>
    %c0_17 = arith.constant 0 : index
    %c0_18 = arith.constant 0 : index
    %18 = vector.load %arg8[%c0_17, %c0_18] : memref<1x32xf32, #tpu.memory_space<vmem>>, vector<1x32xf32>
    %19 = vector.broadcast %18 : vector<1x32xf32> to vector<16x32xf32>
    %20 = arith.addf %17, %19 : vector<16x32xf32>
    %cst_19 = arith.constant 0.353553385 : f32
    %21 = vector.broadcast %cst_19 : f32 to vector<16x32xf32>
    %22 = arith.mulf %10, %21 : vector<16x32xf32>
    %23 = vector.shape_cast %22 : vector<16x32xf32> to vector<2x8x32xf32>
    %24 = vector.shape_cast %15 : vector<16x32xf32> to vector<2x8x32xf32>
    %25 = vector.shape_cast %20 : vector<16x32xf32> to vector<2x8x32xf32>
    %26 = vector.extract_strided_slice %23 {offsets = [0, 0, 0], sizes = [2, 8, 8], strides = [1, 1, 1]} : vector<2x8x32xf32> to vector<2x8x8xf32>
    %27 = vector.extract_strided_slice %24 {offsets = [0, 0, 0], sizes = [2, 8, 8], strides = [1, 1, 1]} : vector<2x8x32xf32> to vector<2x8x8xf32>
    "tpu.trace_start"() <{level = 10 : i32, message = "bqd,bkd->bqk"}> : () -> ()
    %cst_20 = arith.constant dense<0.000000e+00> : vector<2x8x8xf32>
    %28 = tpu.matmul %26, %27, %cst_20 {dimension_numbers = #tpu.dot_dimension_numbers<[2], [2], [1], [1], [0, 0, 0, 1, 1, 1], [0], [0]>} : vector<2x8x8xf32>, vector<2x8x8xf32>, vector<2x8x8xf32> -> vector<2x8x8xf32>
    "tpu.trace_stop"() : () -> ()
    %29 = arith.addf %28, %4 : vector<2x8x8xf32>
    %cst_21 = arith.constant dense<0xFF800000> : vector<2x8xf32>
    %30 = vector.multi_reduction <maximumf>, %29, %cst_21 [2] : vector<2x8x8xf32> to vector<2x8xf32>
    %31 = vector.shape_cast %30 : vector<2x8xf32> to vector<2x8x1xf32>
    %32 = vector.broadcast %31 : vector<2x8x1xf32> to vector<2x8x8xf32>
    %33 = arith.subf %29, %32 : vector<2x8x8xf32>
    %34 = math.exp %33 : vector<2x8x8xf32>
    %cst_22 = arith.constant dense<0.000000e+00> : vector<2x8xf32>
    %35 = vector.multi_reduction <add>, %34, %cst_22 [2] : vector<2x8x8xf32> to vector<2x8xf32>
    %36 = vector.shape_cast %35 : vector<2x8xf32> to vector<2x8x1xf32>
    %37 = tpu.reciprocal %36 {approx = true} : vector<2x8x1xf32> -> vector<2x8x1xf32>
    %38 = vector.broadcast %37 : vector<2x8x1xf32> to vector<2x8x8xf32>
    %39 = arith.mulf %34, %38 : vector<2x8x8xf32>
    %40 = vector.extract_strided_slice %25 {offsets = [0, 0, 0], sizes = [2, 8, 8], strides = [1, 1, 1]} : vector<2x8x32xf32> to vector<2x8x8xf32>
    "tpu.trace_start"() <{level = 10 : i32, message = "bqk,bkd->bqd"}> : () -> ()
    %cst_23 = arith.constant dense<0.000000e+00> : vector<2x8x8xf32>
    %41 = tpu.matmul %39, %40, %cst_23 {dimension_numbers = #tpu.dot_dimension_numbers<[2], [1], [1], [2], [0, 0, 0, 1, 1, 2], [0], [0]>} : vector<2x8x8xf32>, vector<2x8x8xf32>, vector<2x8x8xf32> -> vector<2x8x8xf32>
    "tpu.trace_stop"() : () -> ()
    %c0_24 = arith.constant 0 : index
    %c0_25 = arith.constant 0 : index
    %c0_26 = arith.constant 0 : index
    %42 = vector.load %arg38[%c0_24, %c0_25, %c0_26] : memref<2x8x32xf32, #tpu.memory_space<vmem>>, vector<2x8x8xf32>
    tpu.vector_store %arg38[%c0_24, %c0_25, %c0_26], %41 {strides = array<i32>} : memref<2x8x32xf32, #tpu.memory_space<vmem>>, vector<2x8x8xf32>,
    %43 = vector.extract_strided_slice %23 {offsets = [0, 0, 8], sizes = [2, 8, 8], strides = [1, 1, 1]} : vector<2x8x32xf32> to vector<2x8x8xf32>
    %44 = vector.extract_strided_slice %24 {offsets = [0, 0, 8], sizes = [2, 8, 8], strides = [1, 1, 1]} : vector<2x8x32xf32> to vector<2x8x8xf32>
    "tpu.trace_start"() <{level = 10 : i32, message = "bqd,bkd->bqk"}> : () -> ()
    %cst_27 = arith.constant dense<0.000000e+00> : vector<2x8x8xf32>
    %45 = tpu.matmul %43, %44, %cst_27 {dimension_numbers = #tpu.dot_dimension_numbers<[2], [2], [1], [1], [0, 0, 0, 1, 1, 1], [0], [0]>} : vector<2x8x8xf32>, vector<2x8x8xf32>, vector<2x8x8xf32> -> vector<2x8x8xf32>
    "tpu.trace_stop"() : () -> ()
    %46 = arith.addf %45, %4 : vector<2x8x8xf32>
    %cst_28 = arith.constant dense<0xFF800000> : vector<2x8xf32>
    %47 = vector.multi_reduction <maximumf>, %46, %cst_28 [2] : vector<2x8x8xf32> to vector<2x8xf32>
    %48 = vector.shape_cast %47 : vector<2x8xf32> to vector<2x8x1xf32>
    %49 = vector.broadcast %48 : vector<2x8x1xf32> to vector<2x8x8xf32>
    %50 = arith.subf %46, %49 : vector<2x8x8xf32>
    %51 = math.exp %50 : vector<2x8x8xf32>
    %cst_29 = arith.constant dense<0.000000e+00> : vector<2x8xf32>
    %52 = vector.multi_reduction <add>, %51, %cst_29 [2] : vector<2x8x8xf32> to vector<2x8xf32>
    %53 = vector.shape_cast %52 : vector<2x8xf32> to vector<2x8x1xf32>
    %54 = tpu.reciprocal %53 {approx = true} : vector<2x8x1xf32> -> vector<2x8x1xf32>
    %55 = vector.broadcast %54 : vector<2x8x1xf32> to vector<2x8x8xf32>
    %56 = arith.mulf %51, %55 : vector<2x8x8xf32>
    %57 = vector.extract_strided_slice %25 {offsets = [0, 0, 8], sizes = [2, 8, 8], strides = [1, 1, 1]} : vector<2x8x32xf32> to vector<2x8x8xf32>
    "tpu.trace_start"() <{level = 10 : i32, message = "bqk,bkd->bqd"}> : () -> ()
    %cst_30 = arith.constant dense<0.000000e+00> : vector<2x8x8xf32>
    %58 = tpu.matmul %56, %57, %cst_30 {dimension_numbers = #tpu.dot_dimension_numbers<[2], [1], [1], [2], [0, 0, 0, 1, 1, 2], [0], [0]>} : vector<2x8x8xf32>, vector<2x8x8xf32>, vector<2x8x8xf32> -> vector<2x8x8xf32>
    "tpu.trace_stop"() : () -> ()
    %c0_31 = arith.constant 0 : index
    %c0_32 = arith.constant 0 : index
    %c8 = arith.constant 8 : index
    %59 = vector.load %arg38[%c0_31, %c0_32, %c8] : memref<2x8x32xf32, #tpu.memory_space<vmem>>, vector<2x8x8xf32>
    tpu.vector_store %arg38[%c0_31, %c0_32, %c8], %58 {strides = array<i32>} : memref<2x8x32xf32, #tpu.memory_space<vmem>>, vector<2x8x8xf32>,
    %60 = vector.extract_strided_slice %23 {offsets = [0, 0, 16], sizes = [2, 8, 8], strides = [1, 1, 1]} : vector<2x8x32xf32> to vector<2x8x8xf32>
    %61 = vector.extract_strided_slice %24 {offsets = [0, 0, 16], sizes = [2, 8, 8], strides = [1, 1, 1]} : vector<2x8x32xf32> to vector<2x8x8xf32>
    "tpu.trace_start"() <{level = 10 : i32, message = "bqd,bkd->bqk"}> : () -> ()
    %cst_33 = arith.constant dense<0.000000e+00> : vector<2x8x8xf32>
    %62 = tpu.matmul %60, %61, %cst_33 {dimension_numbers = #tpu.dot_dimension_numbers<[2], [2], [1], [1], [0, 0, 0, 1, 1, 1], [0], [0]>} : vector<2x8x8xf32>, vector<2x8x8xf32>, vector<2x8x8xf32> -> vector<2x8x8xf32>
    "tpu.trace_stop"() : () -> ()
    %63 = arith.addf %62, %4 : vector<2x8x8xf32>
    %cst_34 = arith.constant dense<0xFF800000> : vector<2x8xf32>
    %64 = vector.multi_reduction <maximumf>, %63, %cst_34 [2] : vector<2x8x8xf32> to vector<2x8xf32>
    %65 = vector.shape_cast %64 : vector<2x8xf32> to vector<2x8x1xf32>
    %66 = vector.broadcast %65 : vector<2x8x1xf32> to vector<2x8x8xf32>
    %67 = arith.subf %63, %66 : vector<2x8x8xf32>
    %68 = math.exp %67 : vector<2x8x8xf32>
    %cst_35 = arith.constant dense<0.000000e+00> : vector<2x8xf32>
    %69 = vector.multi_reduction <add>, %68, %cst_35 [2] : vector<2x8x8xf32> to vector<2x8xf32>
    %70 = vector.shape_cast %69 : vector<2x8xf32> to vector<2x8x1xf32>
    %71 = tpu.reciprocal %70 {approx = true} : vector<2x8x1xf32> -> vector<2x8x1xf32>
    %72 = vector.broadcast %71 : vector<2x8x1xf32> to vector<2x8x8xf32>
    %73 = arith.mulf %68, %72 : vector<2x8x8xf32>
    %74 = vector.extract_strided_slice %25 {offsets = [0, 0, 16], sizes = [2, 8, 8], strides = [1, 1, 1]} : vector<2x8x32xf32> to vector<2x8x8xf32>
    "tpu.trace_start"() <{level = 10 : i32, message = "bqk,bkd->bqd"}> : () -> ()
    %cst_36 = arith.constant dense<0.000000e+00> : vector<2x8x8xf32>
    %75 = tpu.matmul %73, %74, %cst_36 {dimension_numbers = #tpu.dot_dimension_numbers<[2], [1], [1], [2], [0, 0, 0, 1, 1, 2], [0], [0]>} : vector<2x8x8xf32>, vector<2x8x8xf32>, vector<2x8x8xf32> -> vector<2x8x8xf32>
    "tpu.trace_stop"() : () -> ()
    %c0_37 = arith.constant 0 : index
    %c0_38 = arith.constant 0 : index
    %c16 = arith.constant 16 : index
    %76 = vector.load %arg38[%c0_37, %c0_38, %c16] : memref<2x8x32xf32, #tpu.memory_space<vmem>>, vector<2x8x8xf32>
    tpu.vector_store %arg38[%c0_37, %c0_38, %c16], %75 {strides = array<i32>} : memref<2x8x32xf32, #tpu.memory_space<vmem>>, vector<2x8x8xf32>,
    %77 = vector.extract_strided_slice %23 {offsets = [0, 0, 24], sizes = [2, 8, 8], strides = [1, 1, 1]} : vector<2x8x32xf32> to vector<2x8x8xf32>
    %78 = vector.extract_strided_slice %24 {offsets = [0, 0, 24], sizes = [2, 8, 8], strides = [1, 1, 1]} : vector<2x8x32xf32> to vector<2x8x8xf32>
    "tpu.trace_start"() <{level = 10 : i32, message = "bqd,bkd->bqk"}> : () -> ()
    %cst_39 = arith.constant dense<0.000000e+00> : vector<2x8x8xf32>
    %79 = tpu.matmul %77, %78, %cst_39 {dimension_numbers = #tpu.dot_dimension_numbers<[2], [2], [1], [1], [0, 0, 0, 1, 1, 1], [0], [0]>} : vector<2x8x8xf32>, vector<2x8x8xf32>, vector<2x8x8xf32> -> vector<2x8x8xf32>
    "tpu.trace_stop"() : () -> ()
    %80 = arith.addf %79, %4 : vector<2x8x8xf32>
    %cst_40 = arith.constant dense<0xFF800000> : vector<2x8xf32>
    %81 = vector.multi_reduction <maximumf>, %80, %cst_40 [2] : vector<2x8x8xf32> to vector<2x8xf32>
    %82 = vector.shape_cast %81 : vector<2x8xf32> to vector<2x8x1xf32>
    %83 = vector.broadcast %82 : vector<2x8x1xf32> to vector<2x8x8xf32>
    %84 = arith.subf %80, %83 : vector<2x8x8xf32>
    %85 = math.exp %84 : vector<2x8x8xf32>
    %cst_41 = arith.constant dense<0.000000e+00> : vector<2x8xf32>
    %86 = vector.multi_reduction <add>, %85, %cst_41 [2] : vector<2x8x8xf32> to vector<2x8xf32>
    %87 = vector.shape_cast %86 : vector<2x8xf32> to vector<2x8x1xf32>
    %88 = tpu.reciprocal %87 {approx = true} : vector<2x8x1xf32> -> vector<2x8x1xf32>
    %89 = vector.broadcast %88 : vector<2x8x1xf32> to vector<2x8x8xf32>
    %90 = arith.mulf %85, %89 : vector<2x8x8xf32>
    %91 = vector.extract_strided_slice %25 {offsets = [0, 0, 24], sizes = [2, 8, 8], strides = [1, 1, 1]} : vector<2x8x32xf32> to vector<2x8x8xf32>
    "tpu.trace_start"() <{level = 10 : i32, message = "bqk,bkd->bqd"}> : () -> ()
    %cst_42 = arith.constant dense<0.000000e+00> : vector<2x8x8xf32>
    %92 = tpu.matmul %90, %91, %cst_42 {dimension_numbers = #tpu.dot_dimension_numbers<[2], [1], [1], [2], [0, 0, 0, 1, 1, 2], [0], [0]>} : vector<2x8x8xf32>, vector<2x8x8xf32>, vector<2x8x8xf32> -> vector<2x8x8xf32>
    "tpu.trace_stop"() : () -> ()
    %c0_43 = arith.constant 0 : index
    %c0_44 = arith.constant 0 : index
    %c24 = arith.constant 24 : index
    %93 = vector.load %arg38[%c0_43, %c0_44, %c24] : memref<2x8x32xf32, #tpu.memory_space<vmem>>, vector<2x8x8xf32>
    tpu.vector_store %arg38[%c0_43, %c0_44, %c24], %92 {strides = array<i32>} : memref<2x8x32xf32, #tpu.memory_space<vmem>>, vector<2x8x8xf32>,
    %c0_45 = arith.constant 0 : index
    %c0_46 = arith.constant 0 : index
    %c0_47 = arith.constant 0 : index
    %94 = vector.load %arg38[%c0_45, %c0_46, %c0_47] : memref<2x8x32xf32, #tpu.memory_space<vmem>>, vector<2x8x32xf32>
    %95 = vector.shape_cast %94 : vector<2x8x32xf32> to vector<16x32xf32>
    %96 = arith.truncf %95 : vector<16x32xf32> to vector<16x32xbf16>
    %c0_48 = arith.constant 0 : index
    %c0_49 = arith.constant 0 : index
    %97 = vector.load %arg9[%c0_48, %c0_49] : memref<32x32xbf16, #tpu.memory_space<vmem>>, vector<32x32xbf16>
    %cst_50 = arith.constant dense<0.000000e+00> : vector<16x32xf32>
    %98 = tpu.matmul %96, %97, %cst_50 {dimension_numbers = #tpu.dot_dimension_numbers<[1], [0], [0], [1], [0, 0, 1, 1], [], []>} : vector<16x32xbf16>, vector<32x32xbf16>, vector<16x32xf32> -> vector<16x32xf32>
    %c0_51 = arith.constant 0 : index
    %c0_52 = arith.constant 0 : index
    %99 = vector.load %arg10[%c0_51, %c0_52] : memref<1x32xf32, #tpu.memory_space<vmem>>, vector<1x32xf32>
    %100 = vector.broadcast %99 : vector<1x32xf32> to vector<16x32xf32>
    %101 = arith.addf %98, %100 : vector<16x32xf32>
    %102 = arith.addf %1, %101 : vector<16x32xf32>
    %c0_53 = arith.constant 0 : index
    %c0_54 = arith.constant 0 : index
    %103 = vector.load %arg11[%c0_53, %c0_54] : memref<1x32xf32, #tpu.memory_space<vmem>>, vector<1x32xf32>
    %c0_55 = arith.constant 0 : index
    %c0_56 = arith.constant 0 : index
    %104 = vector.load %arg12[%c0_55, %c0_56] : memref<1x32xf32, #tpu.memory_space<vmem>>, vector<1x32xf32>
    %cst_57 = arith.constant dense<0.000000e+00> : vector<16xf32>
    %105 = vector.multi_reduction <add>, %102, %cst_57 [1] : vector<16x32xf32> to vector<16xf32>
    %106 = vector.shape_cast %105 : vector<16xf32> to vector<16x1xf32>
    %cst_58 = arith.constant 3.200000e+01 : f32
    %107 = vector.broadcast %cst_58 : f32 to vector<16x1xf32>
    %108 = arith.divf %106, %107 : vector<16x1xf32>
    %109 = vector.broadcast %108 : vector<16x1xf32> to vector<16x32xf32>
    %110 = arith.subf %102, %109 : vector<16x32xf32>
    %111 = arith.mulf %110, %110 : vector<16x32xf32>
    %cst_59 = arith.constant dense<0.000000e+00> : vector<16xf32>
    %112 = vector.multi_reduction <add>, %111, %cst_59 [1] : vector<16x32xf32> to vector<16xf32>
    %113 = vector.shape_cast %112 : vector<16xf32> to vector<16x1xf32>
    %cst_60 = arith.constant 3.200000e+01 : f32
    %114 = vector.broadcast %cst_60 : f32 to vector<16x1xf32>
    %115 = arith.divf %113, %114 : vector<16x1xf32>
    %116 = vector.broadcast %108 : vector<16x1xf32> to vector<16x32xf32>
    %117 = arith.subf %102, %116 : vector<16x32xf32>
    %cst_61 = arith.constant 9.99999974E-6 : f32
    %118 = vector.broadcast %cst_61 : f32 to vector<16x1xf32>
    %119 = arith.addf %115, %118 : vector<16x1xf32>
    %120 = math.rsqrt %119 : vector<16x1xf32>
    %121 = vector.broadcast %120 : vector<16x1xf32> to vector<16x32xf32>
    %122 = arith.mulf %117, %121 : vector<16x32xf32>
    %123 = vector.broadcast %103 : vector<1x32xf32> to vector<16x32xf32>
    %124 = arith.mulf %122, %123 : vector<16x32xf32>
    %125 = vector.broadcast %104 : vector<1x32xf32> to vector<16x32xf32>
    %126 = arith.addf %124, %125 : vector<16x32xf32>
    %127 = arith.truncf %126 : vector<16x32xf32> to vector<16x32xbf16>
    %c0_62 = arith.constant 0 : index
    %c0_63 = arith.constant 0 : index
    %128 = vector.load %arg13[%c0_62, %c0_63] : memref<32x64xbf16, #tpu.memory_space<vmem>>, vector<32x64xbf16>
    %cst_64 = arith.constant dense<0.000000e+00> : vector<16x64xf32>
    %129 = tpu.matmul %127, %128, %cst_64 {dimension_numbers = #tpu.dot_dimension_numbers<[1], [0], [0], [1], [0, 0, 1, 1], [], []>} : vector<16x32xbf16>, vector<32x64xbf16>, vector<16x64xf32> -> vector<16x64xf32>
    %c0_65 = arith.constant 0 : index
    %c0_66 = arith.constant 0 : index
    %130 = vector.load %arg14[%c0_65, %c0_66] : memref<1x64xf32, #tpu.memory_space<vmem>>, vector<1x64xf32>
    %131 = vector.broadcast %130 : vector<1x64xf32> to vector<16x64xf32>
    %132 = arith.addf %129, %131 : vector<16x64xf32>
    %133 = arith.mulf %132, %132 : vector<16x64xf32>
    %134 = arith.mulf %132, %133 : vector<16x64xf32>
    %cst_67 = arith.constant 4.471500e-02 : f32
    %135 = vector.broadcast %cst_67 : f32 to vector<16x64xf32>
    %136 = arith.mulf %135, %134 : vector<16x64xf32>
    %137 = arith.addf %132, %136 : vector<16x64xf32>
    %cst_68 = arith.constant 0.797884583 : f32
    %138 = vector.broadcast %cst_68 : f32 to vector<16x64xf32>
    %139 = arith.mulf %138, %137 : vector<16x64xf32>
    %140 = math.tanh %139 : vector<16x64xf32>
    %cst_69 = arith.constant 1.000000e+00 : f32
    %141 = vector.broadcast %cst_69 : f32 to vector<16x64xf32>
    %142 = arith.addf %141, %140 : vector<16x64xf32>
    %cst_70 = arith.constant 5.000000e-01 : f32
    %143 = vector.broadcast %cst_70 : f32 to vector<16x64xf32>
    %144 = arith.mulf %143, %142 : vector<16x64xf32>
    %145 = arith.mulf %132, %144 : vector<16x64xf32>
    %146 = arith.truncf %145 : vector<16x64xf32> to vector<16x64xbf16>
    %c0_71 = arith.constant 0 : index
    %c0_72 = arith.constant 0 : index
    %147 = vector.load %arg15[%c0_71, %c0_72] : memref<64x32xbf16, #tpu.memory_space<vmem>>, vector<64x32xbf16>
    %cst_73 = arith.constant dense<0.000000e+00> : vector<16x32xf32>
    %148 = tpu.matmul %146, %147, %cst_73 {dimension_numbers = #tpu.dot_dimension_numbers<[1], [0], [0], [1], [0, 0, 1, 1], [], []>} : vector<16x64xbf16>, vector<64x32xbf16>, vector<16x32xf32> -> vector<16x32xf32>
    %c0_74 = arith.constant 0 : index
    %c0_75 = arith.constant 0 : index
    %149 = vector.load %arg16[%c0_74, %c0_75] : memref<1x32xf32, #tpu.memory_space<vmem>>, vector<1x32xf32>
    %150 = vector.broadcast %149 : vector<1x32xf32> to vector<16x32xf32>
    %151 = arith.addf %148, %150 : vector<16x32xf32>
    %152 = arith.addf %126, %151 : vector<16x32xf32>
    %c0_76 = arith.constant 0 : index
    %c0_77 = arith.constant 0 : index
    %153 = vector.load %arg17[%c0_76, %c0_77] : memref<1x32xf32, #tpu.memory_space<vmem>>, vector<1x32xf32>
    %c0_78 = arith.constant 0 : index
    %c0_79 = arith.constant 0 : index
    %154 = vector.load %arg18[%c0_78, %c0_79] : memref<1x32xf32, #tpu.memory_space<vmem>>, vector<1x32xf32>
    %cst_80 = arith.constant dense<0.000000e+00> : vector<16xf32>
    %155 = vector.multi_reduction <add>, %152, %cst_80 [1] : vector<16x32xf32> to vector<16xf32>
    %156 = vector.shape_cast %155 : vector<16xf32> to vector<16x1xf32>
    %cst_81 = arith.constant 3.200000e+01 : f32
    %157 = vector.broadcast %cst_81 : f32 to vector<16x1xf32>
    %158 = arith.divf %156, %157 : vector<16x1xf32>
    %159 = vector.broadcast %158 : vector<16x1xf32> to vector<16x32xf32>
    %160 = arith.subf %152, %159 : vector<16x32xf32>
    %161 = arith.mulf %160, %160 : vector<16x32xf32>
    %cst_82 = arith.constant dense<0.000000e+00> : vector<16xf32>
    %162 = vector.multi_reduction <add>, %161, %cst_82 [1] : vector<16x32xf32> to vector<16xf32>
    %163 = vector.shape_cast %162 : vector<16xf32> to vector<16x1xf32>
    %cst_83 = arith.constant 3.200000e+01 : f32
    %164 = vector.broadcast %cst_83 : f32 to vector<16x1xf32>
    %165 = arith.divf %163, %164 : vector<16x1xf32>
    %166 = vector.broadcast %158 : vector<16x1xf32> to vector<16x32xf32>
    %167 = arith.subf %152, %166 : vector<16x32xf32>
    %cst_84 = arith.constant 9.99999974E-6 : f32
    %168 = vector.broadcast %cst_84 : f32 to vector<16x1xf32>
    %169 = arith.addf %165, %168 : vector<16x1xf32>
    %170 = math.rsqrt %169 : vector<16x1xf32>
    %171 = vector.broadcast %170 : vector<16x1xf32> to vector<16x32xf32>
    %172 = arith.mulf %167, %171 : vector<16x32xf32>
    %173 = vector.broadcast %153 : vector<1x32xf32> to vector<16x32xf32>
    %174 = arith.mulf %172, %173 : vector<16x32xf32>
    %175 = vector.broadcast %154 : vector<1x32xf32> to vector<16x32xf32>
    %176 = arith.addf %174, %175 : vector<16x32xf32>
    %177 = arith.truncf %176 : vector<16x32xf32> to vector<16x32xbf16>
    %c0_85 = arith.constant 0 : index
    %c0_86 = arith.constant 0 : index
    %178 = vector.load %arg19[%c0_85, %c0_86] : memref<32x32xbf16, #tpu.memory_space<vmem>>, vector<32x32xbf16>
    %cst_87 = arith.constant dense<0.000000e+00> : vector<16x32xf32>
    %179 = tpu.matmul %177, %178, %cst_87 {dimension_numbers = #tpu.dot_dimension_numbers<[1], [0], [0], [1], [0, 0, 1, 1], [], []>} : vector<16x32xbf16>, vector<32x32xbf16>, vector<16x32xf32> -> vector<16x32xf32>
    %c0_88 = arith.constant 0 : index
    %c0_89 = arith.constant 0 : index
    %180 = vector.load %arg20[%c0_88, %c0_89] : memref<1x32xf32, #tpu.memory_space<vmem>>, vector<1x32xf32>
    %181 = vector.broadcast %180 : vector<1x32xf32> to vector<16x32xf32>
    %182 = arith.addf %179, %181 : vector<16x32xf32>
    %c0_90 = arith.constant 0 : index
    %c0_91 = arith.constant 0 : index
    %183 = vector.load %arg21[%c0_90, %c0_91] : memref<32x32xbf16, #tpu.memory_space<vmem>>, vector<32x32xbf16>
    %cst_92 = arith.constant dense<0.000000e+00> : vector<16x32xf32>
    %184 = tpu.matmul %177, %183, %cst_92 {dimension_numbers = #tpu.dot_dimension_numbers<[1], [0], [0], [1], [0, 0, 1, 1], [], []>} : vector<16x32xbf16>, vector<32x32xbf16>, vector<16x32xf32> -> vector<16x32xf32>
    %c0_93 = arith.constant 0 : index
    %c0_94 = arith.constant 0 : index
    %185 = vector.load %arg22[%c0_93, %c0_94] : memref<1x32xf32, #tpu.memory_space<vmem>>, vector<1x32xf32>
    %186 = vector.broadcast %185 : vector<1x32xf32> to vector<16x32xf32>
    %187 = arith.addf %184, %186 : vector<16x32xf32>
    %c0_95 = arith.constant 0 : index
    %c0_96 = arith.constant 0 : index
    %188 = vector.load %arg23[%c0_95, %c0_96] : memref<32x32xbf16, #tpu.memory_space<vmem>>, vector<32x32xbf16>
    %cst_97 = arith.constant dense<0.000000e+00> : vector<16x32xf32>
    %189 = tpu.matmul %177, %188, %cst_97 {dimension_numbers = #tpu.dot_dimension_numbers<[1], [0], [0], [1], [0, 0, 1, 1], [], []>} : vector<16x32xbf16>, vector<32x32xbf16>, vector<16x32xf32> -> vector<16x32xf32>
    %c0_98 = arith.constant 0 : index
    %c0_99 = arith.constant 0 : index
    %190 = vector.load %arg24[%c0_98, %c0_99] : memref<1x32xf32, #tpu.memory_space<vmem>>, vector<1x32xf32>
    %191 = vector.broadcast %190 : vector<1x32xf32> to vector<16x32xf32>
    %192 = arith.addf %189, %191 : vector<16x32xf32>
    %cst_100 = arith.constant 0.353553385 : f32
    %193 = vector.broadcast %cst_100 : f32 to vector<16x32xf32>
    %194 = arith.mulf %182, %193 : vector<16x32xf32>
    %195 = vector.shape_cast %194 : vector<16x32xf32> to vector<2x8x32xf32>
    %196 = vector.shape_cast %187 : vector<16x32xf32> to vector<2x8x32xf32>
    %197 = vector.shape_cast %192 : vector<16x32xf32> to vector<2x8x32xf32>
    %198 = vector.extract_strided_slice %195 {offsets = [0, 0, 0], sizes = [2, 8, 8], strides = [1, 1, 1]} : vector<2x8x32xf32> to vector<2x8x8xf32>
    %199 = vector.extract_strided_slice %196 {offsets = [0, 0, 0], sizes = [2, 8, 8], strides = [1, 1, 1]} : vector<2x8x32xf32> to vector<2x8x8xf32>
    "tpu.trace_start"() <{level = 10 : i32, message = "bqd,bkd->bqk"}> : () -> ()
    %cst_101 = arith.constant dense<0.000000e+00> : vector<2x8x8xf32>
    %200 = tpu.matmul %198, %199, %cst_101 {dimension_numbers = #tpu.dot_dimension_numbers<[2], [2], [1], [1], [0, 0, 0, 1, 1, 1], [0], [0]>} : vector<2x8x8xf32>, vector<2x8x8xf32>, vector<2x8x8xf32> -> vector<2x8x8xf32>
    "tpu.trace_stop"() : () -> ()
    %201 = arith.addf %200, %4 : vector<2x8x8xf32>
    %cst_102 = arith.constant dense<0xFF800000> : vector<2x8xf32>
    %202 = vector.multi_reduction <maximumf>, %201, %cst_102 [2] : vector<2x8x8xf32> to vector<2x8xf32>
    %203 = vector.shape_cast %202 : vector<2x8xf32> to vector<2x8x1xf32>
    %204 = vector.broadcast %203 : vector<2x8x1xf32> to vector<2x8x8xf32>
    %205 = arith.subf %201, %204 : vector<2x8x8xf32>
    %206 = math.exp %205 : vector<2x8x8xf32>
    %cst_103 = arith.constant dense<0.000000e+00> : vector<2x8xf32>
    %207 = vector.multi_reduction <add>, %206, %cst_103 [2] : vector<2x8x8xf32> to vector<2x8xf32>
    %208 = vector.shape_cast %207 : vector<2x8xf32> to vector<2x8x1xf32>
    %209 = tpu.reciprocal %208 {approx = true} : vector<2x8x1xf32> -> vector<2x8x1xf32>
    %210 = vector.broadcast %209 : vector<2x8x1xf32> to vector<2x8x8xf32>
    %211 = arith.mulf %206, %210 : vector<2x8x8xf32>
    %212 = vector.extract_strided_slice %197 {offsets = [0, 0, 0], sizes = [2, 8, 8], strides = [1, 1, 1]} : vector<2x8x32xf32> to vector<2x8x8xf32>
    "tpu.trace_start"() <{level = 10 : i32, message = "bqk,bkd->bqd"}> : () -> ()
    %cst_104 = arith.constant dense<0.000000e+00> : vector<2x8x8xf32>
    %213 = tpu.matmul %211, %212, %cst_104 {dimension_numbers = #tpu.dot_dimension_numbers<[2], [1], [1], [2], [0, 0, 0, 1, 1, 2], [0], [0]>} : vector<2x8x8xf32>, vector<2x8x8xf32>, vector<2x8x8xf32> -> vector<2x8x8xf32>
    "tpu.trace_stop"() : () -> ()
    %c0_105 = arith.constant 0 : index
    %c0_106 = arith.constant 0 : index
    %c0_107 = arith.constant 0 : index
    %214 = vector.load %arg38[%c0_105, %c0_106, %c0_107] : memref<2x8x32xf32, #tpu.memory_space<vmem>>, vector<2x8x8xf32>
    tpu.vector_store %arg38[%c0_105, %c0_106, %c0_107], %213 {strides = array<i32>} : memref<2x8x32xf32, #tpu.memory_space<vmem>>, vector<2x8x8xf32>,
    %215 = vector.extract_strided_slice %195 {offsets = [0, 0, 8], sizes = [2, 8, 8], strides = [1, 1, 1]} : vector<2x8x32xf32> to vector<2x8x8xf32>
    %216 = vector.extract_strided_slice %196 {offsets = [0, 0, 8], sizes = [2, 8, 8], strides = [1, 1, 1]} : vector<2x8x32xf32> to vector<2x8x8xf32>
    "tpu.trace_start"() <{level = 10 : i32, message = "bqd,bkd->bqk"}> : () -> ()
    %cst_108 = arith.constant dense<0.000000e+00> : vector<2x8x8xf32>
    %217 = tpu.matmul %215, %216, %cst_108 {dimension_numbers = #tpu.dot_dimension_numbers<[2], [2], [1], [1], [0, 0, 0, 1, 1, 1], [0], [0]>} : vector<2x8x8xf32>, vector<2x8x8xf32>, vector<2x8x8xf32> -> vector<2x8x8xf32>
    "tpu.trace_stop"() : () -> ()
    %218 = arith.addf %217, %4 : vector<2x8x8xf32>
    %cst_109 = arith.constant dense<0xFF800000> : vector<2x8xf32>
    %219 = vector.multi_reduction <maximumf>, %218, %cst_109 [2] : vector<2x8x8xf32> to vector<2x8xf32>
    %220 = vector.shape_cast %219 : vector<2x8xf32> to vector<2x8x1xf32>
    %221 = vector.broadcast %220 : vector<2x8x1xf32> to vector<2x8x8xf32>
    %222 = arith.subf %218, %221 : vector<2x8x8xf32>
    %223 = math.exp %222 : vector<2x8x8xf32>
    %cst_110 = arith.constant dense<0.000000e+00> : vector<2x8xf32>
    %224 = vector.multi_reduction <add>, %223, %cst_110 [2] : vector<2x8x8xf32> to vector<2x8xf32>
    %225 = vector.shape_cast %224 : vector<2x8xf32> to vector<2x8x1xf32>
    %226 = tpu.reciprocal %225 {approx = true} : vector<2x8x1xf32> -> vector<2x8x1xf32>
    %227 = vector.broadcast %226 : vector<2x8x1xf32> to vector<2x8x8xf32>
    %228 = arith.mulf %223, %227 : vector<2x8x8xf32>
    %229 = vector.extract_strided_slice %197 {offsets = [0, 0, 8], sizes = [2, 8, 8], strides = [1, 1, 1]} : vector<2x8x32xf32> to vector<2x8x8xf32>
    "tpu.trace_start"() <{level = 10 : i32, message = "bqk,bkd->bqd"}> : () -> ()
    %cst_111 = arith.constant dense<0.000000e+00> : vector<2x8x8xf32>
    %230 = tpu.matmul %228, %229, %cst_111 {dimension_numbers = #tpu.dot_dimension_numbers<[2], [1], [1], [2], [0, 0, 0, 1, 1, 2], [0], [0]>} : vector<2x8x8xf32>, vector<2x8x8xf32>, vector<2x8x8xf32> -> vector<2x8x8xf32>
    "tpu.trace_stop"() : () -> ()
    %c0_112 = arith.constant 0 : index
    %c0_113 = arith.constant 0 : index
    %c8_114 = arith.constant 8 : index
    %231 = vector.load %arg38[%c0_112, %c0_113, %c8_114] : memref<2x8x32xf32, #tpu.memory_space<vmem>>, vector<2x8x8xf32>
    tpu.vector_store %arg38[%c0_112, %c0_113, %c8_114], %230 {strides = array<i32>} : memref<2x8x32xf32, #tpu.memory_space<vmem>>, vector<2x8x8xf32>,
    %232 = vector.extract_strided_slice %195 {offsets = [0, 0, 16], sizes = [2, 8, 8], strides = [1, 1, 1]} : vector<2x8x32xf32> to vector<2x8x8xf32>
    %233 = vector.extract_strided_slice %196 {offsets = [0, 0, 16], sizes = [2, 8, 8], strides = [1, 1, 1]} : vector<2x8x32xf32> to vector<2x8x8xf32>
    "tpu.trace_start"() <{level = 10 : i32, message = "bqd,bkd->bqk"}> : () -> ()
    %cst_115 = arith.constant dense<0.000000e+00> : vector<2x8x8xf32>
    %234 = tpu.matmul %232, %233, %cst_115 {dimension_numbers = #tpu.dot_dimension_numbers<[2], [2], [1], [1], [0, 0, 0, 1, 1, 1], [0], [0]>} : vector<2x8x8xf32>, vector<2x8x8xf32>, vector<2x8x8xf32> -> vector<2x8x8xf32>
    "tpu.trace_stop"() : () -> ()
    %235 = arith.addf %234, %4 : vector<2x8x8xf32>
    %cst_116 = arith.constant dense<0xFF800000> : vector<2x8xf32>
    %236 = vector.multi_reduction <maximumf>, %235, %cst_116 [2] : vector<2x8x8xf32> to vector<2x8xf32>
    %237 = vector.shape_cast %236 : vector<2x8xf32> to vector<2x8x1xf32>
    %238 = vector.broadcast %237 : vector<2x8x1xf32> to vector<2x8x8xf32>
    %239 = arith.subf %235, %238 : vector<2x8x8xf32>
    %240 = math.exp %239 : vector<2x8x8xf32>
    %cst_117 = arith.constant dense<0.000000e+00> : vector<2x8xf32>
    %241 = vector.multi_reduction <add>, %240, %cst_117 [2] : vector<2x8x8xf32> to vector<2x8xf32>
    %242 = vector.shape_cast %241 : vector<2x8xf32> to vector<2x8x1xf32>
    %243 = tpu.reciprocal %242 {approx = true} : vector<2x8x1xf32> -> vector<2x8x1xf32>
    %244 = vector.broadcast %243 : vector<2x8x1xf32> to vector<2x8x8xf32>
    %245 = arith.mulf %240, %244 : vector<2x8x8xf32>
    %246 = vector.extract_strided_slice %197 {offsets = [0, 0, 16], sizes = [2, 8, 8], strides = [1, 1, 1]} : vector<2x8x32xf32> to vector<2x8x8xf32>
    "tpu.trace_start"() <{level = 10 : i32, message = "bqk,bkd->bqd"}> : () -> ()
    %cst_118 = arith.constant dense<0.000000e+00> : vector<2x8x8xf32>
    %247 = tpu.matmul %245, %246, %cst_118 {dimension_numbers = #tpu.dot_dimension_numbers<[2], [1], [1], [2], [0, 0, 0, 1, 1, 2], [0], [0]>} : vector<2x8x8xf32>, vector<2x8x8xf32>, vector<2x8x8xf32> -> vector<2x8x8xf32>
    "tpu.trace_stop"() : () -> ()
    %c0_119 = arith.constant 0 : index
    %c0_120 = arith.constant 0 : index
    %c16_121 = arith.constant 16 : index
    %248 = vector.load %arg38[%c0_119, %c0_120, %c16_121] : memref<2x8x32xf32, #tpu.memory_space<vmem>>, vector<2x8x8xf32>
    tpu.vector_store %arg38[%c0_119, %c0_120, %c16_121], %247 {strides = array<i32>} : memref<2x8x32xf32, #tpu.memory_space<vmem>>, vector<2x8x8xf32>,
    %249 = vector.extract_strided_slice %195 {offsets = [0, 0, 24], sizes = [2, 8, 8], strides = [1, 1, 1]} : vector<2x8x32xf32> to vector<2x8x8xf32>
    %250 = vector.extract_strided_slice %196 {offsets = [0, 0, 24], sizes = [2, 8, 8], strides = [1, 1, 1]} : vector<2x8x32xf32> to vector<2x8x8xf32>
    "tpu.trace_start"() <{level = 10 : i32, message = "bqd,bkd->bqk"}> : () -> ()
    %cst_122 = arith.constant dense<0.000000e+00> : vector<2x8x8xf32>
    %251 = tpu.matmul %249, %250, %cst_122 {dimension_numbers = #tpu.dot_dimension_numbers<[2], [2], [1], [1], [0, 0, 0, 1, 1, 1], [0], [0]>} : vector<2x8x8xf32>, vector<2x8x8xf32>, vector<2x8x8xf32> -> vector<2x8x8xf32>
    "tpu.trace_stop"() : () -> ()
    %252 = arith.addf %251, %4 : vector<2x8x8xf32>
    %cst_123 = arith.constant dense<0xFF800000> : vector<2x8xf32>
    %253 = vector.multi_reduction <maximumf>, %252, %cst_123 [2] : vector<2x8x8xf32> to vector<2x8xf32>
    %254 = vector.shape_cast %253 : vector<2x8xf32> to vector<2x8x1xf32>
    %255 = vector.broadcast %254 : vector<2x8x1xf32> to vector<2x8x8xf32>
    %256 = arith.subf %252, %255 : vector<2x8x8xf32>
    %257 = math.exp %256 : vector<2x8x8xf32>
    %cst_124 = arith.constant dense<0.000000e+00> : vector<2x8xf32>
    %258 = vector.multi_reduction <add>, %257, %cst_124 [2] : vector<2x8x8xf32> to vector<2x8xf32>
    %259 = vector.shape_cast %258 : vector<2x8xf32> to vector<2x8x1xf32>
    %260 = tpu.reciprocal %259 {approx = true} : vector<2x8x1xf32> -> vector<2x8x1xf32>
    %261 = vector.broadcast %260 : vector<2x8x1xf32> to vector<2x8x8xf32>
    %262 = arith.mulf %257, %261 : vector<2x8x8xf32>
    %263 = vector.extract_strided_slice %197 {offsets = [0, 0, 24], sizes = [2, 8, 8], strides = [1, 1, 1]} : vector<2x8x32xf32> to vector<2x8x8xf32>
    "tpu.trace_start"() <{level = 10 : i32, message = "bqk,bkd->bqd"}> : () -> ()
    %cst_125 = arith.constant dense<0.000000e+00> : vector<2x8x8xf32>
    %264 = tpu.matmul %262, %263, %cst_125 {dimension_numbers = #tpu.dot_dimension_numbers<[2], [1], [1], [2], [0, 0, 0, 1, 1, 2], [0], [0]>} : vector<2x8x8xf32>, vector<2x8x8xf32>, vector<2x8x8xf32> -> vector<2x8x8xf32>
    "tpu.trace_stop"() : () -> ()
    %c0_126 = arith.constant 0 : index
    %c0_127 = arith.constant 0 : index
    %c24_128 = arith.constant 24 : index
    %265 = vector.load %arg38[%c0_126, %c0_127, %c24_128] : memref<2x8x32xf32, #tpu.memory_space<vmem>>, vector<2x8x8xf32>
    tpu.vector_store %arg38[%c0_126, %c0_127, %c24_128], %264 {strides = array<i32>} : memref<2x8x32xf32, #tpu.memory_space<vmem>>, vector<2x8x8xf32>,
    %c0_129 = arith.constant 0 : index
    %c0_130 = arith.constant 0 : index
    %c0_131 = arith.constant 0 : index
    %266 = vector.load %arg38[%c0_129, %c0_130, %c0_131] : memref<2x8x32xf32, #tpu.memory_space<vmem>>, vector<2x8x32xf32>
    %267 = vector.shape_cast %266 : vector<2x8x32xf32> to vector<16x32xf32>
    %268 = arith.truncf %267 : vector<16x32xf32> to vector<16x32xbf16>
    %c0_132 = arith.constant 0 : index
    %c0_133 = arith.constant 0 : index
    %269 = vector.load %arg25[%c0_132, %c0_133] : memref<32x32xbf16, #tpu.memory_space<vmem>>, vector<32x32xbf16>
    %cst_134 = arith.constant dense<0.000000e+00> : vector<16x32xf32>
    %270 = tpu.matmul %268, %269, %cst_134 {dimension_numbers = #tpu.dot_dimension_numbers<[1], [0], [0], [1], [0, 0, 1, 1], [], []>} : vector<16x32xbf16>, vector<32x32xbf16>, vector<16x32xf32> -> vector<16x32xf32>
    %c0_135 = arith.constant 0 : index
    %c0_136 = arith.constant 0 : index
    %271 = vector.load %arg26[%c0_135, %c0_136] : memref<1x32xf32, #tpu.memory_space<vmem>>, vector<1x32xf32>
    %272 = vector.broadcast %271 : vector<1x32xf32> to vector<16x32xf32>
    %273 = arith.addf %270, %272 : vector<16x32xf32>
    %274 = arith.addf %176, %273 : vector<16x32xf32>
    %c0_137 = arith.constant 0 : index
    %c0_138 = arith.constant 0 : index
    %275 = vector.load %arg27[%c0_137, %c0_138] : memref<1x32xf32, #tpu.memory_space<vmem>>, vector<1x32xf32>
    %c0_139 = arith.constant 0 : index
    %c0_140 = arith.constant 0 : index
    %276 = vector.load %arg28[%c0_139, %c0_140] : memref<1x32xf32, #tpu.memory_space<vmem>>, vector<1x32xf32>
    %cst_141 = arith.constant dense<0.000000e+00> : vector<16xf32>
    %277 = vector.multi_reduction <add>, %274, %cst_141 [1] : vector<16x32xf32> to vector<16xf32>
    %278 = vector.shape_cast %277 : vector<16xf32> to vector<16x1xf32>
    %cst_142 = arith.constant 3.200000e+01 : f32
    %279 = vector.broadcast %cst_142 : f32 to vector<16x1xf32>
    %280 = arith.divf %278, %279 : vector<16x1xf32>
    %281 = vector.broadcast %280 : vector<16x1xf32> to vector<16x32xf32>
    %282 = arith.subf %274, %281 : vector<16x32xf32>
    %283 = arith.mulf %282, %282 : vector<16x32xf32>
    %cst_143 = arith.constant dense<0.000000e+00> : vector<16xf32>
    %284 = vector.multi_reduction <add>, %283, %cst_143 [1] : vector<16x32xf32> to vector<16xf32>
    %285 = vector.shape_cast %284 : vector<16xf32> to vector<16x1xf32>
    %cst_144 = arith.constant 3.200000e+01 : f32
    %286 = vector.broadcast %cst_144 : f32 to vector<16x1xf32>
    %287 = arith.divf %285, %286 : vector<16x1xf32>
    %288 = vector.broadcast %280 : vector<16x1xf32> to vector<16x32xf32>
    %289 = arith.subf %274, %288 : vector<16x32xf32>
    %cst_145 = arith.constant 9.99999974E-6 : f32
    %290 = vector.broadcast %cst_145 : f32 to vector<16x1xf32>
    %291 = arith.addf %287, %290 : vector<16x1xf32>
    %292 = math.rsqrt %291 : vector<16x1xf32>
    %293 = vector.broadcast %292 : vector<16x1xf32> to vector<16x32xf32>
    %294 = arith.mulf %289, %293 : vector<16x32xf32>
    %295 = vector.broadcast %275 : vector<1x32xf32> to vector<16x32xf32>
    %296 = arith.mulf %294, %295 : vector<16x32xf32>
    %297 = vector.broadcast %276 : vector<1x32xf32> to vector<16x32xf32>
    %298 = arith.addf %296, %297 : vector<16x32xf32>
    %299 = arith.truncf %298 : vector<16x32xf32> to vector<16x32xbf16>
    %c0_146 = arith.constant 0 : index
    %c0_147 = arith.constant 0 : index
    %300 = vector.load %arg29[%c0_146, %c0_147] : memref<32x64xbf16, #tpu.memory_space<vmem>>, vector<32x64xbf16>
    %cst_148 = arith.constant dense<0.000000e+00> : vector<16x64xf32>
    %301 = tpu.matmul %299, %300, %cst_148 {dimension_numbers = #tpu.dot_dimension_numbers<[1], [0], [0], [1], [0, 0, 1, 1], [], []>} : vector<16x32xbf16>, vector<32x64xbf16>, vector<16x64xf32> -> vector<16x64xf32>
    %c0_149 = arith.constant 0 : index
    %c0_150 = arith.constant 0 : index
    %302 = vector.load %arg30[%c0_149, %c0_150] : memref<1x64xf32, #tpu.memory_space<vmem>>, vector<1x64xf32>
    %303 = vector.broadcast %302 : vector<1x64xf32> to vector<16x64xf32>
    %304 = arith.addf %301, %303 : vector<16x64xf32>
    %305 = arith.mulf %304, %304 : vector<16x64xf32>
    %306 = arith.mulf %304, %305 : vector<16x64xf32>
    %cst_151 = arith.constant 4.471500e-02 : f32
    %307 = vector.broadcast %cst_151 : f32 to vector<16x64xf32>
    %308 = arith.mulf %307, %306 : vector<16x64xf32>
    %309 = arith.addf %304, %308 : vector<16x64xf32>
    %cst_152 = arith.constant 0.797884583 : f32
    %310 = vector.broadcast %cst_152 : f32 to vector<16x64xf32>
    %311 = arith.mulf %310, %309 : vector<16x64xf32>
    %312 = math.tanh %311 : vector<16x64xf32>
    %cst_153 = arith.constant 1.000000e+00 : f32
    %313 = vector.broadcast %cst_153 : f32 to vector<16x64xf32>
    %314 = arith.addf %313, %312 : vector<16x64xf32>
    %cst_154 = arith.constant 5.000000e-01 : f32
    %315 = vector.broadcast %cst_154 : f32 to vector<16x64xf32>
    %316 = arith.mulf %315, %314 : vector<16x64xf32>
    %317 = arith.mulf %304, %316 : vector<16x64xf32>
    %318 = arith.truncf %317 : vector<16x64xf32> to vector<16x64xbf16>
    %c0_155 = arith.constant 0 : index
    %c0_156 = arith.constant 0 : index
    %319 = vector.load %arg31[%c0_155, %c0_156] : memref<64x32xbf16, #tpu.memory_space<vmem>>, vector<64x32xbf16>
    %cst_157 = arith.constant dense<0.000000e+00> : vector<16x32xf32>
    %320 = tpu.matmul %318, %319, %cst_157 {dimension_numbers = #tpu.dot_dimension_numbers<[1], [0], [0], [1], [0, 0, 1, 1], [], []>} : vector<16x64xbf16>, vector<64x32xbf16>, vector<16x32xf32> -> vector<16x32xf32>
    %c0_158 = arith.constant 0 : index
    %c0_159 = arith.constant 0 : index
    %321 = vector.load %arg32[%c0_158, %c0_159] : memref<1x32xf32, #tpu.memory_space<vmem>>, vector<1x32xf32>
    %322 = vector.broadcast %321 : vector<1x32xf32> to vector<16x32xf32>
    %323 = arith.addf %320, %322 : vector<16x32xf32>
    %324 = arith.addf %298, %323 : vector<16x32xf32>
    %c0_160 = arith.constant 0 : index
    %c0_161 = arith.constant 0 : index
    %325 = vector.load %arg33[%c0_160, %c0_161] : memref<1x32xf32, #tpu.memory_space<vmem>>, vector<1x32xf32>
    %c0_162 = arith.constant 0 : index
    %c0_163 = arith.constant 0 : index
    %326 = vector.load %arg34[%c0_162, %c0_163] : memref<1x32xf32, #tpu.memory_space<vmem>>, vector<1x32xf32>
    %cst_164 = arith.constant dense<0.000000e+00> : vector<16xf32>
    %327 = vector.multi_reduction <add>, %324, %cst_164 [1] : vector<16x32xf32> to vector<16xf32>
    %328 = vector.shape_cast %327 : vector<16xf32> to vector<16x1xf32>
    %cst_165 = arith.constant 3.200000e+01 : f32
    %329 = vector.broadcast %cst_165 : f32 to vector<16x1xf32>
    %330 = arith.divf %328, %329 : vector<16x1xf32>
    %331 = vector.broadcast %330 : vector<16x1xf32> to vector<16x32xf32>
    %332 = arith.subf %324, %331 : vector<16x32xf32>
    %333 = arith.mulf %332, %332 : vector<16x32xf32>
    %cst_166 = arith.constant dense<0.000000e+00> : vector<16xf32>
    %334 = vector.multi_reduction <add>, %333, %cst_166 [1] : vector<16x32xf32> to vector<16xf32>
    %335 = vector.shape_cast %334 : vector<16xf32> to vector<16x1xf32>
    %cst_167 = arith.constant 3.200000e+01 : f32
    %336 = vector.broadcast %cst_167 : f32 to vector<16x1xf32>
    %337 = arith.divf %335, %336 : vector<16x1xf32>
    %338 = vector.broadcast %330 : vector<16x1xf32> to vector<16x32xf32>
    %339 = arith.subf %324, %338 : vector<16x32xf32>
    %cst_168 = arith.constant 9.99999974E-6 : f32
    %340 = vector.broadcast %cst_168 : f32 to vector<16x1xf32>
    %341 = arith.addf %337, %340 : vector<16x1xf32>
    %342 = math.rsqrt %341 : vector<16x1xf32>
    %343 = vector.broadcast %342 : vector<16x1xf32> to vector<16x32xf32>
    %344 = arith.mulf %339, %343 : vector<16x32xf32>
    %345 = vector.broadcast %325 : vector<1x32xf32> to vector<16x32xf32>
    %346 = arith.mulf %344, %345 : vector<16x32xf32>
    %347 = vector.broadcast %326 : vector<1x32xf32> to vector<16x32xf32>
    %348 = arith.addf %346, %347 : vector<16x32xf32>
    %349 = vector.shape_cast %348 : vector<16x32xf32> to vector<2x8x32xf32>
    %c0_169 = arith.constant 0 : index
    %c0_170 = arith.constant 0 : index
    %c0_171 = arith.constant 0 : index
    %350 = vector.load %arg2[%c0_169, %c0_170, %c0_171] : memref<2x8x1xf32, #tpu.memory_space<vmem>>, vector<2x8x1xf32>
    %351 = vector.broadcast %350 : vector<2x8x1xf32> to vector<2x8x32xf32>
    %352 = arith.mulf %349, %351 : vector<2x8x32xf32>
    %cst_172 = arith.constant dense<0.000000e+00> : vector<2x32xf32>
    %353 = vector.multi_reduction <add>, %352, %cst_172 [1] : vector<2x8x32xf32> to vector<2x32xf32>
    %cst_173 = arith.constant dense<0.000000e+00> : vector<2x1xf32>
    %354 = vector.multi_reduction <add>, %350, %cst_173 [1] : vector<2x8x1xf32> to vector<2x1xf32>
    %cst_174 = arith.constant 1.000000e+00 : f32
    %355 = vector.broadcast %cst_174 : f32 to vector<2x1xf32>
    %356 = arith.maximumf %354, %355 : vector<2x1xf32>
    %357 = tpu.reciprocal %356 {approx = true} : vector<2x1xf32> -> vector<2x1xf32>
    %358 = vector.broadcast %357 : vector<2x1xf32> to vector<2x32xf32>
    %359 = arith.mulf %353, %358 : vector<2x32xf32>
    %360 = arith.truncf %359 : vector<2x32xf32> to vector<2x32xbf16>
    %c0_175 = arith.constant 0 : index
    %c0_176 = arith.constant 0 : index
    %361 = vector.load %arg35[%c0_175, %c0_176] : memref<32x24xbf16, #tpu.memory_space<vmem>>, vector<32x24xbf16>
    %cst_177 = arith.constant dense<0.000000e+00> : vector<2x24xf32>
    %362 = tpu.matmul %360, %361, %cst_177 {dimension_numbers = #tpu.dot_dimension_numbers<[1], [0], [0], [1], [0, 0, 1, 1], [], []>} : vector<2x32xbf16>, vector<32x24xbf16>, vector<2x24xf32> -> vector<2x24xf32>
    %363 = arith.mulf %362, %362 : vector<2x24xf32>
    %364 = arith.mulf %362, %363 : vector<2x24xf32>
    %cst_178 = arith.constant 4.471500e-02 : f32
    %365 = vector.broadcast %cst_178 : f32 to vector<2x24xf32>
    %366 = arith.mulf %365, %364 : vector<2x24xf32>
    %367 = arith.addf %362, %366 : vector<2x24xf32>
    %cst_179 = arith.constant 0.797884583 : f32
    %368 = vector.broadcast %cst_179 : f32 to vector<2x24xf32>
    %369 = arith.mulf %368, %367 : vector<2x24xf32>
    %370 = math.tanh %369 : vector<2x24xf32>
    %cst_180 = arith.constant 1.000000e+00 : f32
    %371 = vector.broadcast %cst_180 : f32 to vector<2x24xf32>
    %372 = arith.addf %371, %370 : vector<2x24xf32>
    %cst_181 = arith.constant 5.000000e-01 : f32
    %373 = vector.broadcast %cst_181 : f32 to vector<2x24xf32>
    %374 = arith.mulf %373, %372 : vector<2x24xf32>
    %375 = arith.mulf %362, %374 : vector<2x24xf32>
    %376 = arith.truncf %375 : vector<2x24xf32> to vector<2x24xbf16>
    %c0_182 = arith.constant 0 : index
    %c0_183 = arith.constant 0 : index
    %377 = vector.load %arg36[%c0_182, %c0_183] : memref<24x128xbf16, #tpu.memory_space<vmem>>, vector<24x128xbf16>
    %cst_184 = arith.constant dense<0.000000e+00> : vector<2x128xf32>
    %378 = tpu.matmul %376, %377, %cst_184 {dimension_numbers = #tpu.dot_dimension_numbers<[1], [0], [0], [1], [0, 0, 1, 1], [], []>} : vector<2x24xbf16>, vector<24x128xbf16>, vector<2x128xf32> -> vector<2x128xf32>
    %c0_185 = arith.constant 0 : index
    %c0_186 = arith.constant 0 : index
    %379 = vector.load %arg37[%c0_185, %c0_186] : memref<2x128xf32, #tpu.memory_space<vmem>>, vector<2x128xf32>
    tpu.vector_store %arg37[%c0_185, %c0_186], %378 {strides = array<i32>} : memref<2x128xf32, #tpu.memory_space<vmem>>, vector<2x128xf32>,
    return
  }
}

</mosaic_0001>

<llo_original>
// kernel: forward.1
$region0: #{forward.1}
  #allocation0 [shape = 'u32[]', space=smem, size = 0x4, offset = 0x4, fixed_abs, tag = 'smem constant byte address 0x4 - core index']
  #allocation1 [shape = 'u32[144,128]{1,0:T(1,128)}', space=vmem, size = 0x12000, scoped, tag = 'internal scratch']
  #allocation2 [shape = 'f32[2,8,32]{2,1,0:T(8,128)}', space=vmem, size = 0x2000, scoped, tag = 'scratch operand']
  %s0 = inlined_call_operand.smem [shape: u32[38], index: -1, kind: input, shape index: {}]
  %s1 = sld [smem:[%s0]]
  %s2 = scalar_lea.smem %s0, 1
  %s3 = sld [smem:[%s2]]
  %s4 = scalar_lea.smem %s0, 2
  %s5 = sld [smem:[%s4]]
  %s6 = scalar_lea.smem %s0, 3
  %s7 = sld [smem:[%s6]]
  %s8 = scalar_lea.smem %s0, 4
  %s9 = sld [smem:[%s8]]
  %s10 = scalar_lea.smem %s0, 5
  %s11 = sld [smem:[%s10]]
  %s12 = scalar_lea.smem %s0, 6
  %s13 = sld [smem:[%s12]]
  %s14 = scalar_lea.smem %s0, 7
  %s15 = sld [smem:[%s14]]
  %s16 = scalar_lea.smem %s0, 8
  %s17 = sld [smem:[%s16]]
  %s18 = scalar_lea.smem %s0, 9
  %s19 = sld [smem:[%s18]]
  %s20 = scalar_lea.smem %s0, 10
  %s21 = sld [smem:[%s20]]
  %s22 = scalar_lea.smem %s0, 11
  %s23 = sld [smem:[%s22]]
  %s24 = scalar_lea.smem %s0, 12
  %s25 = sld [smem:[%s24]]
  %s26 = scalar_lea.smem %s0, 13
  %s27 = sld [smem:[%s26]]
  %s28 = scalar_lea.smem %s0, 14
  %s29 = sld [smem:[%s28]]
  %s30 = scalar_lea.smem %s0, 15
  %s31 = sld [smem:[%s30]]
  %s32 = scalar_lea.smem %s0, 16
  %s33 = sld [smem:[%s32]]
  %s34 = scalar_lea.smem %s0, 17
  %s35 = sld [smem:[%s34]]
  %s36 = scalar_lea.smem %s0, 18
  %s37 = sld [smem:[%s36]]
  %s38 = scalar_lea.smem %s0, 19
  %s39 = sld [smem:[%s38]]
  %s40 = scalar_lea.smem %s0, 20
  %s41 = sld [smem:[%s40]]
  %s42 = scalar_lea.smem %s0, 21
  %s43 = sld [smem:[%s42]]
  %s44 = scalar_lea.smem %s0, 22
  %s45 = sld [smem:[%s44]]
  %s46 = scalar_lea.smem %s0, 23
  %s47 = sld [smem:[%s46]]
  %s48 = scalar_lea.smem %s0, 24
  %s49 = sld [smem:[%s48]]
  %s50 = scalar_lea.smem %s0, 25
  %s51 = sld [smem:[%s50]]
  %s52 = scalar_lea.smem %s0, 26
  %s53 = sld [smem:[%s52]]
  %s54 = scalar_lea.smem %s0, 27
  %s55 = sld [smem:[%s54]]
  %s56 = scalar_lea.smem %s0, 28
  %s57 = sld [smem:[%s56]]
  %s58 = scalar_lea.smem %s0, 29
  %s59 = sld [smem:[%s58]]
  %s60 = scalar_lea.smem %s0, 30
  %s61 = sld [smem:[%s60]]
  %s62 = scalar_lea.smem %s0, 31
  %s63 = sld [smem:[%s62]]
  %s64 = scalar_lea.smem %s0, 32
  %s65 = sld [smem:[%s64]]
  %s66 = scalar_lea.smem %s0, 33
  %s67 = sld [smem:[%s66]]
  %s68 = scalar_lea.smem %s0, 34
  %s69 = sld [smem:[%s68]]
  %s70 = scalar_lea.smem %s0, 35
  %s71 = sld [smem:[%s70]]
  %s72 = scalar_lea.smem %s0, 36
  %s73 = sld [smem:[%s72]]
  %s74 = scalar_lea.smem %s0, 37
  %s75 = sld [smem:[%s74]]
  %s76 = sld [smem:[#allocation0]]
  $region158: #{forward.1} parent=0
    _
  %s78 = ssub.s32 1, %s76
  %s79 = scalar_select 0, %s78, %s76
  $region1: #{forward.1} parent=0
    #allocation3 [shape = 'u8[1024]{0}', space=vmem, size = 0x400, scoped, tag = 'output window, operand 0, single buffered']
    #allocation4 [shape = 's32[1]{0}', space=sflag, size = 0x4, scoped, tag = 'scoped memory for forward.1']
    %80 = vsyncpa [#allocation4], 0
    // Predicated region
    $region2: #{forward.1} parent=1 // pred_check
      _
    $region3: #{forward.1} parent=1 // pred_check_branch
      %82 = sbr.rel (0) target = $region5
    $region4: #{forward.1} parent=1 // pred_region
      _
    $region5: #{forward.1} parent=1 // pred_fallthru
      _
    // Predicated region
    $region6: #{forward.1} parent=1 // pred_check
      _
    $region7: #{forward.1} parent=1 // pred_check_branch
      %84 = sbr.rel (0) target = $region9
    $region8: #{forward.1} parent=1 // pred_region
      _
    $region9: #{forward.1} parent=1 // pred_fallthru
      _
    // Predicated region
    $region10: #{forward.1} parent=1 // pred_check
      _
    $region11: #{forward.1} parent=1 // pred_check_branch
      %86 = sbr.rel (0) target = $region13
    $region12: #{forward.1} parent=1 // pred_region
      _
    $region13: #{forward.1} parent=1 // pred_fallthru
      _
    // Predicated region
    $region14: #{forward.1} parent=1 // pred_check
      _
    $region15: #{forward.1} parent=1 // pred_check_branch
      %88 = sbr.rel (0) target = $region17
    $region16: #{forward.1} parent=1 // pred_region
      _
    $region17: #{forward.1} parent=1 // pred_fallthru
      _
    // Predicated region
    $region18: #{forward.1} parent=1 // pred_check
      _
    $region19: #{forward.1} parent=1 // pred_check_branch
      %90 = sbr.rel (0) target = $region21
    $region20: #{forward.1} parent=1 // pred_region
      _
    $region21: #{forward.1} parent=1 // pred_fallthru
      _
    // Predicated region
    $region22: #{forward.1} parent=1 // pred_check
      _
    $region23: #{forward.1} parent=1 // pred_check_branch
      %92 = sbr.rel (0) target = $region25
    $region24: #{forward.1} parent=1 // pred_region
      _
    $region25: #{forward.1} parent=1 // pred_fallthru
      _
    // Predicated region
    $region26: #{forward.1} parent=1 // pred_check
      _
    $region27: #{forward.1} parent=1 // pred_check_branch
      %94 = sbr.rel (0) target = $region29
    $region28: #{forward.1} parent=1 // pred_region
      _
    $region29: #{forward.1} parent=1 // pred_fallthru
      _
    // Predicated region
    $region30: #{forward.1} parent=1 // pred_check
      _
    $region31: #{forward.1} parent=1 // pred_check_branch
      %96 = sbr.rel (0) target = $region33
    $region32: #{forward.1} parent=1 // pred_region
      _
    $region33: #{forward.1} parent=1 // pred_fallthru
      _
    // Predicated region
    $region34: #{forward.1} parent=1 // pred_check
      _
    $region35: #{forward.1} parent=1 // pred_check_branch
      %98 = sbr.rel (0) target = $region37
    $region36: #{forward.1} parent=1 // pred_region
      _
    $region37: #{forward.1} parent=1 // pred_fallthru
      _
    // Predicated region
    $region38: #{forward.1} parent=1 // pred_check
      _
    $region39: #{forward.1} parent=1 // pred_check_branch
      %100 = sbr.rel (0) target = $region41
    $region40: #{forward.1} parent=1 // pred_region
      _
    $region41: #{forward.1} parent=1 // pred_fallthru
      _
    // Predicated region
    $region42: #{forward.1} parent=1 // pred_check
      _
    $region43: #{forward.1} parent=1 // pred_check_branch
      %102 = sbr.rel (0) target = $region45
    $region44: #{forward.1} parent=1 // pred_region
      _
    $region45: #{forward.1} parent=1 // pred_fallthru
      _
    // Predicated region
    $region46: #{forward.1} parent=1 // pred_check
      _
    $region47: #{forward.1} parent=1 // pred_check_branch
      %104 = sbr.rel (0) target = $region49
    $region48: #{forward.1} parent=1 // pred_region
      _
    $region49: #{forward.1} parent=1 // pred_fallthru
      _
    // Predicated region
    $region50: #{forward.1} parent=1 // pred_check
      _
    $region51: #{forward.1} parent=1 // pred_check_branch
      %106 = sbr.rel (0) target = $region53
    $region52: #{forward.1} parent=1 // pred_region
      _
    $region53: #{forward.1} parent=1 // pred_fallthru
      _
    // Predicated region
    $region54: #{forward.1} parent=1 // pred_check
      _
    $region55: #{forward.1} parent=1 // pred_check_branch
      %108 = sbr.rel (0) target = $region57
    $region56: #{forward.1} parent=1 // pred_region
      _
    $region57: #{forward.1} parent=1 // pred_fallthru
      _
    // Predicated region
    $region58: #{forward.1} parent=1 // pred_check
      _
    $region59: #{forward.1} parent=1 // pred_check_branch
      %110 = sbr.rel (0) target = $region61
    $region60: #{forward.1} parent=1 // pred_region
      _
    $region61: #{forward.1} parent=1 // pred_fallthru
      _
    // Predicated region
    $region62: #{forward.1} parent=1 // pred_check
      _
    $region63: #{forward.1} parent=1 // pred_check_branch
      %112 = sbr.rel (0) target = $region65
    $region64: #{forward.1} parent=1 // pred_region
      _
    $region65: #{forward.1} parent=1 // pred_fallthru
      _
    // Predicated region
    $region66: #{forward.1} parent=1 // pred_check
      _
    $region67: #{forward.1} parent=1 // pred_check_branch
      %114 = sbr.rel (0) target = $region69
    $region68: #{forward.1} parent=1 // pred_region
      _
    $region69: #{forward.1} parent=1 // pred_fallthru
      _
    // Predicated region
    $region70: #{forward.1} parent=1 // pred_check
      _
    $region71: #{forward.1} parent=1 // pred_check_branch
      %116 = sbr.rel (0) target = $region73
    $region72: #{forward.1} parent=1 // pred_region
      _
    $region73: #{forward.1} parent=1 // pred_fallthru
      _
    // Predicated region
    $region74: #{forward.1} parent=1 // pred_check
      _
    $region75: #{forward.1} parent=1 // pred_check_branch
      %118 = sbr.rel (0) target = $region77
    $region76: #{forward.1} parent=1 // pred_region
      _
    $region77: #{forward.1} parent=1 // pred_fallthru
      _
    // Predicated region
    $region78: #{forward.1} parent=1 // pred_check
      _
    $region79: #{forward.1} parent=1 // pred_check_branch
      %120 = sbr.rel (0) target = $region81
    $region80: #{forward.1} parent=1 // pred_region
      _
    $region81: #{forward.1} parent=1 // pred_fallthru
      _
    // Predicated region
    $region82: #{forward.1} parent=1 // pred_check
      _
    $region83: #{forward.1} parent=1 // pred_check_branch
      %122 = sbr.rel (0) target = $region85
    $region84: #{forward.1} parent=1 // pred_region
      _
    $region85: #{forward.1} parent=1 // pred_fallthru
      _
    // Predicated region
    $region86: #{forward.1} parent=1 // pred_check
      _
    $region87: #{forward.1} parent=1 // pred_check_branch
      %124 = sbr.rel (0) target = $region89
    $region88: #{forward.1} parent=1 // pred_region
      _
    $region89: #{forward.1} parent=1 // pred_fallthru
      _
    // Predicated region
    $region90: #{forward.1} parent=1 // pred_check
      _
    $region91: #{forward.1} parent=1 // pred_check_branch
      %126 = sbr.rel (0) target = $region93
    $region92: #{forward.1} parent=1 // pred_region
      _
    $region93: #{forward.1} parent=1 // pred_fallthru
      _
    // Predicated region
    $region94: #{forward.1} parent=1 // pred_check
      _
    $region95: #{forward.1} parent=1 // pred_check_branch
      %128 = sbr.rel (0) target = $region97
    $region96: #{forward.1} parent=1 // pred_region
      _
    $region97: #{forward.1} parent=1 // pred_fallthru
      _
    // Predicated region
    $region98: #{forward.1} parent=1 // pred_check
      _
    $region99: #{forward.1} parent=1 // pred_check_branch
      %130 = sbr.rel (0) target = $region101
    $region100: #{forward.1} parent=1 // pred_region
      _
    $region101: #{forward.1} parent=1 // pred_fallthru
      _
    // Predicated region
    $region102: #{forward.1} parent=1 // pred_check
      _
    $region103: #{forward.1} parent=1 // pred_check_branch
      %132 = sbr.rel (0) target = $region105
    $region104: #{forward.1} parent=1 // pred_region
      _
    $region105: #{forward.1} parent=1 // pred_fallthru
      _
    // Predicated region
    $region106: #{forward.1} parent=1 // pred_check
      _
    $region107: #{forward.1} parent=1 // pred_check_branch
      %134 = sbr.rel (0) target = $region109
    $region108: #{forward.1} parent=1 // pred_region
      _
    $region109: #{forward.1} parent=1 // pred_fallthru
      _
    // Predicated region
    $region110: #{forward.1} parent=1 // pred_check
      _
    $region111: #{forward.1} parent=1 // pred_check_branch
      %136 = sbr.rel (0) target = $region113
    $region112: #{forward.1} parent=1 // pred_region
      _
    $region113: #{forward.1} parent=1 // pred_fallthru
      _
    // Predicated region
    $region114: #{forward.1} parent=1 // pred_check
      _
    $region115: #{forward.1} parent=1 // pred_check_branch
      %138 = sbr.rel (0) target = $region117
    $region116: #{forward.1} parent=1 // pred_region
      _
    $region117: #{forward.1} parent=1 // pred_fallthru
      _
    // Predicated region
    $region118: #{forward.1} parent=1 // pred_check
      _
    $region119: #{forward.1} parent=1 // pred_check_branch
      %140 = sbr.rel (0) target = $region121
    $region120: #{forward.1} parent=1 // pred_region
      _
    $region121: #{forward.1} parent=1 // pred_fallthru
      _
    // Predicated region
    $region122: #{forward.1} parent=1 // pred_check
      _
    $region123: #{forward.1} parent=1 // pred_check_branch
      %142 = sbr.rel (0) target = $region125
    $region124: #{forward.1} parent=1 // pred_region
      _
    $region125: #{forward.1} parent=1 // pred_fallthru
      _
    // Predicated region
    $region126: #{forward.1} parent=1 // pred_check
      _
    $region127: #{forward.1} parent=1 // pred_check_branch
      %144 = sbr.rel (0) target = $region129
    $region128: #{forward.1} parent=1 // pred_region
      _
    $region129: #{forward.1} parent=1 // pred_fallthru
      _
    // Predicated region
    $region130: #{forward.1} parent=1 // pred_check
      _
    $region131: #{forward.1} parent=1 // pred_check_branch
      %146 = sbr.rel (0) target = $region133
    $region132: #{forward.1} parent=1 // pred_region
      _
    $region133: #{forward.1} parent=1 // pred_fallthru
      _
    // Predicated region
    $region134: #{forward.1} parent=1 // pred_check
      _
    $region135: #{forward.1} parent=1 // pred_check_branch
      %148 = sbr.rel (0) target = $region137
    $region136: #{forward.1} parent=1 // pred_region
      _
    $region137: #{forward.1} parent=1 // pred_fallthru
      _
    // Predicated region
    $region138: #{forward.1} parent=1 // pred_check
      _
    $region139: #{forward.1} parent=1 // pred_check_branch
      %150 = sbr.rel (0) target = $region141
    $region140: #{forward.1} parent=1 // pred_region
      _
    $region141: #{forward.1} parent=1 // pred_fallthru
      _
    // Predicated region
    $region142: #{forward.1} parent=1 // pred_check
      _
    $region143: #{forward.1} parent=1 // pred_check_branch
      %152 = sbr.rel (0) target = $region145
    $region144: #{forward.1} parent=1 // pred_region
      _
    $region145: #{forward.1} parent=1 // pred_fallthru
      _
    // Predicated region
    $region146: #{forward.1} parent=1 // pred_check
      _
    $region147: #{forward.1} parent=1 // pred_check_branch
      %154 = sbr.rel (0) target = $region149
    $region148: #{forward.1} parent=1 // pred_region
      _
    $region149: #{forward.1} parent=1 // pred_fallthru
      _
    %v156 = vld [vmem:[%s1] sm:$0xff]
    %v157 = vld [vmem:[%s1 + $0x8] sm:$0xff]
    %v158 = vld [vmem:[%s3] sm:$0x1]
    %v159 = vld [vmem:[%s3 + $0x1] sm:$0x1]
    %v162 = vlaneseq
    %v163 = vshrl.u32 %v162, 7
    %v164 = vsub.s32 0, %v163
    %v165 = vrot.slane %v158, %v164
    %v166 = vlaneseq
    %v167 = vshrl.u32 %v166, 7
    %v168 = vsub.s32 0, %v167
    %v169 = vrot.slane %v159, %v168
    %v172 = vpack.c.bf16 %v157, %v156
    %v173 = vld [vmem:[%s7] sm:$0xf]
    %v174 = vld [vmem:[%s7 + $0x4] sm:$0xf]
    %v175 = vld [vmem:[%s7 + $0x8] sm:$0xf]
    %v176 = vld [vmem:[%s7 + $0xc] sm:$0xf]
    %v177 = vld [vmem:[%s9] sm:$0x1]
    %v179 = vlaneseq
    %v180 = vshrl.u32 %v179, 7
    %v181 = vsub.s32 0, %v180
    %v182 = vrot.slane %v177, %v181
    %v188 = vunpack.c.l.b16 %v173
    %v189 = vunpack.c.l.b16 %v174
    %v190 = vunpack.c.l.b16 %v175
    %v191 = vunpack.c.l.b16 %v176
    %v192 = vpack.c.b16 %v189, %v188
    %v193 = vpack.c.b16 %v191, %v190
    %vm196 = vcmask 261120
    %v198 = vsel %vm196, %v172, 0
    %200 = vmatprep.subr.bf16.mxu0 0
    %201 = vmatpush1.bf16.msra.mxu0 0
    %202 = vmatprep.subr.bf16.mxu0 0
    %203 = vmatpush1.bf16.msra.mxu0 0
    %204 = vmatprep.subr.bf16.mxu0 0
    %205 = vmatpush1.bf16.msra.mxu0 0
    %206 = vmatprep.subr.bf16.mxu0 0
    %207 = vmatpush1.bf16.msra.mxu0 0
    %208 = vmatprep.subr.bf16.mxu0 0
    %209 = vmatpush1.bf16.msra.mxu0 0
    %210 = vmatprep.subr.bf16.mxu0 0
    %211 = vmatpush1.bf16.msra.mxu0 0
    %212 = vmatprep.subr.bf16.mxu0 0
    %213 = vmatpush1.bf16.msra.mxu0 %v193
    %214 = vmatprep.subr.bf16.mxu0 0
    %215 = vmatpush1.bf16.msra.mxu0 %v192
    %216 = vmatprep.subr.bf16.mxu0 0
    %217 = vmatpush2.bf16.msra.mxu0 0
    %218 = vmatprep.subr.bf16.mxu0 0
    %219 = vmatpush2.bf16.msra.mxu0 0
    %220 = vmatprep.subr.bf16.mxu0 0
    %221 = vmatpush2.bf16.msra.mxu0 0
    %222 = vmatprep.subr.bf16.mxu0 0
    %223 = vmatpush2.bf16.msra.mxu0 0
    %224 = vmatprep.subr.bf16.mxu0 0
    %225 = vmatpush2.bf16.msra.mxu0 0
    %226 = vmatprep.subr.bf16.mxu0 0
    %227 = vmatpush2.bf16.msra.mxu0 0
    %228 = vmatprep.subr.bf16.mxu0 0
    %229 = vmatpush2.bf16.msra.mxu0 0
    %230 = vmatprep.subr.bf16.mxu0 0
    %231 = vmatpush2.bf16.msra.mxu0 0
    %232 = vmatprep.mubr.bf16.mxu0 0
    %233 = vmatmul.mubr.bf16.gmra.mxu0 %v198
    %v234 = vpop.f32.mrf.mxu0
    %v235 = vadd.f32 %v182, %v234
    %v236 = vpop.f32.mrf.mxu0
    %v237 = vpop.f32.mrf.mxu0
    %v238 = vadd.f32 %v182, %v237
    %v239 = vpop.f32.mrf.mxu0
    %240 = vdwg.mxu0
    %v241 = vld [vmem:[%s11] sm:$0xf]
    %v242 = vld [vmem:[%s11 + $0x4] sm:$0xf]
    %v243 = vld [vmem:[%s11 + $0x8] sm:$0xf]
    %v244 = vld [vmem:[%s11 + $0xc] sm:$0xf]
    %v245 = vld [vmem:[%s13] sm:$0x1]
    %v247 = vlaneseq
    %v248 = vshrl.u32 %v247, 7
    %v249 = vsub.s32 0, %v248
    %v250 = vrot.slane %v245, %v249
    %v256 = vunpack.c.l.b16 %v241
    %v257 = vunpack.c.l.b16 %v242
    %v258 = vunpack.c.l.b16 %v243
    %v259 = vunpack.c.l.b16 %v244
    %v260 = vpack.c.b16 %v257, %v256
    %v261 = vpack.c.b16 %v259, %v258
    %264 = vmatprep.subr.bf16.mxu0 0
    %265 = vmatpush1.bf16.msra.mxu0 0
    %266 = vmatprep.subr.bf16.mxu0 0
    %267 = vmatpush1.bf16.msra.mxu0 0
    %268 = vmatprep.subr.bf16.mxu0 0
    %269 = vmatpush1.bf16.msra.mxu0 0
    %270 = vmatprep.subr.bf16.mxu0 0
    %271 = vmatpush1.bf16.msra.mxu0 0
    %272 = vmatprep.subr.bf16.mxu0 0
    %273 = vmatpush1.bf16.msra.mxu0 0
    %274 = vmatprep.subr.bf16.mxu0 0
    %275 = vmatpush1.bf16.msra.mxu0 0
    %276 = vmatprep.subr.bf16.mxu0 0
    %277 = vmatpush1.bf16.msra.mxu0 %v261
    %278 = vmatprep.subr.bf16.mxu0 0
    %279 = vmatpush1.bf16.msra.mxu0 %v260
    %280 = vmatprep.subr.bf16.mxu0 0
    %281 = vmatpush2.bf16.msra.mxu0 0
    %282 = vmatprep.subr.bf16.mxu0 0
    %283 = vmatpush2.bf16.msra.mxu0 0
    %284 = vmatprep.subr.bf16.mxu0 0
    %285 = vmatpush2.bf16.msra.mxu0 0
    %286 = vmatprep.subr.bf16.mxu0 0
    %287 = vmatpush2.bf16.msra.mxu0 0
    %288 = vmatprep.subr.bf16.mxu0 0
    %289 = vmatpush2.bf16.msra.mxu0 0
    %290 = vmatprep.subr.bf16.mxu0 0
    %291 = vmatpush2.bf16.msra.mxu0 0
    %292 = vmatprep.subr.bf16.mxu0 0
    %293 = vmatpush2.bf16.msra.mxu0 0
    %294 = vmatprep.subr.bf16.mxu0 0
    %295 = vmatpush2.bf16.msra.mxu0 0
    %296 = vmatprep.mubr.bf16.mxu0 0
    %297 = vmatmul.mubr.bf16.gmra.mxu0 %v198
    %v298 = vpop.f32.mrf.mxu0
    %v299 = vadd.f32 %v250, %v298
    %v300 = vpop.f32.mrf.mxu0
    %v301 = vpop.f32.mrf.mxu0
    %v302 = vadd.f32 %v250, %v301
    %v303 = vpop.f32.mrf.mxu0
    %304 = vdwg.mxu0
    %v305 = vld [vmem:[%s15] sm:$0xf]
    %v306 = vld [vmem:[%s15 + $0x4] sm:$0xf]
    %v307 = vld [vmem:[%s15 + $0x8] sm:$0xf]
    %v308 = vld [vmem:[%s15 + $0xc] sm:$0xf]
    %v309 = vld [vmem:[%s17] sm:$0x1]
    %v311 = vlaneseq
    %v312 = vshrl.u32 %v311, 7
    %v313 = vsub.s32 0, %v312
    %v314 = vrot.slane %v309, %v313
    %v320 = vunpack.c.l.b16 %v305
    %v321 = vunpack.c.l.b16 %v306
    %v322 = vunpack.c.l.b16 %v307
    %v323 = vunpack.c.l.b16 %v308
    %v324 = vpack.c.b16 %v321, %v320
    %v325 = vpack.c.b16 %v323, %v322
    %328 = vmatprep.subr.bf16.mxu0 0
    %329 = vmatpush1.bf16.msra.mxu0 0
    %330 = vmatprep.subr.bf16.mxu0 0
    %331 = vmatpush1.bf16.msra.mxu0 0
    %332 = vmatprep.subr.bf16.mxu0 0
    %333 = vmatpush1.bf16.msra.mxu0 0
    %334 = vmatprep.subr.bf16.mxu0 0
    %335 = vmatpush1.bf16.msra.mxu0 0
    %336 = vmatprep.subr.bf16.mxu0 0
    %337 = vmatpush1.bf16.msra.mxu0 0
    %338 = vmatprep.subr.bf16.mxu0 0
    %339 = vmatpush1.bf16.msra.mxu0 0
    %340 = vmatprep.subr.bf16.mxu0 0
    %341 = vmatpush1.bf16.msra.mxu0 %v325
    %342 = vmatprep.subr.bf16.mxu0 0
    %343 = vmatpush1.bf16.msra.mxu0 %v324
    %344 = vmatprep.subr.bf16.mxu0 0
    %345 = vmatpush2.bf16.msra.mxu0 0
    %346 = vmatprep.subr.bf16.mxu0 0
    %347 = vmatpush2.bf16.msra.mxu0 0
    %348 = vmatprep.subr.bf16.mxu0 0
    %349 = vmatpush2.bf16.msra.mxu0 0
    %350 = vmatprep.subr.bf16.mxu0 0
    %351 = vmatpush2.bf16.msra.mxu0 0
    %352 = vmatprep.subr.bf16.mxu0 0
    %353 = vmatpush2.bf16.msra.mxu0 0
    %354 = vmatprep.subr.bf16.mxu0 0
    %355 = vmatpush2.bf16.msra.mxu0 0
    %356 = vmatprep.subr.bf16.mxu0 0
    %357 = vmatpush2.bf16.msra.mxu0 0
    %358 = vmatprep.subr.bf16.mxu0 0
    %359 = vmatpush2.bf16.msra.mxu0 0
    %360 = vmatprep.mubr.bf16.mxu0 0
    %361 = vmatmul.mubr.bf16.gmra.mxu0 %v198
    %v362 = vpop.f32.mrf.mxu0
    %v363 = vadd.f32 %v314, %v362
    %v364 = vpop.f32.mrf.mxu0
    %v365 = vpop.f32.mrf.mxu0
    %v366 = vadd.f32 %v314, %v365
    %v367 = vpop.f32.mrf.mxu0
    %368 = vdwg.mxu0
    %v369 = vmul.f32 %v235, 0.35355338
    %v370 = vmul.f32 %v238, 0.35355338
    %vm371 = vcmask 64512
    %v373 = vsel %vm371, %v369, 0
    %v376 = vsel %vm371, %v299, 0
    %378 = vmatprep.subr.mxu0 0.0
    %379 = vmatpush1.xpose.msra.mxu0 0.0
    %380 = vmatprep.subr.mxu0 0.0
    %381 = vmatpush1.xpose.msra.mxu0 0.0
    %382 = vmatprep.subr.mxu0 0.0
    %383 = vmatpush1.xpose.msra.mxu0 0.0
    %384 = vmatprep.subr.mxu0 0.0
    %385 = vmatpush1.xpose.msra.mxu0 0.0
    %386 = vmatprep.subr.mxu0 0.0
    %387 = vmatpush1.xpose.msra.mxu0 0.0
    %388 = vmatprep.subr.mxu0 0.0
    %389 = vmatpush1.xpose.msra.mxu0 0.0
    %390 = vmatprep.subr.mxu0 0.0
    %391 = vmatpush1.xpose.msra.mxu0 0.0
    %392 = vmatprep.subr.mxu0 0.0
    %393 = vmatpush1.xpose.msra.mxu0 0.0
    %394 = vmatprep.subr.mxu0 0.0
    %395 = vmatpush1.xpose.msra.mxu0 0.0
    %396 = vmatprep.subr.mxu0 0.0
    %397 = vmatpush1.xpose.msra.mxu0 0.0
    %398 = vmatprep.subr.mxu0 0.0
    %399 = vmatpush1.xpose.msra.mxu0 0.0
    %400 = vmatprep.subr.mxu0 0.0
    %401 = vmatpush1.xpose.msra.mxu0 0.0
    %402 = vmatprep.subr.mxu0 0.0
    %403 = vmatpush1.xpose.msra.mxu0 0.0
    %404 = vmatprep.subr.mxu0 0.0
    %405 = vmatpush1.xpose.msra.mxu0 0.0
    %406 = vmatprep.subr.mxu0 0.0
    %407 = vmatpush1.xpose.msra.mxu0 0.0
    %408 = vmatprep.subr.mxu0 0.0
    %409 = vmatpush1.xpose.msra.mxu0 %v376
    %410 = vmatprep.subr.mxu0 0.0
    %411 = vmatpush2.xpose.msra.mxu0 0.0
    %412 = vmatprep.subr.mxu0 0.0
    %413 = vmatpush2.xpose.msra.mxu0 0.0
    %414 = vmatprep.subr.mxu0 0.0
    %415 = vmatpush2.xpose.msra.mxu0 0.0
    %416 = vmatprep.subr.mxu0 0.0
    %417 = vmatpush2.xpose.msra.mxu0 0.0
    %418 = vmatprep.subr.mxu0 0.0
    %419 = vmatpush2.xpose.msra.mxu0 0.0
    %420 = vmatprep.subr.mxu0 0.0
    %421 = vmatpush2.xpose.msra.mxu0 0.0
    %422 = vmatprep.subr.mxu0 0.0
    %423 = vmatpush2.xpose.msra.mxu0 0.0
    %424 = vmatprep.subr.mxu0 0.0
    %425 = vmatpush2.xpose.msra.mxu0 0.0
    %426 = vmatprep.subr.mxu0 0.0
    %427 = vmatpush2.xpose.msra.mxu0 0.0
    %428 = vmatprep.subr.mxu0 0.0
    %429 = vmatpush2.xpose.msra.mxu0 0.0
    %430 = vmatprep.subr.mxu0 0.0
    %431 = vmatpush2.xpose.msra.mxu0 0.0
    %432 = vmatprep.subr.mxu0 0.0
    %433 = vmatpush2.xpose.msra.mxu0 0.0
    %434 = vmatprep.subr.mxu0 0.0
    %435 = vmatpush2.xpose.msra.mxu0 0.0
    %436 = vmatprep.subr.mxu0 0.0
    %437 = vmatpush2.xpose.msra.mxu0 0.0
    %438 = vmatprep.subr.mxu0 0.0
    %439 = vmatpush2.xpose.msra.mxu0 0.0
    %440 = vmatprep.subr.mxu0 0.0
    %441 = vmatpush2.xpose.msra.mxu0 0.0
    %442 = vmatprep.mubr.f32.mxu0 0.0
    %443 = vmatmul.mubr.f32.gmra.mxu0 %v373
    %v444 = vpop.f32.mrf.mxu0
    %v445 = vadd.f32 %v165, %v444
    %v446 = vpop.f32.mrf.mxu0
    %447 = vdwg.mxu0
    %v449 = vsel %vm371, %v370, 0
    %v452 = vsel %vm371, %v302, 0
    %454 = vmatprep.subr.mxu0 0.0
    %455 = vmatpush1.xpose.msra.mxu0 0.0
    %456 = vmatprep.subr.mxu0 0.0
    %457 = vmatpush1.xpose.msra.mxu0 0.0
    %458 = vmatprep.subr.mxu0 0.0
    %459 = vmatpush1.xpose.msra.mxu0 0.0
    %460 = vmatprep.subr.mxu0 0.0
    %461 = vmatpush1.xpose.msra.mxu0 0.0
    %462 = vmatprep.subr.mxu0 0.0
    %463 = vmatpush1.xpose.msra.mxu0 0.0
    %464 = vmatprep.subr.mxu0 0.0
    %465 = vmatpush1.xpose.msra.mxu0 0.0
    %466 = vmatprep.subr.mxu0 0.0
    %467 = vmatpush1.xpose.msra.mxu0 0.0
    %468 = vmatprep.subr.mxu0 0.0
    %469 = vmatpush1.xpose.msra.mxu0 0.0
    %470 = vmatprep.subr.mxu0 0.0
    %471 = vmatpush1.xpose.msra.mxu0 0.0
    %472 = vmatprep.subr.mxu0 0.0
    %473 = vmatpush1.xpose.msra.mxu0 0.0
    %474 = vmatprep.subr.mxu0 0.0
    %475 = vmatpush1.xpose.msra.mxu0 0.0
    %476 = vmatprep.subr.mxu0 0.0
    %477 = vmatpush1.xpose.msra.mxu0 0.0
    %478 = vmatprep.subr.mxu0 0.0
    %479 = vmatpush1.xpose.msra.mxu0 0.0
    %480 = vmatprep.subr.mxu0 0.0
    %481 = vmatpush1.xpose.msra.mxu0 0.0
    %482 = vmatprep.subr.mxu0 0.0
    %483 = vmatpush1.xpose.msra.mxu0 0.0
    %484 = vmatprep.subr.mxu0 0.0
    %485 = vmatpush1.xpose.msra.mxu0 %v452
    %486 = vmatprep.subr.mxu0 0.0
    %487 = vmatpush2.xpose.msra.mxu0 0.0
    %488 = vmatprep.subr.mxu0 0.0
    %489 = vmatpush2.xpose.msra.mxu0 0.0
    %490 = vmatprep.subr.mxu0 0.0
    %491 = vmatpush2.xpose.msra.mxu0 0.0
    %492 = vmatprep.subr.mxu0 0.0
    %493 = vmatpush2.xpose.msra.mxu0 0.0
    %494 = vmatprep.subr.mxu0 0.0
    %495 = vmatpush2.xpose.msra.mxu0 0.0
    %496 = vmatprep.subr.mxu0 0.0
    %497 = vmatpush2.xpose.msra.mxu0 0.0
    %498 = vmatprep.subr.mxu0 0.0
    %499 = vmatpush2.xpose.msra.mxu0 0.0
    %500 = vmatprep.subr.mxu0 0.0
    %501 = vmatpush2.xpose.msra.mxu0 0.0
    %502 = vmatprep.subr.mxu0 0.0
    %503 = vmatpush2.xpose.msra.mxu0 0.0
    %504 = vmatprep.subr.mxu0 0.0
    %505 = vmatpush2.xpose.msra.mxu0 0.0
    %506 = vmatprep.subr.mxu0 0.0
    %507 = vmatpush2.xpose.msra.mxu0 0.0
    %508 = vmatprep.subr.mxu0 0.0
    %509 = vmatpush2.xpose.msra.mxu0 0.0
    %510 = vmatprep.subr.mxu0 0.0
    %511 = vmatpush2.xpose.msra.mxu0 0.0
    %512 = vmatprep.subr.mxu0 0.0
    %513 = vmatpush2.xpose.msra.mxu0 0.0
    %514 = vmatprep.subr.mxu0 0.0
    %515 = vmatpush2.xpose.msra.mxu0 0.0
    %516 = vmatprep.subr.mxu0 0.0
    %517 = vmatpush2.xpose.msra.mxu0 0.0
    %518 = vmatprep.mubr.f32.mxu0 0.0
    %519 = vmatmul.mubr.f32.gmra.mxu0 %v449
    %v520 = vpop.f32.mrf.mxu0
    %v521 = vadd.f32 %v169, %v520
    %v522 = vpop.f32.mrf.mxu0
    %523 = vdwg.mxu0
    %v524 = vsel %vm371, %v445, -inf
    %525 = vmax.xlane.f32.xlu0 %v524
    %v526 = vpop.xlane.xlu0 %525
    %v527 = vsel %vm371, %v521, -inf
    %528 = vmax.xlane.f32.xlu0 %v527
    %v529 = vpop.xlane.xlu0 %528
    %v530 = vsub.f32 %v445, %v526
    %v531 = vsub.f32 %v521, %v529
    %v532 = vmul.f32 %v530, 1.442695
    %v533 = vpow.pop %v532
    %v534 = vmul.f32 %v531, 1.442695
    %v535 = vpow.pop %v534
    %v536 = vsel %vm371, %v533, 0.0
    %537 = vadd.xlane.f32.xlu0 %v536
    %v538 = vpop.xlane.xlu0 %537
    %v539 = vsel %vm371, %v535, 0.0
    %540 = vadd.xlane.f32.xlu0 %v539
    %v541 = vpop.xlane.xlu0 %540
    %v542 = vrcp.pop %v538
    %v543 = vrcp.pop %v541
    %v544 = vmul.f32 %v533, %v542
    %v545 = vmul.f32 %v535, %v543
    %v547 = vsel %vm371, %v544, 0
    %549 = vmatprep.subr.mxu0 0.0
    %550 = vmatpush1.msra.mxu0 0.0
    %551 = vmatprep.subr.mxu0 0.0
    %552 = vmatpush1.msra.mxu0 0.0
    %553 = vmatprep.subr.mxu0 0.0
    %554 = vmatpush1.msra.mxu0 0.0
    %555 = vmatprep.subr.mxu0 0.0
    %556 = vmatpush1.msra.mxu0 0.0
    %557 = vmatprep.subr.mxu0 0.0
    %558 = vmatpush1.msra.mxu0 0.0
    %559 = vmatprep.subr.mxu0 0.0
    %560 = vmatpush1.msra.mxu0 0.0
    %561 = vmatprep.subr.mxu0 0.0
    %562 = vmatpush1.msra.mxu0 0.0
    %563 = vmatprep.subr.mxu0 0.0
    %564 = vmatpush1.msra.mxu0 0.0
    %565 = vmatprep.subr.mxu0 0.0
    %566 = vmatpush1.msra.mxu0 0.0
    %567 = vmatprep.subr.mxu0 0.0
    %568 = vmatpush1.msra.mxu0 0.0
    %569 = vmatprep.subr.mxu0 0.0
    %570 = vmatpush1.msra.mxu0 0.0
    %571 = vmatprep.subr.mxu0 0.0
    %572 = vmatpush1.msra.mxu0 0.0
    %573 = vmatprep.subr.mxu0 0.0
    %574 = vmatpush1.msra.mxu0 0.0
    %575 = vmatprep.subr.mxu0 0.0
    %576 = vmatpush1.msra.mxu0 0.0
    %577 = vmatprep.subr.mxu0 0.0
    %578 = vmatpush1.msra.mxu0 0.0
    %579 = vmatprep.subr.mxu0 0.0
    %580 = vmatpush1.msra.mxu0 %v363
    %581 = vmatprep.subr.mxu0 0.0
    %582 = vmatpush2.msra.mxu0 0.0
    %583 = vmatprep.subr.mxu0 0.0
    %584 = vmatpush2.msra.mxu0 0.0
    %585 = vmatprep.subr.mxu0 0.0
    %586 = vmatpush2.msra.mxu0 0.0
    %587 = vmatprep.subr.mxu0 0.0
    %588 = vmatpush2.msra.mxu0 0.0
    %589 = vmatprep.subr.mxu0 0.0
    %590 = vmatpush2.msra.mxu0 0.0
    %591 = vmatprep.subr.mxu0 0.0
    %592 = vmatpush2.msra.mxu0 0.0
    %593 = vmatprep.subr.mxu0 0.0
    %594 = vmatpush2.msra.mxu0 0.0
    %595 = vmatprep.subr.mxu0 0.0
    %596 = vmatpush2.msra.mxu0 0.0
    %597 = vmatprep.subr.mxu0 0.0
    %598 = vmatpush2.msra.mxu0 0.0
    %599 = vmatprep.subr.mxu0 0.0
    %600 = vmatpush2.msra.mxu0 0.0
    %601 = vmatprep.subr.mxu0 0.0
    %602 = vmatpush2.msra.mxu0 0.0
    %603 = vmatprep.subr.mxu0 0.0
    %604 = vmatpush2.msra.mxu0 0.0
    %605 = vmatprep.subr.mxu0 0.0
    %606 = vmatpush2.msra.mxu0 0.0
    %607 = vmatprep.subr.mxu0 0.0
    %608 = vmatpush2.msra.mxu0 0.0
    %609 = vmatprep.subr.mxu0 0.0
    %610 = vmatpush2.msra.mxu0 0.0
    %611 = vmatprep.subr.mxu0 0.0
    %612 = vmatpush2.msra.mxu0 0.0
    %613 = vmatprep.mubr.f32.mxu0 0.0
    %614 = vmatmul.mubr.f32.gmra.mxu0 %v547
    %v615 = vpop.f32.mrf.mxu0
    %v616 = vadd.f32 0.0, %v615
    %v617 = vpop.f32.mrf.mxu0
    %618 = vdwg.mxu0
    %v620 = vsel %vm371, %v545, 0
    %622 = vmatprep.subr.mxu0 0.0
    %623 = vmatpush1.msra.mxu0 0.0
    %624 = vmatprep.subr.mxu0 0.0
    %625 = vmatpush1.msra.mxu0 0.0
    %626 = vmatprep.subr.mxu0 0.0
    %627 = vmatpush1.msra.mxu0 0.0
    %628 = vmatprep.subr.mxu0 0.0
    %629 = vmatpush1.msra.mxu0 0.0
    %630 = vmatprep.subr.mxu0 0.0
    %631 = vmatpush1.msra.mxu0 0.0
    %632 = vmatprep.subr.mxu0 0.0
    %633 = vmatpush1.msra.mxu0 0.0
    %634 = vmatprep.subr.mxu0 0.0
    %635 = vmatpush1.msra.mxu0 0.0
    %636 = vmatprep.subr.mxu0 0.0
    %637 = vmatpush1.msra.mxu0 0.0
    %638 = vmatprep.subr.mxu0 0.0
    %639 = vmatpush1.msra.mxu0 0.0
    %640 = vmatprep.subr.mxu0 0.0
    %641 = vmatpush1.msra.mxu0 0.0
    %642 = vmatprep.subr.mxu0 0.0
    %643 = vmatpush1.msra.mxu0 0.0
    %644 = vmatprep.subr.mxu0 0.0
    %645 = vmatpush1.msra.mxu0 0.0
    %646 = vmatprep.subr.mxu0 0.0
    %647 = vmatpush1.msra.mxu0 0.0
    %648 = vmatprep.subr.mxu0 0.0
    %649 = vmatpush1.msra.mxu0 0.0
    %650 = vmatprep.subr.mxu0 0.0
    %651 = vmatpush1.msra.mxu0 0.0
    %652 = vmatprep.subr.mxu0 0.0
    %653 = vmatpush1.msra.mxu0 %v366
    %654 = vmatprep.subr.mxu0 0.0
    %655 = vmatpush2.msra.mxu0 0.0
    %656 = vmatprep.subr.mxu0 0.0
    %657 = vmatpush2.msra.mxu0 0.0
    %658 = vmatprep.subr.mxu0 0.0
    %659 = vmatpush2.msra.mxu0 0.0
    %660 = vmatprep.subr.mxu0 0.0
    %661 = vmatpush2.msra.mxu0 0.0
    %662 = vmatprep.subr.mxu0 0.0
    %663 = vmatpush2.msra.mxu0 0.0
    %664 = vmatprep.subr.mxu0 0.0
    %665 = vmatpush2.msra.mxu0 0.0
    %666 = vmatprep.subr.mxu0 0.0
    %667 = vmatpush2.msra.mxu0 0.0
    %668 = vmatprep.subr.mxu0 0.0
    %669 = vmatpush2.msra.mxu0 0.0
    %670 = vmatprep.subr.mxu0 0.0
    %671 = vmatpush2.msra.mxu0 0.0
    %672 = vmatprep.subr.mxu0 0.0
    %673 = vmatpush2.msra.mxu0 0.0
    %674 = vmatprep.subr.mxu0 0.0
    %675 = vmatpush2.msra.mxu0 0.0
    %676 = vmatprep.subr.mxu0 0.0
    %677 = vmatpush2.msra.mxu0 0.0
    %678 = vmatprep.subr.mxu0 0.0
    %679 = vmatpush2.msra.mxu0 0.0
    %680 = vmatprep.subr.mxu0 0.0
    %681 = vmatpush2.msra.mxu0 0.0
    %682 = vmatprep.subr.mxu0 0.0
    %683 = vmatpush2.msra.mxu0 0.0
    %684 = vmatprep.subr.mxu0 0.0
    %685 = vmatpush2.msra.mxu0 0.0
    %686 = vmatprep.mubr.f32.mxu0 0.0
    %687 = vmatmul.mubr.f32.gmra.mxu0 %v620
    %v688 = vpop.f32.mrf.mxu0
    %v689 = vadd.f32 0.0, %v688
    %v690 = vpop.f32.mrf.mxu0
    %691 = vdwg.mxu0
    %692 = vst.msk [vmem:[#allocation2] sm:$0xff] %vm371, %v616
    %693 = vst.msk [vmem:[#allocation2 + $0x8] sm:$0xff] %vm371, %v689
    %694 = vrot.lane.b32.xlu0 %v369, 120
    %v695 = vpop.permute.xlu0 %694
    %696 = vrot.lane.b32.xlu0 %v299, 120
    %v697 = vpop.permute.xlu0 %696
    %v698 = vsel %vm371, %v695, 0
    %v700 = vsel %vm371, %v697, 0
    %702 = vmatprep.subr.mxu0 0.0
    %703 = vmatpush1.xpose.msra.mxu0 0.0
    %704 = vmatprep.subr.mxu0 0.0
    %705 = vmatpush1.xpose.msra.mxu0 0.0
    %706 = vmatprep.subr.mxu0 0.0
    %707 = vmatpush1.xpose.msra.mxu0 0.0
    %708 = vmatprep.subr.mxu0 0.0
    %709 = vmatpush1.xpose.msra.mxu0 0.0
    %710 = vmatprep.subr.mxu0 0.0
    %711 = vmatpush1.xpose.msra.mxu0 0.0
    %712 = vmatprep.subr.mxu0 0.0
    %713 = vmatpush1.xpose.msra.mxu0 0.0
    %714 = vmatprep.subr.mxu0 0.0
    %715 = vmatpush1.xpose.msra.mxu0 0.0
    %716 = vmatprep.subr.mxu0 0.0
    %717 = vmatpush1.xpose.msra.mxu0 0.0
    %718 = vmatprep.subr.mxu0 0.0
    %719 = vmatpush1.xpose.msra.mxu0 0.0
    %720 = vmatprep.subr.mxu0 0.0
    %721 = vmatpush1.xpose.msra.mxu0 0.0
    %722 = vmatprep.subr.mxu0 0.0
    %723 = vmatpush1.xpose.msra.mxu0 0.0
    %724 = vmatprep.subr.mxu0 0.0
    %725 = vmatpush1.xpose.msra.mxu0 0.0
    %726 = vmatprep.subr.mxu0 0.0
    %727 = vmatpush1.xpose.msra.mxu0 0.0
    %728 = vmatprep.subr.mxu0 0.0
    %729 = vmatpush1.xpose.msra.mxu0 0.0
    %730 = vmatprep.subr.mxu0 0.0
    %731 = vmatpush1.xpose.msra.mxu0 0.0
    %732 = vmatprep.subr.mxu0 0.0
    %733 = vmatpush1.xpose.msra.mxu0 %v700
    %734 = vmatprep.subr.mxu0 0.0
    %735 = vmatpush2.xpose.msra.mxu0 0.0
    %736 = vmatprep.subr.mxu0 0.0
    %737 = vmatpush2.xpose.msra.mxu0 0.0
    %738 = vmatprep.subr.mxu0 0.0
    %739 = vmatpush2.xpose.msra.mxu0 0.0
    %740 = vmatprep.subr.mxu0 0.0
    %741 = vmatpush2.xpose.msra.mxu0 0.0
    %742 = vmatprep.subr.mxu0 0.0
    %743 = vmatpush2.xpose.msra.mxu0 0.0
    %744 = vmatprep.subr.mxu0 0.0
    %745 = vmatpush2.xpose.msra.mxu0 0.0
    %746 = vmatprep.subr.mxu0 0.0
    %747 = vmatpush2.xpose.msra.mxu0 0.0
    %748 = vmatprep.subr.mxu0 0.0
    %749 = vmatpush2.xpose.msra.mxu0 0.0
    %750 = vmatprep.subr.mxu0 0.0
    %751 = vmatpush2.xpose.msra.mxu0 0.0
    %752 = vmatprep.subr.mxu0 0.0
    %753 = vmatpush2.xpose.msra.mxu0 0.0
    %754 = vmatprep.subr.mxu0 0.0
    %755 = vmatpush2.xpose.msra.mxu0 0.0
    %756 = vmatprep.subr.mxu0 0.0
    %757 = vmatpush2.xpose.msra.mxu0 0.0
    %758 = vmatprep.subr.mxu0 0.0
    %759 = vmatpush2.xpose.msra.mxu0 0.0
    %760 = vmatprep.subr.mxu0 0.0
    %761 = vmatpush2.xpose.msra.mxu0 0.0
    %762 = vmatprep.subr.mxu0 0.0
    %763 = vmatpush2.xpose.msra.mxu0 0.0
    %764 = vmatprep.subr.mxu0 0.0
    %765 = vmatpush2.xpose.msra.mxu0 0.0
    %766 = vmatprep.mubr.f32.mxu0 0.0
    %767 = vmatmul.mubr.f32.gmra.mxu0 %v698
    %v768 = vpop.f32.mrf.mxu0
    %v769 = vadd.f32 %v165, %v768
    %v770 = vpop.f32.mrf.mxu0
    %771 = vdwg.mxu0
    %772 = vrot.lane.b32.xlu0 %v370, 120
    %v773 = vpop.permute.xlu0 %772
    %774 = vrot.lane.b32.xlu0 %v302, 120
    %v775 = vpop.permute.xlu0 %774
    %v776 = vsel %vm371, %v773, 0
    %v778 = vsel %vm371, %v775, 0
    %780 = vmatprep.subr.mxu0 0.0
    %781 = vmatpush1.xpose.msra.mxu0 0.0
    %782 = vmatprep.subr.mxu0 0.0
    %783 = vmatpush1.xpose.msra.mxu0 0.0
    %784 = vmatprep.subr.mxu0 0.0
    %785 = vmatpush1.xpose.msra.mxu0 0.0
    %786 = vmatprep.subr.mxu0 0.0
    %787 = vmatpush1.xpose.msra.mxu0 0.0
    %788 = vmatprep.subr.mxu0 0.0
    %789 = vmatpush1.xpose.msra.mxu0 0.0
    %790 = vmatprep.subr.mxu0 0.0
    %791 = vmatpush1.xpose.msra.mxu0 0.0
    %792 = vmatprep.subr.mxu0 0.0
    %793 = vmatpush1.xpose.msra.mxu0 0.0
    %794 = vmatprep.subr.mxu0 0.0
    %795 = vmatpush1.xpose.msra.mxu0 0.0
    %796 = vmatprep.subr.mxu0 0.0
    %797 = vmatpush1.xpose.msra.mxu0 0.0
    %798 = vmatprep.subr.mxu0 0.0
    %799 = vmatpush1.xpose.msra.mxu0 0.0
    %800 = vmatprep.subr.mxu0 0.0
    %801 = vmatpush1.xpose.msra.mxu0 0.0
    %802 = vmatprep.subr.mxu0 0.0
    %803 = vmatpush1.xpose.msra.mxu0 0.0
    %804 = vmatprep.subr.mxu0 0.0
    %805 = vmatpush1.xpose.msra.mxu0 0.0
    %806 = vmatprep.subr.mxu0 0.0
    %807 = vmatpush1.xpose.msra.mxu0 0.0
    %808 = vmatprep.subr.mxu0 0.0
    %809 = vmatpush1.xpose.msra.mxu0 0.0
    %810 = vmatprep.subr.mxu0 0.0
    %811 = vmatpush1.xpose.msra.mxu0 %v778
    %812 = vmatprep.subr.mxu0 0.0
    %813 = vmatpush2.xpose.msra.mxu0 0.0
    %814 = vmatprep.subr.mxu0 0.0
    %815 = vmatpush2.xpose.msra.mxu0 0.0
    %816 = vmatprep.subr.mxu0 0.0
    %817 = vmatpush2.xpose.msra.mxu0 0.0
    %818 = vmatprep.subr.mxu0 0.0
    %819 = vmatpush2.xpose.msra.mxu0 0.0
    %820 = vmatprep.subr.mxu0 0.0
    %821 = vmatpush2.xpose.msra.mxu0 0.0
    %822 = vmatprep.subr.mxu0 0.0
    %823 = vmatpush2.xpose.msra.mxu0 0.0
    %824 = vmatprep.subr.mxu0 0.0
    %825 = vmatpush2.xpose.msra.mxu0 0.0
    %826 = vmatprep.subr.mxu0 0.0
    %827 = vmatpush2.xpose.msra.mxu0 0.0
    %828 = vmatprep.subr.mxu0 0.0
    %829 = vmatpush2.xpose.msra.mxu0 0.0
    %830 = vmatprep.subr.mxu0 0.0
    %831 = vmatpush2.xpose.msra.mxu0 0.0
    %832 = vmatprep.subr.mxu0 0.0
    %833 = vmatpush2.xpose.msra.mxu0 0.0
    %834 = vmatprep.subr.mxu0 0.0
    %835 = vmatpush2.xpose.msra.mxu0 0.0
    %836 = vmatprep.subr.mxu0 0.0
    %837 = vmatpush2.xpose.msra.mxu0 0.0
    %838 = vmatprep.subr.mxu0 0.0
    %839 = vmatpush2.xpose.msra.mxu0 0.0
    %840 = vmatprep.subr.mxu0 0.0
    %841 = vmatpush2.xpose.msra.mxu0 0.0
    %842 = vmatprep.subr.mxu0 0.0
    %843 = vmatpush2.xpose.msra.mxu0 0.0
    %844 = vmatprep.mubr.f32.mxu0 0.0
    %845 = vmatmul.mubr.f32.gmra.mxu0 %v776
    %v846 = vpop.f32.mrf.mxu0
    %v847 = vadd.f32 %v169, %v846
    %v848 = vpop.f32.mrf.mxu0
    %849 = vdwg.mxu0
    %v850 = vsel %vm371, %v769, -inf
    %851 = vmax.xlane.f32.xlu0 %v850
    %v852 = vpop.xlane.xlu0 %851
    %v853 = vsel %vm371, %v847, -inf
    %854 = vmax.xlane.f32.xlu0 %v853
    %v855 = vpop.xlane.xlu0 %854
    %v856 = vsub.f32 %v769, %v852
    %v857 = vsub.f32 %v847, %v855
    %v858 = vmul.f32 %v856, 1.442695
    %v859 = vpow.pop %v858
    %v860 = vmul.f32 %v857, 1.442695
    %v861 = vpow.pop %v860
    %v862 = vsel %vm371, %v859, 0.0
    %863 = vadd.xlane.f32.xlu0 %v862
    %v864 = vpop.xlane.xlu0 %863
    %v865 = vsel %vm371, %v861, 0.0
    %866 = vadd.xlane.f32.xlu0 %v865
    %v867 = vpop.xlane.xlu0 %866
    %v868 = vrcp.pop %v864
    %v869 = vrcp.pop %v867
    %v870 = vmul.f32 %v859, %v868
    %v871 = vmul.f32 %v861, %v869
    %873 = vrot.lane.b32.xlu0 %v363, 120
    %v874 = vpop.permute.xlu0 %873
    %v877 = vsel %vm371, %v870, 0
    %879 = vmatprep.subr.mxu0 0.0
    %880 = vmatpush1.msra.mxu0 0.0
    %881 = vmatprep.subr.mxu0 0.0
    %882 = vmatpush1.msra.mxu0 0.0
    %883 = vmatprep.subr.mxu0 0.0
    %884 = vmatpush1.msra.mxu0 0.0
    %885 = vmatprep.subr.mxu0 0.0
    %886 = vmatpush1.msra.mxu0 0.0
    %887 = vmatprep.subr.mxu0 0.0
    %888 = vmatpush1.msra.mxu0 0.0
    %889 = vmatprep.subr.mxu0 0.0
    %890 = vmatpush1.msra.mxu0 0.0
    %891 = vmatprep.subr.mxu0 0.0
    %892 = vmatpush1.msra.mxu0 0.0
    %893 = vmatprep.subr.mxu0 0.0
    %894 = vmatpush1.msra.mxu0 0.0
    %895 = vmatprep.subr.mxu0 0.0
    %896 = vmatpush1.msra.mxu0 0.0
    %897 = vmatprep.subr.mxu0 0.0
    %898 = vmatpush1.msra.mxu0 0.0
    %899 = vmatprep.subr.mxu0 0.0
    %900 = vmatpush1.msra.mxu0 0.0
    %901 = vmatprep.subr.mxu0 0.0
    %902 = vmatpush1.msra.mxu0 0.0
    %903 = vmatprep.subr.mxu0 0.0
    %904 = vmatpush1.msra.mxu0 0.0
    %905 = vmatprep.subr.mxu0 0.0
    %906 = vmatpush1.msra.mxu0 0.0
    %907 = vmatprep.subr.mxu0 0.0
    %908 = vmatpush1.msra.mxu0 0.0
    %909 = vmatprep.subr.mxu0 0.0
    %910 = vmatpush1.msra.mxu0 %v874
    %911 = vmatprep.subr.mxu0 0.0
    %912 = vmatpush2.msra.mxu0 0.0
    %913 = vmatprep.subr.mxu0 0.0
    %914 = vmatpush2.msra.mxu0 0.0
    %915 = vmatprep.subr.mxu0 0.0
    %916 = vmatpush2.msra.mxu0 0.0
    %917 = vmatprep.subr.mxu0 0.0
    %918 = vmatpush2.msra.mxu0 0.0
    %919 = vmatprep.subr.mxu0 0.0
    %920 = vmatpush2.msra.mxu0 0.0
    %921 = vmatprep.subr.mxu0 0.0
    %922 = vmatpush2.msra.mxu0 0.0
    %923 = vmatprep.subr.mxu0 0.0
    %924 = vmatpush2.msra.mxu0 0.0
    %925 = vmatprep.subr.mxu0 0.0
    %926 = vmatpush2.msra.mxu0 0.0
    %927 = vmatprep.subr.mxu0 0.0
    %928 = vmatpush2.msra.mxu0 0.0
    %929 = vmatprep.subr.mxu0 0.0
    %930 = vmatpush2.msra.mxu0 0.0
    %931 = vmatprep.subr.mxu0 0.0
    %932 = vmatpush2.msra.mxu0 0.0
    %933 = vmatprep.subr.mxu0 0.0
    %934 = vmatpush2.msra.mxu0 0.0
    %935 = vmatprep.subr.mxu0 0.0
    %936 = vmatpush2.msra.mxu0 0.0
    %937 = vmatprep.subr.mxu0 0.0
    %938 = vmatpush2.msra.mxu0 0.0
    %939 = vmatprep.subr.mxu0 0.0
    %940 = vmatpush2.msra.mxu0 0.0
    %941 = vmatprep.subr.mxu0 0.0
    %942 = vmatpush2.msra.mxu0 0.0
    %943 = vmatprep.mubr.f32.mxu0 0.0
    %944 = vmatmul.mubr.f32.gmra.mxu0 %v877
    %v945 = vpop.f32.mrf.mxu0
    %v946 = vadd.f32 0.0, %v945
    %v947 = vpop.f32.mrf.mxu0
    %948 = vdwg.mxu0
    %950 = vrot.lane.b32.xlu0 %v366, 120
    %v951 = vpop.permute.xlu0 %950
    %v954 = vsel %vm371, %v871, 0
    %956 = vmatprep.subr.mxu0 0.0
    %957 = vmatpush1.msra.mxu0 0.0
    %958 = vmatprep.subr.mxu0 0.0
    %959 = vmatpush1.msra.mxu0 0.0
    %960 = vmatprep.subr.mxu0 0.0
    %961 = vmatpush1.msra.mxu0 0.0
    %962 = vmatprep.subr.mxu0 0.0
    %963 = vmatpush1.msra.mxu0 0.0
    %964 = vmatprep.subr.mxu0 0.0
    %965 = vmatpush1.msra.mxu0 0.0
    %966 = vmatprep.subr.mxu0 0.0
    %967 = vmatpush1.msra.mxu0 0.0
    %968 = vmatprep.subr.mxu0 0.0
    %969 = vmatpush1.msra.mxu0 0.0
    %970 = vmatprep.subr.mxu0 0.0
    %971 = vmatpush1.msra.mxu0 0.0
    %972 = vmatprep.subr.mxu0 0.0
    %973 = vmatpush1.msra.mxu0 0.0
    %974 = vmatprep.subr.mxu0 0.0
    %975 = vmatpush1.msra.mxu0 0.0
    %976 = vmatprep.subr.mxu0 0.0
    %977 = vmatpush1.msra.mxu0 0.0
    %978 = vmatprep.subr.mxu0 0.0
    %979 = vmatpush1.msra.mxu0 0.0
    %980 = vmatprep.subr.mxu0 0.0
    %981 = vmatpush1.msra.mxu0 0.0
    %982 = vmatprep.subr.mxu0 0.0
    %983 = vmatpush1.msra.mxu0 0.0
    %984 = vmatprep.subr.mxu0 0.0
    %985 = vmatpush1.msra.mxu0 0.0
    %986 = vmatprep.subr.mxu0 0.0
    %987 = vmatpush1.msra.mxu0 %v951
    %988 = vmatprep.subr.mxu0 0.0
    %989 = vmatpush2.msra.mxu0 0.0
    %990 = vmatprep.subr.mxu0 0.0
    %991 = vmatpush2.msra.mxu0 0.0
    %992 = vmatprep.subr.mxu0 0.0
    %993 = vmatpush2.msra.mxu0 0.0
    %994 = vmatprep.subr.mxu0 0.0
    %995 = vmatpush2.msra.mxu0 0.0
    %996 = vmatprep.subr.mxu0 0.0
    %997 = vmatpush2.msra.mxu0 0.0
    %998 = vmatprep.subr.mxu0 0.0
    %999 = vmatpush2.msra.mxu0 0.0
    %1000 = vmatprep.subr.mxu0 0.0
    %1001 = vmatpush2.msra.mxu0 0.0
    %1002 = vmatprep.subr.mxu0 0.0
    %1003 = vmatpush2.msra.mxu0 0.0
    %1004 = vmatprep.subr.mxu0 0.0
    %1005 = vmatpush2.msra.mxu0 0.0
    %1006 = vmatprep.subr.mxu0 0.0
    %1007 = vmatpush2.msra.mxu0 0.0
    %1008 = vmatprep.subr.mxu0 0.0
    %1009 = vmatpush2.msra.mxu0 0.0
    %1010 = vmatprep.subr.mxu0 0.0
    %1011 = vmatpush2.msra.mxu0 0.0
    %1012 = vmatprep.subr.mxu0 0.0
    %1013 = vmatpush2.msra.mxu0 0.0
    %1014 = vmatprep.subr.mxu0 0.0
    %1015 = vmatpush2.msra.mxu0 0.0
    %1016 = vmatprep.subr.mxu0 0.0
    %1017 = vmatpush2.msra.mxu0 0.0
    %1018 = vmatprep.subr.mxu0 0.0
    %1019 = vmatpush2.msra.mxu0 0.0
    %1020 = vmatprep.mubr.f32.mxu0 0.0
    %1021 = vmatmul.mubr.f32.gmra.mxu0 %v954
    %v1022 = vpop.f32.mrf.mxu0
    %v1023 = vadd.f32 0.0, %v1022
    %v1024 = vpop.f32.mrf.mxu0
    %1025 = vdwg.mxu0
    %1028 = vrot.lane.b32.xlu0 %v946, 8
    %v1029 = vpop.permute.xlu0 %1028
    %1030 = vrot.lane.b32.xlu0 %v1023, 8
    %v1031 = vpop.permute.xlu0 %1030
    %vm1034 = vcmask 130112
    %1035 = vst.msk [vmem:[#allocation2] sm:$0xff] %vm1034, %v1029
    %1036 = vst.msk [vmem:[#allocation2 + $0x8] sm:$0xff] %vm1034, %v1031
    %1037 = vrot.lane.b32.xlu0 %v369, 112
    %v1038 = vpop.permute.xlu0 %1037
    %1039 = vrot.lane.b32.xlu0 %v299, 112
    %v1040 = vpop.permute.xlu0 %1039
    %v1041 = vsel %vm371, %v1038, 0
    %v1043 = vsel %vm371, %v1040, 0
    %1045 = vmatprep.subr.mxu0 0.0
    %1046 = vmatpush1.xpose.msra.mxu0 0.0
    %1047 = vmatprep.subr.mxu0 0.0
    %1048 = vmatpush1.xpose.msra.mxu0 0.0
    %1049 = vmatprep.subr.mxu0 0.0
    %1050 = vmatpush1.xpose.msra.mxu0 0.0
    %1051 = vmatprep.subr.mxu0 0.0
    %1052 = vmatpush1.xpose.msra.mxu0 0.0
    %1053 = vmatprep.subr.mxu0 0.0
    %1054 = vmatpush1.xpose.msra.mxu0 0.0
    %1055 = vmatprep.subr.mxu0 0.0
    %1056 = vmatpush1.xpose.msra.mxu0 0.0
    %1057 = vmatprep.subr.mxu0 0.0
    %1058 = vmatpush1.xpose.msra.mxu0 0.0
    %1059 = vmatprep.subr.mxu0 0.0
    %1060 = vmatpush1.xpose.msra.mxu0 0.0
    %1061 = vmatprep.subr.mxu0 0.0
    %1062 = vmatpush1.xpose.msra.mxu0 0.0
    %1063 = vmatprep.subr.mxu0 0.0
    %1064 = vmatpush1.xpose.msra.mxu0 0.0
    %1065 = vmatprep.subr.mxu0 0.0
    %1066 = vmatpush1.xpose.msra.mxu0 0.0
    %1067 = vmatprep.subr.mxu0 0.0
    %1068 = vmatpush1.xpose.msra.mxu0 0.0
    %1069 = vmatprep.subr.mxu0 0.0
    %1070 = vmatpush1.xpose.msra.mxu0 0.0
    %1071 = vmatprep.subr.mxu0 0.0
    %1072 = vmatpush1.xpose.msra.mxu0 0.0
    %1073 = vmatprep.subr.mxu0 0.0
    %1074 = vmatpush1.xpose.msra.mxu0 0.0
    %1075 = vmatprep.subr.mxu0 0.0
    %1076 = vmatpush1.xpose.msra.mxu0 %v1043
    %1077 = vmatprep.subr.mxu0 0.0
    %1078 = vmatpush2.xpose.msra.mxu0 0.0
    %1079 = vmatprep.subr.mxu0 0.0
    %1080 = vmatpush2.xpose.msra.mxu0 0.0
    %1081 = vmatprep.subr.mxu0 0.0
    %1082 = vmatpush2.xpose.msra.mxu0 0.0
    %1083 = vmatprep.subr.mxu0 0.0
    %1084 = vmatpush2.xpose.msra.mxu0 0.0
    %1085 = vmatprep.subr.mxu0 0.0
    %1086 = vmatpush2.xpose.msra.mxu0 0.0
    %1087 = vmatprep.subr.mxu0 0.0
    %1088 = vmatpush2.xpose.msra.mxu0 0.0
    %1089 = vmatprep.subr.mxu0 0.0
    %1090 = vmatpush2.xpose.msra.mxu0 0.0
    %1091 = vmatprep.subr.mxu0 0.0
    %1092 = vmatpush2.xpose.msra.mxu0 0.0
    %1093 = vmatprep.subr.mxu0 0.0
    %1094 = vmatpush2.xpose.msra.mxu0 0.0
    %1095 = vmatprep.subr.mxu0 0.0
    %1096 = vmatpush2.xpose.msra.mxu0 0.0
    %1097 = vmatprep.subr.mxu0 0.0
    %1098 = vmatpush2.xpose.msra.mxu0 0.0
    %1099 = vmatprep.subr.mxu0 0.0
    %1100 = vmatpush2.xpose.msra.mxu0 0.0
    %1101 = vmatprep.subr.mxu0 0.0
    %1102 = vmatpush2.xpose.msra.mxu0 0.0
    %1103 = vmatprep.subr.mxu0 0.0
    %1104 = vmatpush2.xpose.msra.mxu0 0.0
    %1105 = vmatprep.subr.mxu0 0.0
    %1106 = vmatpush2.xpose.msra.mxu0 0.0
    %1107 = vmatprep.subr.mxu0 0.0
    %1108 = vmatpush2.xpose.msra.mxu0 0.0
    %1109 = vmatprep.mubr.f32.mxu0 0.0
    %1110 = vmatmul.mubr.f32.gmra.mxu0 %v1041
    %v1111 = vpop.f32.mrf.mxu0
    %v1112 = vadd.f32 %v165, %v1111
    %v1113 = vpop.f32.mrf.mxu0
    %1114 = vdwg.mxu0
    %1115 = vrot.lane.b32.xlu0 %v370, 112
    %v1116 = vpop.permute.xlu0 %1115
    %1117 = vrot.lane.b32.xlu0 %v302, 112
    %v1118 = vpop.permute.xlu0 %1117
    %v1119 = vsel %vm371, %v1116, 0
    %v1121 = vsel %vm371, %v1118, 0
    %1123 = vmatprep.subr.mxu0 0.0
    %1124 = vmatpush1.xpose.msra.mxu0 0.0
    %1125 = vmatprep.subr.mxu0 0.0
    %1126 = vmatpush1.xpose.msra.mxu0 0.0
    %1127 = vmatprep.subr.mxu0 0.0
    %1128 = vmatpush1.xpose.msra.mxu0 0.0
    %1129 = vmatprep.subr.mxu0 0.0
    %1130 = vmatpush1.xpose.msra.mxu0 0.0
    %1131 = vmatprep.subr.mxu0 0.0
    %1132 = vmatpush1.xpose.msra.mxu0 0.0
    %1133 = vmatprep.subr.mxu0 0.0
    %1134 = vmatpush1.xpose.msra.mxu0 0.0
    %1135 = vmatprep.subr.mxu0 0.0
    %1136 = vmatpush1.xpose.msra.mxu0 0.0
    %1137 = vmatprep.subr.mxu0 0.0
    %1138 = vmatpush1.xpose.msra.mxu0 0.0
    %1139 = vmatprep.subr.mxu0 0.0
    %1140 = vmatpush1.xpose.msra.mxu0 0.0
    %1141 = vmatprep.subr.mxu0 0.0
    %1142 = vmatpush1.xpose.msra.mxu0 0.0
    %1143 = vmatprep.subr.mxu0 0.0
    %1144 = vmatpush1.xpose.msra.mxu0 0.0
    %1145 = vmatprep.subr.mxu0 0.0
    %1146 = vmatpush1.xpose.msra.mxu0 0.0
    %1147 = vmatprep.subr.mxu0 0.0
    %1148 = vmatpush1.xpose.msra.mxu0 0.0
    %1149 = vmatprep.subr.mxu0 0.0
    %1150 = vmatpush1.xpose.msra.mxu0 0.0
    %1151 = vmatprep.subr.mxu0 0.0
    %1152 = vmatpush1.xpose.msra.mxu0 0.0
    %1153 = vmatprep.subr.mxu0 0.0
    %1154 = vmatpush1.xpose.msra.mxu0 %v1121
    %1155 = vmatprep.subr.mxu0 0.0
    %1156 = vmatpush2.xpose.msra.mxu0 0.0
    %1157 = vmatprep.subr.mxu0 0.0
    %1158 = vmatpush2.xpose.msra.mxu0 0.0
    %1159 = vmatprep.subr.mxu0 0.0
    %1160 = vmatpush2.xpose.msra.mxu0 0.0
    %1161 = vmatprep.subr.mxu0 0.0
    %1162 = vmatpush2.xpose.msra.mxu0 0.0
    %1163 = vmatprep.subr.mxu0 0.0
    %1164 = vmatpush2.xpose.msra.mxu0 0.0
    %1165 = vmatprep.subr.mxu0 0.0
    %1166 = vmatpush2.xpose.msra.mxu0 0.0
    %1167 = vmatprep.subr.mxu0 0.0
    %1168 = vmatpush2.xpose.msra.mxu0 0.0
    %1169 = vmatprep.subr.mxu0 0.0
    %1170 = vmatpush2.xpose.msra.mxu0 0.0
    %1171 = vmatprep.subr.mxu0 0.0
    %1172 = vmatpush2.xpose.msra.mxu0 0.0
    %1173 = vmatprep.subr.mxu0 0.0
    %1174 = vmatpush2.xpose.msra.mxu0 0.0
    %1175 = vmatprep.subr.mxu0 0.0
    %1176 = vmatpush2.xpose.msra.mxu0 0.0
    %1177 = vmatprep.subr.mxu0 0.0
    %1178 = vmatpush2.xpose.msra.mxu0 0.0
    %1179 = vmatprep.subr.mxu0 0.0
    %1180 = vmatpush2.xpose.msra.mxu0 0.0
    %1181 = vmatprep.subr.mxu0 0.0
    %1182 = vmatpush2.xpose.msra.mxu0 0.0
    %1183 = vmatprep.subr.mxu0 0.0
    %1184 = vmatpush2.xpose.msra.mxu0 0.0
    %1185 = vmatprep.subr.mxu0 0.0
    %1186 = vmatpush2.xpose.msra.mxu0 0.0
    %1187 = vmatprep.mubr.f32.mxu0 0.0
    %1188 = vmatmul.mubr.f32.gmra.mxu0 %v1119
    %v1189 = vpop.f32.mrf.mxu0
    %v1190 = vadd.f32 %v169, %v1189
    %v1191 = vpop.f32.mrf.mxu0
    %1192 = vdwg.mxu0
    %v1193 = vsel %vm371, %v1112, -inf
    %1194 = vmax.xlane.f32.xlu0 %v1193
    %v1195 = vpop.xlane.xlu0 %1194
    %v1196 = vsel %vm371, %v1190, -inf
    %1197 = vmax.xlane.f32.xlu0 %v1196
    %v1198 = vpop.xlane.xlu0 %1197
    %v1199 = vsub.f32 %v1112, %v1195
    %v1200 = vsub.f32 %v1190, %v1198
    %v1201 = vmul.f32 %v1199, 1.442695
    %v1202 = vpow.pop %v1201
    %v1203 = vmul.f32 %v1200, 1.442695
    %v1204 = vpow.pop %v1203
    %v1205 = vsel %vm371, %v1202, 0.0
    %1206 = vadd.xlane.f32.xlu0 %v1205
    %v1207 = vpop.xlane.xlu0 %1206
    %v1208 = vsel %vm371, %v1204, 0.0
    %1209 = vadd.xlane.f32.xlu0 %v1208
    %v1210 = vpop.xlane.xlu0 %1209
    %v1211 = vrcp.pop %v1207
    %v1212 = vrcp.pop %v1210
    %v1213 = vmul.f32 %v1202, %v1211
    %v1214 = vmul.f32 %v1204, %v1212
    %1215 = vrot.lane.b32.xlu0 %v363, 112
    %v1216 = vpop.permute.xlu0 %1215
    %v1219 = vsel %vm371, %v1213, 0
    %1221 = vmatprep.subr.mxu0 0.0
    %1222 = vmatpush1.msra.mxu0 0.0
    %1223 = vmatprep.subr.mxu0 0.0
    %1224 = vmatpush1.msra.mxu0 0.0
    %1225 = vmatprep.subr.mxu0 0.0
    %1226 = vmatpush1.msra.mxu0 0.0
    %1227 = vmatprep.subr.mxu0 0.0
    %1228 = vmatpush1.msra.mxu0 0.0
    %1229 = vmatprep.subr.mxu0 0.0
    %1230 = vmatpush1.msra.mxu0 0.0
    %1231 = vmatprep.subr.mxu0 0.0
    %1232 = vmatpush1.msra.mxu0 0.0
    %1233 = vmatprep.subr.mxu0 0.0
    %1234 = vmatpush1.msra.mxu0 0.0
    %1235 = vmatprep.subr.mxu0 0.0
    %1236 = vmatpush1.msra.mxu0 0.0
    %1237 = vmatprep.subr.mxu0 0.0
    %1238 = vmatpush1.msra.mxu0 0.0
    %1239 = vmatprep.subr.mxu0 0.0
    %1240 = vmatpush1.msra.mxu0 0.0
    %1241 = vmatprep.subr.mxu0 0.0
    %1242 = vmatpush1.msra.mxu0 0.0
    %1243 = vmatprep.subr.mxu0 0.0
    %1244 = vmatpush1.msra.mxu0 0.0
    %1245 = vmatprep.subr.mxu0 0.0
    %1246 = vmatpush1.msra.mxu0 0.0
    %1247 = vmatprep.subr.mxu0 0.0
    %1248 = vmatpush1.msra.mxu0 0.0
    %1249 = vmatprep.subr.mxu0 0.0
    %1250 = vmatpush1.msra.mxu0 0.0
    %1251 = vmatprep.subr.mxu0 0.0
    %1252 = vmatpush1.msra.mxu0 %v1216
    %1253 = vmatprep.subr.mxu0 0.0
    %1254 = vmatpush2.msra.mxu0 0.0
    %1255 = vmatprep.subr.mxu0 0.0
    %1256 = vmatpush2.msra.mxu0 0.0
    %1257 = vmatprep.subr.mxu0 0.0
    %1258 = vmatpush2.msra.mxu0 0.0
    %1259 = vmatprep.subr.mxu0 0.0
    %1260 = vmatpush2.msra.mxu0 0.0
    %1261 = vmatprep.subr.mxu0 0.0
    %1262 = vmatpush2.msra.mxu0 0.0
    %1263 = vmatprep.subr.mxu0 0.0
    %1264 = vmatpush2.msra.mxu0 0.0
    %1265 = vmatprep.subr.mxu0 0.0
    %1266 = vmatpush2.msra.mxu0 0.0
    %1267 = vmatprep.subr.mxu0 0.0
    %1268 = vmatpush2.msra.mxu0 0.0
    %1269 = vmatprep.subr.mxu0 0.0
    %1270 = vmatpush2.msra.mxu0 0.0
    %1271 = vmatprep.subr.mxu0 0.0
    %1272 = vmatpush2.msra.mxu0 0.0
    %1273 = vmatprep.subr.mxu0 0.0
    %1274 = vmatpush2.msra.mxu0 0.0
    %1275 = vmatprep.subr.mxu0 0.0
    %1276 = vmatpush2.msra.mxu0 0.0
    %1277 = vmatprep.subr.mxu0 0.0
    %1278 = vmatpush2.msra.mxu0 0.0
    %1279 = vmatprep.subr.mxu0 0.0
    %1280 = vmatpush2.msra.mxu0 0.0
    %1281 = vmatprep.subr.mxu0 0.0
    %1282 = vmatpush2.msra.mxu0 0.0
    %1283 = vmatprep.subr.mxu0 0.0
    %1284 = vmatpush2.msra.mxu0 0.0
    %1285 = vmatprep.mubr.f32.mxu0 0.0
    %1286 = vmatmul.mubr.f32.gmra.mxu0 %v1219
    %v1287 = vpop.f32.mrf.mxu0
    %v1288 = vadd.f32 0.0, %v1287
    %v1289 = vpop.f32.mrf.mxu0
    %1290 = vdwg.mxu0
    %1291 = vrot.lane.b32.xlu0 %v366, 112
    %v1292 = vpop.permute.xlu0 %1291
    %v1295 = vsel %vm371, %v1214, 0
    %1297 = vmatprep.subr.mxu0 0.0
    %1298 = vmatpush1.msra.mxu0 0.0
    %1299 = vmatprep.subr.mxu0 0.0
    %1300 = vmatpush1.msra.mxu0 0.0
    %1301 = vmatprep.subr.mxu0 0.0
    %1302 = vmatpush1.msra.mxu0 0.0
    %1303 = vmatprep.subr.mxu0 0.0
    %1304 = vmatpush1.msra.mxu0 0.0
    %1305 = vmatprep.subr.mxu0 0.0
    %1306 = vmatpush1.msra.mxu0 0.0
    %1307 = vmatprep.subr.mxu0 0.0
    %1308 = vmatpush1.msra.mxu0 0.0
    %1309 = vmatprep.subr.mxu0 0.0
    %1310 = vmatpush1.msra.mxu0 0.0
    %1311 = vmatprep.subr.mxu0 0.0
    %1312 = vmatpush1.msra.mxu0 0.0
    %1313 = vmatprep.subr.mxu0 0.0
    %1314 = vmatpush1.msra.mxu0 0.0
    %1315 = vmatprep.subr.mxu0 0.0
    %1316 = vmatpush1.msra.mxu0 0.0
    %1317 = vmatprep.subr.mxu0 0.0
    %1318 = vmatpush1.msra.mxu0 0.0
    %1319 = vmatprep.subr.mxu0 0.0
    %1320 = vmatpush1.msra.mxu0 0.0
    %1321 = vmatprep.subr.mxu0 0.0
    %1322 = vmatpush1.msra.mxu0 0.0
    %1323 = vmatprep.subr.mxu0 0.0
    %1324 = vmatpush1.msra.mxu0 0.0
    %1325 = vmatprep.subr.mxu0 0.0
    %1326 = vmatpush1.msra.mxu0 0.0
    %1327 = vmatprep.subr.mxu0 0.0
    %1328 = vmatpush1.msra.mxu0 %v1292
    %1329 = vmatprep.subr.mxu0 0.0
    %1330 = vmatpush2.msra.mxu0 0.0
    %1331 = vmatprep.subr.mxu0 0.0
    %1332 = vmatpush2.msra.mxu0 0.0
    %1333 = vmatprep.subr.mxu0 0.0
    %1334 = vmatpush2.msra.mxu0 0.0
    %1335 = vmatprep.subr.mxu0 0.0
    %1336 = vmatpush2.msra.mxu0 0.0
    %1337 = vmatprep.subr.mxu0 0.0
    %1338 = vmatpush2.msra.mxu0 0.0
    %1339 = vmatprep.subr.mxu0 0.0
    %1340 = vmatpush2.msra.mxu0 0.0
    %1341 = vmatprep.subr.mxu0 0.0
    %1342 = vmatpush2.msra.mxu0 0.0
    %1343 = vmatprep.subr.mxu0 0.0
    %1344 = vmatpush2.msra.mxu0 0.0
    %1345 = vmatprep.subr.mxu0 0.0
    %1346 = vmatpush2.msra.mxu0 0.0
    %1347 = vmatprep.subr.mxu0 0.0
    %1348 = vmatpush2.msra.mxu0 0.0
    %1349 = vmatprep.subr.mxu0 0.0
    %1350 = vmatpush2.msra.mxu0 0.0
    %1351 = vmatprep.subr.mxu0 0.0
    %1352 = vmatpush2.msra.mxu0 0.0
    %1353 = vmatprep.subr.mxu0 0.0
    %1354 = vmatpush2.msra.mxu0 0.0
    %1355 = vmatprep.subr.mxu0 0.0
    %1356 = vmatpush2.msra.mxu0 0.0
    %1357 = vmatprep.subr.mxu0 0.0
    %1358 = vmatpush2.msra.mxu0 0.0
    %1359 = vmatprep.subr.mxu0 0.0
    %1360 = vmatpush2.msra.mxu0 0.0
    %1361 = vmatprep.mubr.f32.mxu0 0.0
    %1362 = vmatmul.mubr.f32.gmra.mxu0 %v1295
    %v1363 = vpop.f32.mrf.mxu0
    %v1364 = vadd.f32 0.0, %v1363
    %v1365 = vpop.f32.mrf.mxu0
    %1366 = vdwg.mxu0
    %1369 = vrot.lane.b32.xlu0 %v1288, 16
    %v1370 = vpop.permute.xlu0 %1369
    %1371 = vrot.lane.b32.xlu0 %v1364, 16
    %v1372 = vpop.permute.xlu0 %1371
    %vm1375 = vcmask 195712
    %1376 = vst.msk [vmem:[#allocation2] sm:$0xff] %vm1375, %v1370
    %1377 = vst.msk [vmem:[#allocation2 + $0x8] sm:$0xff] %vm1375, %v1372
    %1378 = vrot.lane.b32.xlu0 %v369, 104
    %v1379 = vpop.permute.xlu0 %1378
    %1380 = vrot.lane.b32.xlu0 %v299, 104
    %v1381 = vpop.permute.xlu0 %1380
    %v1382 = vsel %vm371, %v1379, 0
    %v1384 = vsel %vm371, %v1381, 0
    %1386 = vmatprep.subr.mxu0 0.0
    %1387 = vmatpush1.xpose.msra.mxu0 0.0
    %1388 = vmatprep.subr.mxu0 0.0
    %1389 = vmatpush1.xpose.msra.mxu0 0.0
    %1390 = vmatprep.subr.mxu0 0.0
    %1391 = vmatpush1.xpose.msra.mxu0 0.0
    %1392 = vmatprep.subr.mxu0 0.0
    %1393 = vmatpush1.xpose.msra.mxu0 0.0
    %1394 = vmatprep.subr.mxu0 0.0
    %1395 = vmatpush1.xpose.msra.mxu0 0.0
    %1396 = vmatprep.subr.mxu0 0.0
    %1397 = vmatpush1.xpose.msra.mxu0 0.0
    %1398 = vmatprep.subr.mxu0 0.0
    %1399 = vmatpush1.xpose.msra.mxu0 0.0
    %1400 = vmatprep.subr.mxu0 0.0
    %1401 = vmatpush1.xpose.msra.mxu0 0.0
    %1402 = vmatprep.subr.mxu0 0.0
    %1403 = vmatpush1.xpose.msra.mxu0 0.0
    %1404 = vmatprep.subr.mxu0 0.0
    %1405 = vmatpush1.xpose.msra.mxu0 0.0
    %1406 = vmatprep.subr.mxu0 0.0
    %1407 = vmatpush1.xpose.msra.mxu0 0.0
    %1408 = vmatprep.subr.mxu0 0.0
    %1409 = vmatpush1.xpose.msra.mxu0 0.0
    %1410 = vmatprep.subr.mxu0 0.0
    %1411 = vmatpush1.xpose.msra.mxu0 0.0
    %1412 = vmatprep.subr.mxu0 0.0
    %1413 = vmatpush1.xpose.msra.mxu0 0.0
    %1414 = vmatprep.subr.mxu0 0.0
    %1415 = vmatpush1.xpose.msra.mxu0 0.0
    %1416 = vmatprep.subr.mxu0 0.0
    %1417 = vmatpush1.xpose.msra.mxu0 %v1384
    %1418 = vmatprep.subr.mxu0 0.0
    %1419 = vmatpush2.xpose.msra.mxu0 0.0
    %1420 = vmatprep.subr.mxu0 0.0
    %1421 = vmatpush2.xpose.msra.mxu0 0.0
    %1422 = vmatprep.subr.mxu0 0.0
    %1423 = vmatpush2.xpose.msra.mxu0 0.0
    %1424 = vmatprep.subr.mxu0 0.0
    %1425 = vmatpush2.xpose.msra.mxu0 0.0
    %1426 = vmatprep.subr.mxu0 0.0
    %1427 = vmatpush2.xpose.msra.mxu0 0.0
    %1428 = vmatprep.subr.mxu0 0.0
    %1429 = vmatpush2.xpose.msra.mxu0 0.0
    %1430 = vmatprep.subr.mxu0 0.0
    %1431 = vmatpush2.xpose.msra.mxu0 0.0
    %1432 = vmatprep.subr.mxu0 0.0
    %1433 = vmatpush2.xpose.msra.mxu0 0.0
    %1434 = vmatprep.subr.mxu0 0.0
    %1435 = vmatpush2.xpose.msra.mxu0 0.0
    %1436 = vmatprep.subr.mxu0 0.0
    %1437 = vmatpush2.xpose.msra.mxu0 0.0
    %1438 = vmatprep.subr.mxu0 0.0
    %1439 = vmatpush2.xpose.msra.mxu0 0.0
    %1440 = vmatprep.subr.mxu0 0.0
    %1441 = vmatpush2.xpose.msra.mxu0 0.0
    %1442 = vmatprep.subr.mxu0 0.0
    %1443 = vmatpush2.xpose.msra.mxu0 0.0
    %1444 = vmatprep.subr.mxu0 0.0
    %1445 = vmatpush2.xpose.msra.mxu0 0.0
    %1446 = vmatprep.subr.mxu0 0.0
    %1447 = vmatpush2.xpose.msra.mxu0 0.0
    %1448 = vmatprep.subr.mxu0 0.0
    %1449 = vmatpush2.xpose.msra.mxu0 0.0
    %1450 = vmatprep.mubr.f32.mxu0 0.0
    %1451 = vmatmul.mubr.f32.gmra.mxu0 %v1382
    %v1452 = vpop.f32.mrf.mxu0
    %v1453 = vadd.f32 %v165, %v1452
    %v1454 = vpop.f32.mrf.mxu0
    %1455 = vdwg.mxu0
    %1456 = vrot.lane.b32.xlu0 %v370, 104
    %v1457 = vpop.permute.xlu0 %1456
    %1458 = vrot.lane.b32.xlu0 %v302, 104
    %v1459 = vpop.permute.xlu0 %1458
    %v1460 = vsel %vm371, %v1457, 0
    %v1462 = vsel %vm371, %v1459, 0
    %1464 = vmatprep.subr.mxu0 0.0
    %1465 = vmatpush1.xpose.msra.mxu0 0.0
    %1466 = vmatprep.subr.mxu0 0.0
    %1467 = vmatpush1.xpose.msra.mxu0 0.0
    %1468 = vmatprep.subr.mxu0 0.0
    %1469 = vmatpush1.xpose.msra.mxu0 0.0
    %1470 = vmatprep.subr.mxu0 0.0
    %1471 = vmatpush1.xpose.msra.mxu0 0.0
    %1472 = vmatprep.subr.mxu0 0.0
    %1473 = vmatpush1.xpose.msra.mxu0 0.0
    %1474 = vmatprep.subr.mxu0 0.0
    %1475 = vmatpush1.xpose.msra.mxu0 0.0
    %1476 = vmatprep.subr.mxu0 0.0
    %1477 = vmatpush1.xpose.msra.mxu0 0.0
    %1478 = vmatprep.subr.mxu0 0.0
    %1479 = vmatpush1.xpose.msra.mxu0 0.0
    %1480 = vmatprep.subr.mxu0 0.0
    %1481 = vmatpush1.xpose.msra.mxu0 0.0
    %1482 = vmatprep.subr.mxu0 0.0
    %1483 = vmatpush1.xpose.msra.mxu0 0.0
    %1484 = vmatprep.subr.mxu0 0.0
    %1485 = vmatpush1.xpose.msra.mxu0 0.0
    %1486 = vmatprep.subr.mxu0 0.0
    %1487 = vmatpush1.xpose.msra.mxu0 0.0
    %1488 = vmatprep.subr.mxu0 0.0
    %1489 = vmatpush1.xpose.msra.mxu0 0.0
    %1490 = vmatprep.subr.mxu0 0.0
    %1491 = vmatpush1.xpose.msra.mxu0 0.0
    %1492 = vmatprep.subr.mxu0 0.0
    %1493 = vmatpush1.xpose.msra.mxu0 0.0
    %1494 = vmatprep.subr.mxu0 0.0
    %1495 = vmatpush1.xpose.msra.mxu0 %v1462
    %1496 = vmatprep.subr.mxu0 0.0
    %1497 = vmatpush2.xpose.msra.mxu0 0.0
    %1498 = vmatprep.subr.mxu0 0.0
    %1499 = vmatpush2.xpose.msra.mxu0 0.0
    %1500 = vmatprep.subr.mxu0 0.0
    %1501 = vmatpush2.xpose.msra.mxu0 0.0
    %1502 = vmatprep.subr.mxu0 0.0
    %1503 = vmatpush2.xpose.msra.mxu0 0.0
    %1504 = vmatprep.subr.mxu0 0.0
    %1505 = vmatpush2.xpose.msra.mxu0 0.0
    %1506 = vmatprep.subr.mxu0 0.0
    %1507 = vmatpush2.xpose.msra.mxu0 0.0
    %1508 = vmatprep.subr.mxu0 0.0
    %1509 = vmatpush2.xpose.msra.mxu0 0.0
    %1510 = vmatprep.subr.mxu0 0.0
    %1511 = vmatpush2.xpose.msra.mxu0 0.0
    %1512 = vmatprep.subr.mxu0 0.0
    %1513 = vmatpush2.xpose.msra.mxu0 0.0
    %1514 = vmatprep.subr.mxu0 0.0
    %1515 = vmatpush2.xpose.msra.mxu0 0.0
    %1516 = vmatprep.subr.mxu0 0.0
    %1517 = vmatpush2.xpose.msra.mxu0 0.0
    %1518 = vmatprep.subr.mxu0 0.0
    %1519 = vmatpush2.xpose.msra.mxu0 0.0
    %1520 = vmatprep.subr.mxu0 0.0
    %1521 = vmatpush2.xpose.msra.mxu0 0.0
    %1522 = vmatprep.subr.mxu0 0.0
    %1523 = vmatpush2.xpose.msra.mxu0 0.0
    %1524 = vmatprep.subr.mxu0 0.0
    %1525 = vmatpush2.xpose.msra.mxu0 0.0
    %1526 = vmatprep.subr.mxu0 0.0
    %1527 = vmatpush2.xpose.msra.mxu0 0.0
    %1528 = vmatprep.mubr.f32.mxu0 0.0
    %1529 = vmatmul.mubr.f32.gmra.mxu0 %v1460
    %v1530 = vpop.f32.mrf.mxu0
    %v1531 = vadd.f32 %v169, %v1530
    %v1532 = vpop.f32.mrf.mxu0
    %1533 = vdwg.mxu0
    %v1534 = vsel %vm371, %v1453, -inf
    %1535 = vmax.xlane.f32.xlu0 %v1534
    %v1536 = vpop.xlane.xlu0 %1535
    %v1537 = vsel %vm371, %v1531, -inf
    %1538 = vmax.xlane.f32.xlu0 %v1537
    %v1539 = vpop.xlane.xlu0 %1538
    %v1540 = vsub.f32 %v1453, %v1536
    %v1541 = vsub.f32 %v1531, %v1539
    %v1542 = vmul.f32 %v1540, 1.442695
    %v1543 = vpow.pop %v1542
    %v1544 = vmul.f32 %v1541, 1.442695
    %v1545 = vpow.pop %v1544
    %v1546 = vsel %vm371, %v1543, 0.0
    %1547 = vadd.xlane.f32.xlu0 %v1546
    %v1548 = vpop.xlane.xlu0 %1547
    %v1549 = vsel %vm371, %v1545, 0.0
    %1550 = vadd.xlane.f32.xlu0 %v1549
    %v1551 = vpop.xlane.xlu0 %1550
    %v1552 = vrcp.pop %v1548
    %v1553 = vrcp.pop %v1551
    %v1554 = vmul.f32 %v1543, %v1552
    %v1555 = vmul.f32 %v1545, %v1553
    %1556 = vrot.lane.b32.xlu0 %v363, 104
    %v1557 = vpop.permute.xlu0 %1556
    %v1560 = vsel %vm371, %v1554, 0
    %1562 = vmatprep.subr.mxu0 0.0
    %1563 = vmatpush1.msra.mxu0 0.0
    %1564 = vmatprep.subr.mxu0 0.0
    %1565 = vmatpush1.msra.mxu0 0.0
    %1566 = vmatprep.subr.mxu0 0.0
    %1567 = vmatpush1.msra.mxu0 0.0
    %1568 = vmatprep.subr.mxu0 0.0
    %1569 = vmatpush1.msra.mxu0 0.0
    %1570 = vmatprep.subr.mxu0 0.0
    %1571 = vmatpush1.msra.mxu0 0.0
    %1572 = vmatprep.subr.mxu0 0.0
    %1573 = vmatpush1.msra.mxu0 0.0
    %1574 = vmatprep.subr.mxu0 0.0
    %1575 = vmatpush1.msra.mxu0 0.0
    %1576 = vmatprep.subr.mxu0 0.0
    %1577 = vmatpush1.msra.mxu0 0.0
    %1578 = vmatprep.subr.mxu0 0.0
    %1579 = vmatpush1.msra.mxu0 0.0
    %1580 = vmatprep.subr.mxu0 0.0
    %1581 = vmatpush1.msra.mxu0 0.0
    %1582 = vmatprep.subr.mxu0 0.0
    %1583 = vmatpush1.msra.mxu0 0.0
    %1584 = vmatprep.subr.mxu0 0.0
    %1585 = vmatpush1.msra.mxu0 0.0
    %1586 = vmatprep.subr.mxu0 0.0
    %1587 = vmatpush1.msra.mxu0 0.0
    %1588 = vmatprep.subr.mxu0 0.0
    %1589 = vmatpush1.msra.mxu0 0.0
    %1590 = vmatprep.subr.mxu0 0.0
    %1591 = vmatpush1.msra.mxu0 0.0
    %1592 = vmatprep.subr.mxu0 0.0
    %1593 = vmatpush1.msra.mxu0 %v1557
    %1594 = vmatprep.subr.mxu0 0.0
    %1595 = vmatpush2.msra.mxu0 0.0
    %1596 = vmatprep.subr.mxu0 0.0
    %1597 = vmatpush2.msra.mxu0 0.0
    %1598 = vmatprep.subr.mxu0 0.0
    %1599 = vmatpush2.msra.mxu0 0.0
    %1600 = vmatprep.subr.mxu0 0.0
    %1601 = vmatpush2.msra.mxu0 0.0
    %1602 = vmatprep.subr.mxu0 0.0
    %1603 = vmatpush2.msra.mxu0 0.0
    %1604 = vmatprep.subr.mxu0 0.0
    %1605 = vmatpush2.msra.mxu0 0.0
    %1606 = vmatprep.subr.mxu0 0.0
    %1607 = vmatpush2.msra.mxu0 0.0
    %1608 = vmatprep.subr.mxu0 0.0
    %1609 = vmatpush2.msra.mxu0 0.0
    %1610 = vmatprep.subr.mxu0 0.0
    %1611 = vmatpush2.msra.mxu0 0.0
    %1612 = vmatprep.subr.mxu0 0.0
    %1613 = vmatpush2.msra.mxu0 0.0
    %1614 = vmatprep.subr.mxu0 0.0
    %1615 = vmatpush2.msra.mxu0 0.0
    %1616 = vmatprep.subr.mxu0 0.0
    %1617 = vmatpush2.msra.mxu0 0.0
    %1618 = vmatprep.subr.mxu0 0.0
    %1619 = vmatpush2.msra.mxu0 0.0
    %1620 = vmatprep.subr.mxu0 0.0
    %1621 = vmatpush2.msra.mxu0 0.0
    %1622 = vmatprep.subr.mxu0 0.0
    %1623 = vmatpush2.msra.mxu0 0.0
    %1624 = vmatprep.subr.mxu0 0.0
    %1625 = vmatpush2.msra.mxu0 0.0
    %1626 = vmatprep.mubr.f32.mxu0 0.0
    %1627 = vmatmul.mubr.f32.gmra.mxu0 %v1560
    %v1628 = vpop.f32.mrf.mxu0
    %v1629 = vadd.f32 0.0, %v1628
    %v1630 = vpop.f32.mrf.mxu0
    %1631 = vdwg.mxu0
    %1632 = vrot.lane.b32.xlu0 %v366, 104
    %v1633 = vpop.permute.xlu0 %1632
    %v1636 = vsel %vm371, %v1555, 0
    %1638 = vmatprep.subr.mxu0 0.0
    %1639 = vmatpush1.msra.mxu0 0.0
    %1640 = vmatprep.subr.mxu0 0.0
    %1641 = vmatpush1.msra.mxu0 0.0
    %1642 = vmatprep.subr.mxu0 0.0
    %1643 = vmatpush1.msra.mxu0 0.0
    %1644 = vmatprep.subr.mxu0 0.0
    %1645 = vmatpush1.msra.mxu0 0.0
    %1646 = vmatprep.subr.mxu0 0.0
    %1647 = vmatpush1.msra.mxu0 0.0
    %1648 = vmatprep.subr.mxu0 0.0
    %1649 = vmatpush1.msra.mxu0 0.0
    %1650 = vmatprep.subr.mxu0 0.0
    %1651 = vmatpush1.msra.mxu0 0.0
    %1652 = vmatprep.subr.mxu0 0.0
    %1653 = vmatpush1.msra.mxu0 0.0
    %1654 = vmatprep.subr.mxu0 0.0
    %1655 = vmatpush1.msra.mxu0 0.0
    %1656 = vmatprep.subr.mxu0 0.0
    %1657 = vmatpush1.msra.mxu0 0.0
    %1658 = vmatprep.subr.mxu0 0.0
    %1659 = vmatpush1.msra.mxu0 0.0
    %1660 = vmatprep.subr.mxu0 0.0
    %1661 = vmatpush1.msra.mxu0 0.0
    %1662 = vmatprep.subr.mxu0 0.0
    %1663 = vmatpush1.msra.mxu0 0.0
    %1664 = vmatprep.subr.mxu0 0.0
    %1665 = vmatpush1.msra.mxu0 0.0
    %1666 = vmatprep.subr.mxu0 0.0
    %1667 = vmatpush1.msra.mxu0 0.0
    %1668 = vmatprep.subr.mxu0 0.0
    %1669 = vmatpush1.msra.mxu0 %v1633
    %1670 = vmatprep.subr.mxu0 0.0
    %1671 = vmatpush2.msra.mxu0 0.0
    %1672 = vmatprep.subr.mxu0 0.0
    %1673 = vmatpush2.msra.mxu0 0.0
    %1674 = vmatprep.subr.mxu0 0.0
    %1675 = vmatpush2.msra.mxu0 0.0
    %1676 = vmatprep.subr.mxu0 0.0
    %1677 = vmatpush2.msra.mxu0 0.0
    %1678 = vmatprep.subr.mxu0 0.0
    %1679 = vmatpush2.msra.mxu0 0.0
    %1680 = vmatprep.subr.mxu0 0.0
    %1681 = vmatpush2.msra.mxu0 0.0
    %1682 = vmatprep.subr.mxu0 0.0
    %1683 = vmatpush2.msra.mxu0 0.0
    %1684 = vmatprep.subr.mxu0 0.0
    %1685 = vmatpush2.msra.mxu0 0.0
    %1686 = vmatprep.subr.mxu0 0.0
    %1687 = vmatpush2.msra.mxu0 0.0
    %1688 = vmatprep.subr.mxu0 0.0
    %1689 = vmatpush2.msra.mxu0 0.0
    %1690 = vmatprep.subr.mxu0 0.0
    %1691 = vmatpush2.msra.mxu0 0.0
    %1692 = vmatprep.subr.mxu0 0.0
    %1693 = vmatpush2.msra.mxu0 0.0
    %1694 = vmatprep.subr.mxu0 0.0
    %1695 = vmatpush2.msra.mxu0 0.0
    %1696 = vmatprep.subr.mxu0 0.0
    %1697 = vmatpush2.msra.mxu0 0.0
    %1698 = vmatprep.subr.mxu0 0.0
    %1699 = vmatpush2.msra.mxu0 0.0
    %1700 = vmatprep.subr.mxu0 0.0
    %1701 = vmatpush2.msra.mxu0 0.0
    %1702 = vmatprep.mubr.f32.mxu0 0.0
    %1703 = vmatmul.mubr.f32.gmra.mxu0 %v1636
    %v1704 = vpop.f32.mrf.mxu0
    %v1705 = vadd.f32 0.0, %v1704
    %v1706 = vpop.f32.mrf.mxu0
    %1707 = vdwg.mxu0
    %1710 = vrot.lane.b32.xlu0 %v1629, 24
    %v1711 = vpop.permute.xlu0 %1710
    %1712 = vrot.lane.b32.xlu0 %v1705, 24
    %v1713 = vpop.permute.xlu0 %1712
    %vm1716 = vcmask 261312
    %1717 = vst.msk [vmem:[#allocation2] sm:$0xff] %vm1716, %v1711
    %1718 = vst.msk [vmem:[#allocation2 + $0x8] sm:$0xff] %vm1716, %v1713
    %v1719 = vld [vmem:[#allocation2] sm:$0xff]
    %v1720 = vld [vmem:[#allocation2 + $0x8] sm:$0xff]
    %v1721 = vpack.c.bf16 %v1720, %v1719
    %v1722 = vld [vmem:[%s19] sm:$0xf]
    %v1723 = vld [vmem:[%s19 + $0x4] sm:$0xf]
    %v1724 = vld [vmem:[%s19 + $0x8] sm:$0xf]
    %v1725 = vld [vmem:[%s19 + $0xc] sm:$0xf]
    %v1726 = vld [vmem:[%s21] sm:$0x1]
    %v1728 = vlaneseq
    %v1729 = vshrl.u32 %v1728, 7
    %v1730 = vsub.s32 0, %v1729
    %v1731 = vrot.slane %v1726, %v1730
    %v1737 = vunpack.c.l.b16 %v1722
    %v1738 = vunpack.c.l.b16 %v1723
    %v1739 = vunpack.c.l.b16 %v1724
    %v1740 = vunpack.c.l.b16 %v1725
    %v1741 = vpack.c.b16 %v1738, %v1737
    %v1742 = vpack.c.b16 %v1740, %v1739
    %v1746 = vsel %vm196, %v1721, 0
    %1748 = vmatprep.subr.bf16.mxu0 0
    %1749 = vmatpush1.bf16.msra.mxu0 0
    %1750 = vmatprep.subr.bf16.mxu0 0
    %1751 = vmatpush1.bf16.msra.mxu0 0
    %1752 = vmatprep.subr.bf16.mxu0 0
    %1753 = vmatpush1.bf16.msra.mxu0 0
    %1754 = vmatprep.subr.bf16.mxu0 0
    %1755 = vmatpush1.bf16.msra.mxu0 0
    %1756 = vmatprep.subr.bf16.mxu0 0
    %1757 = vmatpush1.bf16.msra.mxu0 0
    %1758 = vmatprep.subr.bf16.mxu0 0
    %1759 = vmatpush1.bf16.msra.mxu0 0
    %1760 = vmatprep.subr.bf16.mxu0 0
    %1761 = vmatpush1.bf16.msra.mxu0 %v1742
    %1762 = vmatprep.subr.bf16.mxu0 0
    %1763 = vmatpush1.bf16.msra.mxu0 %v1741
    %1764 = vmatprep.subr.bf16.mxu0 0
    %1765 = vmatpush2.bf16.msra.mxu0 0
    %1766 = vmatprep.subr.bf16.mxu0 0
    %1767 = vmatpush2.bf16.msra.mxu0 0
    %1768 = vmatprep.subr.bf16.mxu0 0
    %1769 = vmatpush2.bf16.msra.mxu0 0
    %1770 = vmatprep.subr.bf16.mxu0 0
    %1771 = vmatpush2.bf16.msra.mxu0 0
    %1772 = vmatprep.subr.bf16.mxu0 0
    %1773 = vmatpush2.bf16.msra.mxu0 0
    %1774 = vmatprep.subr.bf16.mxu0 0
    %1775 = vmatpush2.bf16.msra.mxu0 0
    %1776 = vmatprep.subr.bf16.mxu0 0
    %1777 = vmatpush2.bf16.msra.mxu0 0
    %1778 = vmatprep.subr.bf16.mxu0 0
    %1779 = vmatpush2.bf16.msra.mxu0 0
    %1780 = vmatprep.mubr.bf16.mxu0 0
    %1781 = vmatmul.mubr.bf16.gmra.mxu0 %v1746
    %v1782 = vpop.f32.mrf.mxu0
    %v1783 = vadd.f32 %v1731, %v1782
    %v1784 = vpop.f32.mrf.mxu0
    %v1785 = vpop.f32.mrf.mxu0
    %v1786 = vadd.f32 %v1731, %v1785
    %v1787 = vpop.f32.mrf.mxu0
    %1788 = vdwg.mxu0
    %v1789 = vadd.f32 %v156, %v1783
    %v1790 = vadd.f32 %v157, %v1786
    %v1791 = vld [vmem:[%s23] sm:$0x1]
    %v1792 = vld [vmem:[%s25] sm:$0x1]
    %v1793 = vsel %vm196, %v1789, 0.0
    %1794 = vadd.xlane.f32.xlu0 %v1793
    %v1795 = vpop.xlane.xlu0 %1794
    %v1796 = vsel %vm196, %v1790, 0.0
    %1797 = vadd.xlane.f32.xlu0 %v1796
    %v1798 = vpop.xlane.xlu0 %1797
    %v1799 = vrcp.pop 32.0
    %v1800 = vmul.f32 %v1795, %v1799
    %v1801 = vmul.f32 %v1798, %v1799
    %v1802 = vsub.f32 %v1789, %v1800
    %v1803 = vsub.f32 %v1790, %v1801
    %v1804 = vmul.f32 %v1802, %v1802
    %v1805 = vmul.f32 %v1803, %v1803
    %v1806 = vsel %vm196, %v1804, 0.0
    %1807 = vadd.xlane.f32.xlu0 %v1806
    %v1808 = vpop.xlane.xlu0 %1807
    %v1809 = vsel %vm196, %v1805, 0.0
    %1810 = vadd.xlane.f32.xlu0 %v1809
    %v1811 = vpop.xlane.xlu0 %1810
    %v1812 = vmul.f32 %v1808, %v1799
    %v1813 = vmul.f32 %v1811, %v1799
    %v1814 = vadd.f32 %v1812, 1e-05
    %v1815 = vadd.f32 %v1813, 1e-05
    %v1816 = vrsqrt.pop %v1814
    %v1817 = vrsqrt.pop %v1815
    %v1818 = vmul.f32 %v1802, %v1816
    %v1819 = vmul.f32 %v1803, %v1817
    %v1821 = vlaneseq
    %v1822 = vshrl.u32 %v1821, 7
    %v1823 = vsub.s32 0, %v1822
    %v1824 = vrot.slane %v1791, %v1823
    %v1826 = vmul.f32 %v1818, %v1824
    %v1827 = vmul.f32 %v1819, %v1824
    %v1829 = vlaneseq
    %v1830 = vshrl.u32 %v1829, 7
    %v1831 = vsub.s32 0, %v1830
    %v1832 = vrot.slane %v1792, %v1831
    %v1834 = vadd.f32 %v1826, %v1832
    %v1835 = vadd.f32 %v1827, %v1832
    %v1836 = vpack.c.bf16 %v1835, %v1834
    %v1837 = vld [vmem:[%s27] sm:$0xf]
    %v1838 = vld [vmem:[%s27 + $0x4] sm:$0xf]
    %v1839 = vld [vmem:[%s27 + $0x8] sm:$0xf]
    %v1840 = vld [vmem:[%s27 + $0xc] sm:$0xf]
    %v1841 = vld [vmem:[%s29] sm:$0x1]
    %v1843 = vlaneseq
    %v1844 = vshrl.u32 %v1843, 7
    %v1845 = vsub.s32 0, %v1844
    %v1846 = vrot.slane %v1841, %v1845
    %v1852 = vunpack.c.l.b16 %v1837
    %v1853 = vunpack.c.l.b16 %v1838
    %v1854 = vunpack.c.l.b16 %v1839
    %v1855 = vunpack.c.l.b16 %v1840
    %v1856 = vpack.c.b16 %v1853, %v1852
    %v1857 = vpack.c.b16 %v1855, %v1854
    %v1861 = vsel %vm196, %v1836, 0
    %1863 = vmatprep.subr.bf16.mxu0 0
    %1864 = vmatpush1.bf16.msra.mxu0 0
    %1865 = vmatprep.subr.bf16.mxu0 0
    %1866 = vmatpush1.bf16.msra.mxu0 0
    %1867 = vmatprep.subr.bf16.mxu0 0
    %1868 = vmatpush1.bf16.msra.mxu0 0
    %1869 = vmatprep.subr.bf16.mxu0 0
    %1870 = vmatpush1.bf16.msra.mxu0 0
    %1871 = vmatprep.subr.bf16.mxu0 0
    %1872 = vmatpush1.bf16.msra.mxu0 0
    %1873 = vmatprep.subr.bf16.mxu0 0
    %1874 = vmatpush1.bf16.msra.mxu0 0
    %1875 = vmatprep.subr.bf16.mxu0 0
    %1876 = vmatpush1.bf16.msra.mxu0 %v1857
    %1877 = vmatprep.subr.bf16.mxu0 0
    %1878 = vmatpush1.bf16.msra.mxu0 %v1856
    %1879 = vmatprep.subr.bf16.mxu0 0
    %1880 = vmatpush2.bf16.msra.mxu0 0
    %1881 = vmatprep.subr.bf16.mxu0 0
    %1882 = vmatpush2.bf16.msra.mxu0 0
    %1883 = vmatprep.subr.bf16.mxu0 0
    %1884 = vmatpush2.bf16.msra.mxu0 0
    %1885 = vmatprep.subr.bf16.mxu0 0
    %1886 = vmatpush2.bf16.msra.mxu0 0
    %1887 = vmatprep.subr.bf16.mxu0 0
    %1888 = vmatpush2.bf16.msra.mxu0 0
    %1889 = vmatprep.subr.bf16.mxu0 0
    %1890 = vmatpush2.bf16.msra.mxu0 0
    %1891 = vmatprep.subr.bf16.mxu0 0
    %1892 = vmatpush2.bf16.msra.mxu0 0
    %1893 = vmatprep.subr.bf16.mxu0 0
    %1894 = vmatpush2.bf16.msra.mxu0 0
    %1895 = vmatprep.mubr.bf16.mxu0 0
    %1896 = vmatmul.mubr.bf16.gmra.mxu0 %v1861
    %v1897 = vpop.f32.mrf.mxu0
    %v1898 = vadd.f32 %v1846, %v1897
    %v1899 = vpop.f32.mrf.mxu0
    %v1900 = vpop.f32.mrf.mxu0
    %v1901 = vadd.f32 %v1846, %v1900
    %v1902 = vpop.f32.mrf.mxu0
    %1903 = vdwg.mxu0
    %v1904 = vmul.f32 %v1898, %v1898
    %v1905 = vmul.f32 %v1901, %v1901
    %v1906 = vmul.f32 %v1898, %v1904
    %v1907 = vmul.f32 %v1901, %v1905
    %v1908 = vmul.f32 %v1906, 0.044715
    %v1909 = vmul.f32 %v1907, 0.044715
    %v1910 = vadd.f32 %v1898, %v1908
    %v1911 = vadd.f32 %v1901, %v1909
    %v1912 = vmul.f32 %v1910, 0.7978846
    %v1913 = vmul.f32 %v1911, 0.7978846
    %v1914 = vtanh.pop %v1912
    %v1915 = vtanh.pop %v1913
    %v1916 = vadd.f32 %v1914, 1.0
    %v1917 = vadd.f32 %v1915, 1.0
    %v1918 = vmul.f32 %v1916, 0.5
    %v1919 = vmul.f32 %v1917, 0.5
    %v1920 = vmul.f32 %v1898, %v1918
    %v1921 = vmul.f32 %v1901, %v1919
    %v1922 = vpack.c.bf16 %v1921, %v1920
    %v1923 = vld [vmem:[%s31] sm:$0xf]
    %v1924 = vld [vmem:[%s31 + $0x4] sm:$0xf]
    %v1925 = vld [vmem:[%s31 + $0x8] sm:$0xf]
    %v1926 = vld [vmem:[%s31 + $0xc] sm:$0xf]
    %v1927 = vld [vmem:[%s31 + $0x10] sm:$0xf]
    %v1928 = vld [vmem:[%s31 + $0x14] sm:$0xf]
    %v1929 = vld [vmem:[%s31 + $0x18] sm:$0xf]
    %v1930 = vld [vmem:[%s31 + $0x1c] sm:$0xf]
    %v1931 = vld [vmem:[%s33] sm:$0x1]
    %v1933 = vlaneseq
    %v1934 = vshrl.u32 %v1933, 7
    %v1935 = vsub.s32 0, %v1934
    %v1936 = vrot.slane %v1931, %v1935
    %v1946 = vunpack.c.l.b16 %v1923
    %v1947 = vunpack.c.l.b16 %v1924
    %v1948 = vunpack.c.l.b16 %v1925
    %v1949 = vunpack.c.l.b16 %v1926
    %v1950 = vunpack.c.l.b16 %v1927
    %v1951 = vunpack.c.l.b16 %v1928
    %v1952 = vunpack.c.l.b16 %v1929
    %v1953 = vunpack.c.l.b16 %v1930
    %v1954 = vpack.c.b16 %v1947, %v1946
    %v1955 = vpack.c.b16 %v1949, %v1948
    %v1956 = vpack.c.b16 %v1951, %v1950
    %v1957 = vpack.c.b16 %v1953, %v1952
    %vm1962 = vcmask 523264
    %v1964 = vsel %vm1962, %v1922, 0
    %1966 = vmatprep.subr.bf16.mxu0 0
    %1967 = vmatpush1.bf16.msra.mxu0 0
    %1968 = vmatprep.subr.bf16.mxu0 0
    %1969 = vmatpush1.bf16.msra.mxu0 0
    %1970 = vmatprep.subr.bf16.mxu0 0
    %1971 = vmatpush1.bf16.msra.mxu0 0
    %1972 = vmatprep.subr.bf16.mxu0 0
    %1973 = vmatpush1.bf16.msra.mxu0 0
    %1974 = vmatprep.subr.bf16.mxu0 0
    %1975 = vmatpush1.bf16.msra.mxu0 %v1957
    %1976 = vmatprep.subr.bf16.mxu0 0
    %1977 = vmatpush1.bf16.msra.mxu0 %v1956
    %1978 = vmatprep.subr.bf16.mxu0 0
    %1979 = vmatpush1.bf16.msra.mxu0 %v1955
    %1980 = vmatprep.subr.bf16.mxu0 0
    %1981 = vmatpush1.bf16.msra.mxu0 %v1954
    %1982 = vmatprep.subr.bf16.mxu0 0
    %1983 = vmatpush2.bf16.msra.mxu0 0
    %1984 = vmatprep.subr.bf16.mxu0 0
    %1985 = vmatpush2.bf16.msra.mxu0 0
    %1986 = vmatprep.subr.bf16.mxu0 0
    %1987 = vmatpush2.bf16.msra.mxu0 0
    %1988 = vmatprep.subr.bf16.mxu0 0
    %1989 = vmatpush2.bf16.msra.mxu0 0
    %1990 = vmatprep.subr.bf16.mxu0 0
    %1991 = vmatpush2.bf16.msra.mxu0 0
    %1992 = vmatprep.subr.bf16.mxu0 0
    %1993 = vmatpush2.bf16.msra.mxu0 0
    %1994 = vmatprep.subr.bf16.mxu0 0
    %1995 = vmatpush2.bf16.msra.mxu0 0
    %1996 = vmatprep.subr.bf16.mxu0 0
    %1997 = vmatpush2.bf16.msra.mxu0 0
    %1998 = vmatprep.mubr.bf16.mxu0 0
    %1999 = vmatmul.mubr.bf16.gmra.mxu0 %v1964
    %v2000 = vpop.f32.mrf.mxu0
    %v2001 = vadd.f32 %v1936, %v2000
    %v2002 = vpop.f32.mrf.mxu0
    %v2003 = vpop.f32.mrf.mxu0
    %v2004 = vadd.f32 %v1936, %v2003
    %v2005 = vpop.f32.mrf.mxu0
    %2006 = vdwg.mxu0
    %v2007 = vadd.f32 %v1834, %v2001
    %v2008 = vadd.f32 %v1835, %v2004
    %v2009 = vld [vmem:[%s35] sm:$0x1]
    %v2010 = vld [vmem:[%s37] sm:$0x1]
    %v2011 = vsel %vm196, %v2007, 0.0
    %2012 = vadd.xlane.f32.xlu0 %v2011
    %v2013 = vpop.xlane.xlu0 %2012
    %v2014 = vsel %vm196, %v2008, 0.0
    %2015 = vadd.xlane.f32.xlu0 %v2014
    %v2016 = vpop.xlane.xlu0 %2015
    %v2017 = vmul.f32 %v2013, %v1799
    %v2018 = vmul.f32 %v2016, %v1799
    %v2019 = vsub.f32 %v2007, %v2017
    %v2020 = vsub.f32 %v2008, %v2018
    %v2021 = vmul.f32 %v2019, %v2019
    %v2022 = vmul.f32 %v2020, %v2020
    %v2023 = vsel %vm196, %v2021, 0.0
    %2024 = vadd.xlane.f32.xlu0 %v2023
    %v2025 = vpop.xlane.xlu0 %2024
    %v2026 = vsel %vm196, %v2022, 0.0
    %2027 = vadd.xlane.f32.xlu0 %v2026
    %v2028 = vpop.xlane.xlu0 %2027
    %v2029 = vmul.f32 %v2025, %v1799
    %v2030 = vmul.f32 %v2028, %v1799
    %v2031 = vadd.f32 %v2029, 1e-05
    %v2032 = vadd.f32 %v2030, 1e-05
    %v2033 = vrsqrt.pop %v2031
    %v2034 = vrsqrt.pop %v2032
    %v2035 = vmul.f32 %v2019, %v2033
    %v2036 = vmul.f32 %v2020, %v2034
    %v2038 = vlaneseq
    %v2039 = vshrl.u32 %v2038, 7
    %v2040 = vsub.s32 0, %v2039
    %v2041 = vrot.slane %v2009, %v2040
    %v2043 = vmul.f32 %v2035, %v2041
    %v2044 = vmul.f32 %v2036, %v2041
    %v2046 = vlaneseq
    %v2047 = vshrl.u32 %v2046, 7
    %v2048 = vsub.s32 0, %v2047
    %v2049 = vrot.slane %v2010, %v2048
    %v2051 = vadd.f32 %v2043, %v2049
    %v2052 = vadd.f32 %v2044, %v2049
    %v2053 = vpack.c.bf16 %v2052, %v2051
    %v2054 = vld [vmem:[%s39] sm:$0xf]
    %v2055 = vld [vmem:[%s39 + $0x4] sm:$0xf]
    %v2056 = vld [vmem:[%s39 + $0x8] sm:$0xf]
    %v2057 = vld [vmem:[%s39 + $0xc] sm:$0xf]
    %v2058 = vld [vmem:[%s41] sm:$0x1]
    %v2060 = vlaneseq
    %v2061 = vshrl.u32 %v2060, 7
    %v2062 = vsub.s32 0, %v2061
    %v2063 = vrot.slane %v2058, %v2062
    %v2069 = vunpack.c.l.b16 %v2054
    %v2070 = vunpack.c.l.b16 %v2055
    %v2071 = vunpack.c.l.b16 %v2056
    %v2072 = vunpack.c.l.b16 %v2057
    %v2073 = vpack.c.b16 %v2070, %v2069
    %v2074 = vpack.c.b16 %v2072, %v2071
    %v2078 = vsel %vm196, %v2053, 0
    %2080 = vmatprep.subr.bf16.mxu0 0
    %2081 = vmatpush1.bf16.msra.mxu0 0
    %2082 = vmatprep.subr.bf16.mxu0 0
    %2083 = vmatpush1.bf16.msra.mxu0 0
    %2084 = vmatprep.subr.bf16.mxu0 0
    %2085 = vmatpush1.bf16.msra.mxu0 0
    %2086 = vmatprep.subr.bf16.mxu0 0
    %2087 = vmatpush1.bf16.msra.mxu0 0
    %2088 = vmatprep.subr.bf16.mxu0 0
    %2089 = vmatpush1.bf16.msra.mxu0 0
    %2090 = vmatprep.subr.bf16.mxu0 0
    %2091 = vmatpush1.bf16.msra.mxu0 0
    %2092 = vmatprep.subr.bf16.mxu0 0
    %2093 = vmatpush1.bf16.msra.mxu0 %v2074
    %2094 = vmatprep.subr.bf16.mxu0 0
    %2095 = vmatpush1.bf16.msra.mxu0 %v2073
    %2096 = vmatprep.subr.bf16.mxu0 0
    %2097 = vmatpush2.bf16.msra.mxu0 0
    %2098 = vmatprep.subr.bf16.mxu0 0
    %2099 = vmatpush2.bf16.msra.mxu0 0
    %2100 = vmatprep.subr.bf16.mxu0 0
    %2101 = vmatpush2.bf16.msra.mxu0 0
    %2102 = vmatprep.subr.bf16.mxu0 0
    %2103 = vmatpush2.bf16.msra.mxu0 0
    %2104 = vmatprep.subr.bf16.mxu0 0
    %2105 = vmatpush2.bf16.msra.mxu0 0
    %2106 = vmatprep.subr.bf16.mxu0 0
    %2107 = vmatpush2.bf16.msra.mxu0 0
    %2108 = vmatprep.subr.bf16.mxu0 0
    %2109 = vmatpush2.bf16.msra.mxu0 0
    %2110 = vmatprep.subr.bf16.mxu0 0
    %2111 = vmatpush2.bf16.msra.mxu0 0
    %2112 = vmatprep.mubr.bf16.mxu0 0
    %2113 = vmatmul.mubr.bf16.gmra.mxu0 %v2078
    %v2114 = vpop.f32.mrf.mxu0
    %v2115 = vadd.f32 %v2063, %v2114
    %v2116 = vpop.f32.mrf.mxu0
    %v2117 = vpop.f32.mrf.mxu0
    %v2118 = vadd.f32 %v2063, %v2117
    %v2119 = vpop.f32.mrf.mxu0
    %2120 = vdwg.mxu0
    %v2121 = vld [vmem:[%s43] sm:$0xf]
    %v2122 = vld [vmem:[%s43 + $0x4] sm:$0xf]
    %v2123 = vld [vmem:[%s43 + $0x8] sm:$0xf]
    %v2124 = vld [vmem:[%s43 + $0xc] sm:$0xf]
    %v2125 = vld [vmem:[%s45] sm:$0x1]
    %v2127 = vlaneseq
    %v2128 = vshrl.u32 %v2127, 7
    %v2129 = vsub.s32 0, %v2128
    %v2130 = vrot.slane %v2125, %v2129
    %v2136 = vunpack.c.l.b16 %v2121
    %v2137 = vunpack.c.l.b16 %v2122
    %v2138 = vunpack.c.l.b16 %v2123
    %v2139 = vunpack.c.l.b16 %v2124
    %v2140 = vpack.c.b16 %v2137, %v2136
    %v2141 = vpack.c.b16 %v2139, %v2138
    %2144 = vmatprep.subr.bf16.mxu0 0
    %2145 = vmatpush1.bf16.msra.mxu0 0
    %2146 = vmatprep.subr.bf16.mxu0 0
    %2147 = vmatpush1.bf16.msra.mxu0 0
    %2148 = vmatprep.subr.bf16.mxu0 0
    %2149 = vmatpush1.bf16.msra.mxu0 0
    %2150 = vmatprep.subr.bf16.mxu0 0
    %2151 = vmatpush1.bf16.msra.mxu0 0
    %2152 = vmatprep.subr.bf16.mxu0 0
    %2153 = vmatpush1.bf16.msra.mxu0 0
    %2154 = vmatprep.subr.bf16.mxu0 0
    %2155 = vmatpush1.bf16.msra.mxu0 0
    %2156 = vmatprep.subr.bf16.mxu0 0
    %2157 = vmatpush1.bf16.msra.mxu0 %v2141
    %2158 = vmatprep.subr.bf16.mxu0 0
    %2159 = vmatpush1.bf16.msra.mxu0 %v2140
    %2160 = vmatprep.subr.bf16.mxu0 0
    %2161 = vmatpush2.bf16.msra.mxu0 0
    %2162 = vmatprep.subr.bf16.mxu0 0
    %2163 = vmatpush2.bf16.msra.mxu0 0
    %2164 = vmatprep.subr.bf16.mxu0 0
    %2165 = vmatpush2.bf16.msra.mxu0 0
    %2166 = vmatprep.subr.bf16.mxu0 0
    %2167 = vmatpush2.bf16.msra.mxu0 0
    %2168 = vmatprep.subr.bf16.mxu0 0
    %2169 = vmatpush2.bf16.msra.mxu0 0
    %2170 = vmatprep.subr.bf16.mxu0 0
    %2171 = vmatpush2.bf16.msra.mxu0 0
    %2172 = vmatprep.subr.bf16.mxu0 0
    %2173 = vmatpush2.bf16.msra.mxu0 0
    %2174 = vmatprep.subr.bf16.mxu0 0
    %2175 = vmatpush2.bf16.msra.mxu0 0
    %2176 = vmatprep.mubr.bf16.mxu0 0
    %2177 = vmatmul.mubr.bf16.gmra.mxu0 %v2078
    %v2178 = vpop.f32.mrf.mxu0
    %v2179 = vadd.f32 %v2130, %v2178
    %v2180 = vpop.f32.mrf.mxu0
    %v2181 = vpop.f32.mrf.mxu0
    %v2182 = vadd.f32 %v2130, %v2181
    %v2183 = vpop.f32.mrf.mxu0
    %2184 = vdwg.mxu0
    %v2185 = vld [vmem:[%s47] sm:$0xf]
    %v2186 = vld [vmem:[%s47 + $0x4] sm:$0xf]
    %v2187 = vld [vmem:[%s47 + $0x8] sm:$0xf]
    %v2188 = vld [vmem:[%s47 + $0xc] sm:$0xf]
    %v2189 = vld [vmem:[%s49] sm:$0x1]
    %v2191 = vlaneseq
    %v2192 = vshrl.u32 %v2191, 7
    %v2193 = vsub.s32 0, %v2192
    %v2194 = vrot.slane %v2189, %v2193
    %v2200 = vunpack.c.l.b16 %v2185
    %v2201 = vunpack.c.l.b16 %v2186
    %v2202 = vunpack.c.l.b16 %v2187
    %v2203 = vunpack.c.l.b16 %v2188
    %v2204 = vpack.c.b16 %v2201, %v2200
    %v2205 = vpack.c.b16 %v2203, %v2202
    %2208 = vmatprep.subr.bf16.mxu0 0
    %2209 = vmatpush1.bf16.msra.mxu0 0
    %2210 = vmatprep.subr.bf16.mxu0 0
    %2211 = vmatpush1.bf16.msra.mxu0 0
    %2212 = vmatprep.subr.bf16.mxu0 0
    %2213 = vmatpush1.bf16.msra.mxu0 0
    %2214 = vmatprep.subr.bf16.mxu0 0
    %2215 = vmatpush1.bf16.msra.mxu0 0
    %2216 = vmatprep.subr.bf16.mxu0 0
    %2217 = vmatpush1.bf16.msra.mxu0 0
    %2218 = vmatprep.subr.bf16.mxu0 0
    %2219 = vmatpush1.bf16.msra.mxu0 0
    %2220 = vmatprep.subr.bf16.mxu0 0
    %2221 = vmatpush1.bf16.msra.mxu0 %v2205
    %2222 = vmatprep.subr.bf16.mxu0 0
    %2223 = vmatpush1.bf16.msra.mxu0 %v2204
    %2224 = vmatprep.subr.bf16.mxu0 0
    %2225 = vmatpush2.bf16.msra.mxu0 0
    %2226 = vmatprep.subr.bf16.mxu0 0
    %2227 = vmatpush2.bf16.msra.mxu0 0
    %2228 = vmatprep.subr.bf16.mxu0 0
    %2229 = vmatpush2.bf16.msra.mxu0 0
    %2230 = vmatprep.subr.bf16.mxu0 0
    %2231 = vmatpush2.bf16.msra.mxu0 0
    %2232 = vmatprep.subr.bf16.mxu0 0
    %2233 = vmatpush2.bf16.msra.mxu0 0
    %2234 = vmatprep.subr.bf16.mxu0 0
    %2235 = vmatpush2.bf16.msra.mxu0 0
    %2236 = vmatprep.subr.bf16.mxu0 0
    %2237 = vmatpush2.bf16.msra.mxu0 0
    %2238 = vmatprep.subr.bf16.mxu0 0
    %2239 = vmatpush2.bf16.msra.mxu0 0
    %2240 = vmatprep.mubr.bf16.mxu0 0
    %2241 = vmatmul.mubr.bf16.gmra.mxu0 %v2078
    %v2242 = vpop.f32.mrf.mxu0
    %v2243 = vadd.f32 %v2194, %v2242
    %v2244 = vpop.f32.mrf.mxu0
    %v2245 = vpop.f32.mrf.mxu0
    %v2246 = vadd.f32 %v2194, %v2245
    %v2247 = vpop.f32.mrf.mxu0
    %2248 = vdwg.mxu0
    %v2249 = vmul.f32 %v2115, 0.35355338
    %v2250 = vmul.f32 %v2118, 0.35355338
    %v2252 = vsel %vm371, %v2249, 0
    %v2255 = vsel %vm371, %v2179, 0
    %2257 = vmatprep.subr.mxu0 0.0
    %2258 = vmatpush1.xpose.msra.mxu0 0.0
    %2259 = vmatprep.subr.mxu0 0.0
    %2260 = vmatpush1.xpose.msra.mxu0 0.0
    %2261 = vmatprep.subr.mxu0 0.0
    %2262 = vmatpush1.xpose.msra.mxu0 0.0
    %2263 = vmatprep.subr.mxu0 0.0
    %2264 = vmatpush1.xpose.msra.mxu0 0.0
    %2265 = vmatprep.subr.mxu0 0.0
    %2266 = vmatpush1.xpose.msra.mxu0 0.0
    %2267 = vmatprep.subr.mxu0 0.0
    %2268 = vmatpush1.xpose.msra.mxu0 0.0
    %2269 = vmatprep.subr.mxu0 0.0
    %2270 = vmatpush1.xpose.msra.mxu0 0.0
    %2271 = vmatprep.subr.mxu0 0.0
    %2272 = vmatpush1.xpose.msra.mxu0 0.0
    %2273 = vmatprep.subr.mxu0 0.0
    %2274 = vmatpush1.xpose.msra.mxu0 0.0
    %2275 = vmatprep.subr.mxu0 0.0
    %2276 = vmatpush1.xpose.msra.mxu0 0.0
    %2277 = vmatprep.subr.mxu0 0.0
    %2278 = vmatpush1.xpose.msra.mxu0 0.0
    %2279 = vmatprep.subr.mxu0 0.0
    %2280 = vmatpush1.xpose.msra.mxu0 0.0
    %2281 = vmatprep.subr.mxu0 0.0
    %2282 = vmatpush1.xpose.msra.mxu0 0.0
    %2283 = vmatprep.subr.mxu0 0.0
    %2284 = vmatpush1.xpose.msra.mxu0 0.0
    %2285 = vmatprep.subr.mxu0 0.0
    %2286 = vmatpush1.xpose.msra.mxu0 0.0
    %2287 = vmatprep.subr.mxu0 0.0
    %2288 = vmatpush1.xpose.msra.mxu0 %v2255
    %2289 = vmatprep.subr.mxu0 0.0
    %2290 = vmatpush2.xpose.msra.mxu0 0.0
    %2291 = vmatprep.subr.mxu0 0.0
    %2292 = vmatpush2.xpose.msra.mxu0 0.0
    %2293 = vmatprep.subr.mxu0 0.0
    %2294 = vmatpush2.xpose.msra.mxu0 0.0
    %2295 = vmatprep.subr.mxu0 0.0
    %2296 = vmatpush2.xpose.msra.mxu0 0.0
    %2297 = vmatprep.subr.mxu0 0.0
    %2298 = vmatpush2.xpose.msra.mxu0 0.0
    %2299 = vmatprep.subr.mxu0 0.0
    %2300 = vmatpush2.xpose.msra.mxu0 0.0
    %2301 = vmatprep.subr.mxu0 0.0
    %2302 = vmatpush2.xpose.msra.mxu0 0.0
    %2303 = vmatprep.subr.mxu0 0.0
    %2304 = vmatpush2.xpose.msra.mxu0 0.0
    %2305 = vmatprep.subr.mxu0 0.0
    %2306 = vmatpush2.xpose.msra.mxu0 0.0
    %2307 = vmatprep.subr.mxu0 0.0
    %2308 = vmatpush2.xpose.msra.mxu0 0.0
    %2309 = vmatprep.subr.mxu0 0.0
    %2310 = vmatpush2.xpose.msra.mxu0 0.0
    %2311 = vmatprep.subr.mxu0 0.0
    %2312 = vmatpush2.xpose.msra.mxu0 0.0
    %2313 = vmatprep.subr.mxu0 0.0
    %2314 = vmatpush2.xpose.msra.mxu0 0.0
    %2315 = vmatprep.subr.mxu0 0.0
    %2316 = vmatpush2.xpose.msra.mxu0 0.0
    %2317 = vmatprep.subr.mxu0 0.0
    %2318 = vmatpush2.xpose.msra.mxu0 0.0
    %2319 = vmatprep.subr.mxu0 0.0
    %2320 = vmatpush2.xpose.msra.mxu0 0.0
    %2321 = vmatprep.mubr.f32.mxu0 0.0
    %2322 = vmatmul.mubr.f32.gmra.mxu0 %v2252
    %v2323 = vpop.f32.mrf.mxu0
    %v2324 = vadd.f32 %v165, %v2323
    %v2325 = vpop.f32.mrf.mxu0
    %2326 = vdwg.mxu0
    %v2328 = vsel %vm371, %v2250, 0
    %v2331 = vsel %vm371, %v2182, 0
    %2333 = vmatprep.subr.mxu0 0.0
    %2334 = vmatpush1.xpose.msra.mxu0 0.0
    %2335 = vmatprep.subr.mxu0 0.0
    %2336 = vmatpush1.xpose.msra.mxu0 0.0
    %2337 = vmatprep.subr.mxu0 0.0
    %2338 = vmatpush1.xpose.msra.mxu0 0.0
    %2339 = vmatprep.subr.mxu0 0.0
    %2340 = vmatpush1.xpose.msra.mxu0 0.0
    %2341 = vmatprep.subr.mxu0 0.0
    %2342 = vmatpush1.xpose.msra.mxu0 0.0
    %2343 = vmatprep.subr.mxu0 0.0
    %2344 = vmatpush1.xpose.msra.mxu0 0.0
    %2345 = vmatprep.subr.mxu0 0.0
    %2346 = vmatpush1.xpose.msra.mxu0 0.0
    %2347 = vmatprep.subr.mxu0 0.0
    %2348 = vmatpush1.xpose.msra.mxu0 0.0
    %2349 = vmatprep.subr.mxu0 0.0
    %2350 = vmatpush1.xpose.msra.mxu0 0.0
    %2351 = vmatprep.subr.mxu0 0.0
    %2352 = vmatpush1.xpose.msra.mxu0 0.0
    %2353 = vmatprep.subr.mxu0 0.0
    %2354 = vmatpush1.xpose.msra.mxu0 0.0
    %2355 = vmatprep.subr.mxu0 0.0
    %2356 = vmatpush1.xpose.msra.mxu0 0.0
    %2357 = vmatprep.subr.mxu0 0.0
    %2358 = vmatpush1.xpose.msra.mxu0 0.0
    %2359 = vmatprep.subr.mxu0 0.0
    %2360 = vmatpush1.xpose.msra.mxu0 0.0
    %2361 = vmatprep.subr.mxu0 0.0
    %2362 = vmatpush1.xpose.msra.mxu0 0.0
    %2363 = vmatprep.subr.mxu0 0.0
    %2364 = vmatpush1.xpose.msra.mxu0 %v2331
    %2365 = vmatprep.subr.mxu0 0.0
    %2366 = vmatpush2.xpose.msra.mxu0 0.0
    %2367 = vmatprep.subr.mxu0 0.0
    %2368 = vmatpush2.xpose.msra.mxu0 0.0
    %2369 = vmatprep.subr.mxu0 0.0
    %2370 = vmatpush2.xpose.msra.mxu0 0.0
    %2371 = vmatprep.subr.mxu0 0.0
    %2372 = vmatpush2.xpose.msra.mxu0 0.0
    %2373 = vmatprep.subr.mxu0 0.0
    %2374 = vmatpush2.xpose.msra.mxu0 0.0
    %2375 = vmatprep.subr.mxu0 0.0
    %2376 = vmatpush2.xpose.msra.mxu0 0.0
    %2377 = vmatprep.subr.mxu0 0.0
    %2378 = vmatpush2.xpose.msra.mxu0 0.0
    %2379 = vmatprep.subr.mxu0 0.0
    %2380 = vmatpush2.xpose.msra.mxu0 0.0
    %2381 = vmatprep.subr.mxu0 0.0
    %2382 = vmatpush2.xpose.msra.mxu0 0.0
    %2383 = vmatprep.subr.mxu0 0.0
    %2384 = vmatpush2.xpose.msra.mxu0 0.0
    %2385 = vmatprep.subr.mxu0 0.0
    %2386 = vmatpush2.xpose.msra.mxu0 0.0
    %2387 = vmatprep.subr.mxu0 0.0
    %2388 = vmatpush2.xpose.msra.mxu0 0.0
    %2389 = vmatprep.subr.mxu0 0.0
    %2390 = vmatpush2.xpose.msra.mxu0 0.0
    %2391 = vmatprep.subr.mxu0 0.0
    %2392 = vmatpush2.xpose.msra.mxu0 0.0
    %2393 = vmatprep.subr.mxu0 0.0
    %2394 = vmatpush2.xpose.msra.mxu0 0.0
    %2395 = vmatprep.subr.mxu0 0.0
    %2396 = vmatpush2.xpose.msra.mxu0 0.0
    %2397 = vmatprep.mubr.f32.mxu0 0.0
    %2398 = vmatmul.mubr.f32.gmra.mxu0 %v2328
    %v2399 = vpop.f32.mrf.mxu0
    %v2400 = vadd.f32 %v169, %v2399
    %v2401 = vpop.f32.mrf.mxu0
    %2402 = vdwg.mxu0
    %v2403 = vsel %vm371, %v2324, -inf
    %2404 = vmax.xlane.f32.xlu0 %v2403
    %v2405 = vpop.xlane.xlu0 %2404
    %v2406 = vsel %vm371, %v2400, -inf
    %2407 = vmax.xlane.f32.xlu0 %v2406
    %v2408 = vpop.xlane.xlu0 %2407
    %v2409 = vsub.f32 %v2324, %v2405
    %v2410 = vsub.f32 %v2400, %v2408
    %v2411 = vmul.f32 %v2409, 1.442695
    %v2412 = vpow.pop %v2411
    %v2413 = vmul.f32 %v2410, 1.442695
    %v2414 = vpow.pop %v2413
    %v2415 = vsel %vm371, %v2412, 0.0
    %2416 = vadd.xlane.f32.xlu0 %v2415
    %v2417 = vpop.xlane.xlu0 %2416
    %v2418 = vsel %vm371, %v2414, 0.0
    %2419 = vadd.xlane.f32.xlu0 %v2418
    %v2420 = vpop.xlane.xlu0 %2419
    %v2421 = vrcp.pop %v2417
    %v2422 = vrcp.pop %v2420
    %v2423 = vmul.f32 %v2412, %v2421
    %v2424 = vmul.f32 %v2414, %v2422
    %v2426 = vsel %vm371, %v2423, 0
    %2428 = vmatprep.subr.mxu0 0.0
    %2429 = vmatpush1.msra.mxu0 0.0
    %2430 = vmatprep.subr.mxu0 0.0
    %2431 = vmatpush1.msra.mxu0 0.0
    %2432 = vmatprep.subr.mxu0 0.0
    %2433 = vmatpush1.msra.mxu0 0.0
    %2434 = vmatprep.subr.mxu0 0.0
    %2435 = vmatpush1.msra.mxu0 0.0
    %2436 = vmatprep.subr.mxu0 0.0
    %2437 = vmatpush1.msra.mxu0 0.0
    %2438 = vmatprep.subr.mxu0 0.0
    %2439 = vmatpush1.msra.mxu0 0.0
    %2440 = vmatprep.subr.mxu0 0.0
    %2441 = vmatpush1.msra.mxu0 0.0
    %2442 = vmatprep.subr.mxu0 0.0
    %2443 = vmatpush1.msra.mxu0 0.0
    %2444 = vmatprep.subr.mxu0 0.0
    %2445 = vmatpush1.msra.mxu0 0.0
    %2446 = vmatprep.subr.mxu0 0.0
    %2447 = vmatpush1.msra.mxu0 0.0
    %2448 = vmatprep.subr.mxu0 0.0
    %2449 = vmatpush1.msra.mxu0 0.0
    %2450 = vmatprep.subr.mxu0 0.0
    %2451 = vmatpush1.msra.mxu0 0.0
    %2452 = vmatprep.subr.mxu0 0.0
    %2453 = vmatpush1.msra.mxu0 0.0
    %2454 = vmatprep.subr.mxu0 0.0
    %2455 = vmatpush1.msra.mxu0 0.0
    %2456 = vmatprep.subr.mxu0 0.0
    %2457 = vmatpush1.msra.mxu0 0.0
    %2458 = vmatprep.subr.mxu0 0.0
    %2459 = vmatpush1.msra.mxu0 %v2243
    %2460 = vmatprep.subr.mxu0 0.0
    %2461 = vmatpush2.msra.mxu0 0.0
    %2462 = vmatprep.subr.mxu0 0.0
    %2463 = vmatpush2.msra.mxu0 0.0
    %2464 = vmatprep.subr.mxu0 0.0
    %2465 = vmatpush2.msra.mxu0 0.0
    %2466 = vmatprep.subr.mxu0 0.0
    %2467 = vmatpush2.msra.mxu0 0.0
    %2468 = vmatprep.subr.mxu0 0.0
    %2469 = vmatpush2.msra.mxu0 0.0
    %2470 = vmatprep.subr.mxu0 0.0
    %2471 = vmatpush2.msra.mxu0 0.0
    %2472 = vmatprep.subr.mxu0 0.0
    %2473 = vmatpush2.msra.mxu0 0.0
    %2474 = vmatprep.subr.mxu0 0.0
    %2475 = vmatpush2.msra.mxu0 0.0
    %2476 = vmatprep.subr.mxu0 0.0
    %2477 = vmatpush2.msra.mxu0 0.0
    %2478 = vmatprep.subr.mxu0 0.0
    %2479 = vmatpush2.msra.mxu0 0.0
    %2480 = vmatprep.subr.mxu0 0.0
    %2481 = vmatpush2.msra.mxu0 0.0
    %2482 = vmatprep.subr.mxu0 0.0
    %2483 = vmatpush2.msra.mxu0 0.0
    %2484 = vmatprep.subr.mxu0 0.0
    %2485 = vmatpush2.msra.mxu0 0.0
    %2486 = vmatprep.subr.mxu0 0.0
    %2487 = vmatpush2.msra.mxu0 0.0
    %2488 = vmatprep.subr.mxu0 0.0
    %2489 = vmatpush2.msra.mxu0 0.0
    %2490 = vmatprep.subr.mxu0 0.0
    %2491 = vmatpush2.msra.mxu0 0.0
    %2492 = vmatprep.mubr.f32.mxu0 0.0
    %2493 = vmatmul.mubr.f32.gmra.mxu0 %v2426
    %v2494 = vpop.f32.mrf.mxu0
    %v2495 = vadd.f32 0.0, %v2494
    %v2496 = vpop.f32.mrf.mxu0
    %2497 = vdwg.mxu0
    %v2499 = vsel %vm371, %v2424, 0
    %2501 = vmatprep.subr.mxu0 0.0
    %2502 = vmatpush1.msra.mxu0 0.0
    %2503 = vmatprep.subr.mxu0 0.0
    %2504 = vmatpush1.msra.mxu0 0.0
    %2505 = vmatprep.subr.mxu0 0.0
    %2506 = vmatpush1.msra.mxu0 0.0
    %2507 = vmatprep.subr.mxu0 0.0
    %2508 = vmatpush1.msra.mxu0 0.0
    %2509 = vmatprep.subr.mxu0 0.0
    %2510 = vmatpush1.msra.mxu0 0.0
    %2511 = vmatprep.subr.mxu0 0.0
    %2512 = vmatpush1.msra.mxu0 0.0
    %2513 = vmatprep.subr.mxu0 0.0
    %2514 = vmatpush1.msra.mxu0 0.0
    %2515 = vmatprep.subr.mxu0 0.0
    %2516 = vmatpush1.msra.mxu0 0.0
    %2517 = vmatprep.subr.mxu0 0.0
    %2518 = vmatpush1.msra.mxu0 0.0
    %2519 = vmatprep.subr.mxu0 0.0
    %2520 = vmatpush1.msra.mxu0 0.0
    %2521 = vmatprep.subr.mxu0 0.0
    %2522 = vmatpush1.msra.mxu0 0.0
    %2523 = vmatprep.subr.mxu0 0.0
    %2524 = vmatpush1.msra.mxu0 0.0
    %2525 = vmatprep.subr.mxu0 0.0
    %2526 = vmatpush1.msra.mxu0 0.0
    %2527 = vmatprep.subr.mxu0 0.0
    %2528 = vmatpush1.msra.mxu0 0.0
    %2529 = vmatprep.subr.mxu0 0.0
    %2530 = vmatpush1.msra.mxu0 0.0
    %2531 = vmatprep.subr.mxu0 0.0
    %2532 = vmatpush1.msra.mxu0 %v2246
    %2533 = vmatprep.subr.mxu0 0.0
    %2534 = vmatpush2.msra.mxu0 0.0
    %2535 = vmatprep.subr.mxu0 0.0
    %2536 = vmatpush2.msra.mxu0 0.0
    %2537 = vmatprep.subr.mxu0 0.0
    %2538 = vmatpush2.msra.mxu0 0.0
    %2539 = vmatprep.subr.mxu0 0.0
    %2540 = vmatpush2.msra.mxu0 0.0
    %2541 = vmatprep.subr.mxu0 0.0
    %2542 = vmatpush2.msra.mxu0 0.0
    %2543 = vmatprep.subr.mxu0 0.0
    %2544 = vmatpush2.msra.mxu0 0.0
    %2545 = vmatprep.subr.mxu0 0.0
    %2546 = vmatpush2.msra.mxu0 0.0
    %2547 = vmatprep.subr.mxu0 0.0
    %2548 = vmatpush2.msra.mxu0 0.0
    %2549 = vmatprep.subr.mxu0 0.0
    %2550 = vmatpush2.msra.mxu0 0.0
    %2551 = vmatprep.subr.mxu0 0.0
    %2552 = vmatpush2.msra.mxu0 0.0
    %2553 = vmatprep.subr.mxu0 0.0
    %2554 = vmatpush2.msra.mxu0 0.0
    %2555 = vmatprep.subr.mxu0 0.0
    %2556 = vmatpush2.msra.mxu0 0.0
    %2557 = vmatprep.subr.mxu0 0.0
    %2558 = vmatpush2.msra.mxu0 0.0
    %2559 = vmatprep.subr.mxu0 0.0
    %2560 = vmatpush2.msra.mxu0 0.0
    %2561 = vmatprep.subr.mxu0 0.0
    %2562 = vmatpush2.msra.mxu0 0.0
    %2563 = vmatprep.subr.mxu0 0.0
    %2564 = vmatpush2.msra.mxu0 0.0
    %2565 = vmatprep.mubr.f32.mxu0 0.0
    %2566 = vmatmul.mubr.f32.gmra.mxu0 %v2499
    %v2567 = vpop.f32.mrf.mxu0
    %v2568 = vadd.f32 0.0, %v2567
    %v2569 = vpop.f32.mrf.mxu0
    %2570 = vdwg.mxu0
    %2571 = vst.msk [vmem:[#allocation2] sm:$0xff] %vm371, %v2495
    %2572 = vst.msk [vmem:[#allocation2 + $0x8] sm:$0xff] %vm371, %v2568
    %2573 = vrot.lane.b32.xlu0 %v2249, 120
    %v2574 = vpop.permute.xlu0 %2573
    %2575 = vrot.lane.b32.xlu0 %v2179, 120
    %v2576 = vpop.permute.xlu0 %2575
    %v2577 = vsel %vm371, %v2574, 0
    %v2579 = vsel %vm371, %v2576, 0
    %2581 = vmatprep.subr.mxu0 0.0
    %2582 = vmatpush1.xpose.msra.mxu0 0.0
    %2583 = vmatprep.subr.mxu0 0.0
    %2584 = vmatpush1.xpose.msra.mxu0 0.0
    %2585 = vmatprep.subr.mxu0 0.0
    %2586 = vmatpush1.xpose.msra.mxu0 0.0
    %2587 = vmatprep.subr.mxu0 0.0
    %2588 = vmatpush1.xpose.msra.mxu0 0.0
    %2589 = vmatprep.subr.mxu0 0.0
    %2590 = vmatpush1.xpose.msra.mxu0 0.0
    %2591 = vmatprep.subr.mxu0 0.0
    %2592 = vmatpush1.xpose.msra.mxu0 0.0
    %2593 = vmatprep.subr.mxu0 0.0
    %2594 = vmatpush1.xpose.msra.mxu0 0.0
    %2595 = vmatprep.subr.mxu0 0.0
    %2596 = vmatpush1.xpose.msra.mxu0 0.0
    %2597 = vmatprep.subr.mxu0 0.0
    %2598 = vmatpush1.xpose.msra.mxu0 0.0
    %2599 = vmatprep.subr.mxu0 0.0
    %2600 = vmatpush1.xpose.msra.mxu0 0.0
    %2601 = vmatprep.subr.mxu0 0.0
    %2602 = vmatpush1.xpose.msra.mxu0 0.0
    %2603 = vmatprep.subr.mxu0 0.0
    %2604 = vmatpush1.xpose.msra.mxu0 0.0
    %2605 = vmatprep.subr.mxu0 0.0
    %2606 = vmatpush1.xpose.msra.mxu0 0.0
    %2607 = vmatprep.subr.mxu0 0.0
    %2608 = vmatpush1.xpose.msra.mxu0 0.0
    %2609 = vmatprep.subr.mxu0 0.0
    %2610 = vmatpush1.xpose.msra.mxu0 0.0
    %2611 = vmatprep.subr.mxu0 0.0
    %2612 = vmatpush1.xpose.msra.mxu0 %v2579
    %2613 = vmatprep.subr.mxu0 0.0
    %2614 = vmatpush2.xpose.msra.mxu0 0.0
    %2615 = vmatprep.subr.mxu0 0.0
    %2616 = vmatpush2.xpose.msra.mxu0 0.0
    %2617 = vmatprep.subr.mxu0 0.0
    %2618 = vmatpush2.xpose.msra.mxu0 0.0
    %2619 = vmatprep.subr.mxu0 0.0
    %2620 = vmatpush2.xpose.msra.mxu0 0.0
    %2621 = vmatprep.subr.mxu0 0.0
    %2622 = vmatpush2.xpose.msra.mxu0 0.0
    %2623 = vmatprep.subr.mxu0 0.0
    %2624 = vmatpush2.xpose.msra.mxu0 0.0
    %2625 = vmatprep.subr.mxu0 0.0
    %2626 = vmatpush2.xpose.msra.mxu0 0.0
    %2627 = vmatprep.subr.mxu0 0.0
    %2628 = vmatpush2.xpose.msra.mxu0 0.0
    %2629 = vmatprep.subr.mxu0 0.0
    %2630 = vmatpush2.xpose.msra.mxu0 0.0
    %2631 = vmatprep.subr.mxu0 0.0
    %2632 = vmatpush2.xpose.msra.mxu0 0.0
    %2633 = vmatprep.subr.mxu0 0.0
    %2634 = vmatpush2.xpose.msra.mxu0 0.0
    %2635 = vmatprep.subr.mxu0 0.0
    %2636 = vmatpush2.xpose.msra.mxu0 0.0
    %2637 = vmatprep.subr.mxu0 0.0
    %2638 = vmatpush2.xpose.msra.mxu0 0.0
    %2639 = vmatprep.subr.mxu0 0.0
    %2640 = vmatpush2.xpose.msra.mxu0 0.0
    %2641 = vmatprep.subr.mxu0 0.0
    %2642 = vmatpush2.xpose.msra.mxu0 0.0
    %2643 = vmatprep.subr.mxu0 0.0
    %2644 = vmatpush2.xpose.msra.mxu0 0.0
    %2645 = vmatprep.mubr.f32.mxu0 0.0
    %2646 = vmatmul.mubr.f32.gmra.mxu0 %v2577
    %v2647 = vpop.f32.mrf.mxu0
    %v2648 = vadd.f32 %v165, %v2647
    %v2649 = vpop.f32.mrf.mxu0
    %2650 = vdwg.mxu0
    %2651 = vrot.lane.b32.xlu0 %v2250, 120
    %v2652 = vpop.permute.xlu0 %2651
    %2653 = vrot.lane.b32.xlu0 %v2182, 120
    %v2654 = vpop.permute.xlu0 %2653
    %v2655 = vsel %vm371, %v2652, 0
    %v2657 = vsel %vm371, %v2654, 0
    %2659 = vmatprep.subr.mxu0 0.0
    %2660 = vmatpush1.xpose.msra.mxu0 0.0
    %2661 = vmatprep.subr.mxu0 0.0
    %2662 = vmatpush1.xpose.msra.mxu0 0.0
    %2663 = vmatprep.subr.mxu0 0.0
    %2664 = vmatpush1.xpose.msra.mxu0 0.0
    %2665 = vmatprep.subr.mxu0 0.0
    %2666 = vmatpush1.xpose.msra.mxu0 0.0
    %2667 = vmatprep.subr.mxu0 0.0
    %2668 = vmatpush1.xpose.msra.mxu0 0.0
    %2669 = vmatprep.subr.mxu0 0.0
    %2670 = vmatpush1.xpose.msra.mxu0 0.0
    %2671 = vmatprep.subr.mxu0 0.0
    %2672 = vmatpush1.xpose.msra.mxu0 0.0
    %2673 = vmatprep.subr.mxu0 0.0
    %2674 = vmatpush1.xpose.msra.mxu0 0.0
    %2675 = vmatprep.subr.mxu0 0.0
    %2676 = vmatpush1.xpose.msra.mxu0 0.0
    %2677 = vmatprep.subr.mxu0 0.0
    %2678 = vmatpush1.xpose.msra.mxu0 0.0
    %2679 = vmatprep.subr.mxu0 0.0
    %2680 = vmatpush1.xpose.msra.mxu0 0.0
    %2681 = vmatprep.subr.mxu0 0.0
    %2682 = vmatpush1.xpose.msra.mxu0 0.0
    %2683 = vmatprep.subr.mxu0 0.0
    %2684 = vmatpush1.xpose.msra.mxu0 0.0
    %2685 = vmatprep.subr.mxu0 0.0
    %2686 = vmatpush1.xpose.msra.mxu0 0.0
    %2687 = vmatprep.subr.mxu0 0.0
    %2688 = vmatpush1.xpose.msra.mxu0 0.0
    %2689 = vmatprep.subr.mxu0 0.0
    %2690 = vmatpush1.xpose.msra.mxu0 %v2657
    %2691 = vmatprep.subr.mxu0 0.0
    %2692 = vmatpush2.xpose.msra.mxu0 0.0
    %2693 = vmatprep.subr.mxu0 0.0
    %2694 = vmatpush2.xpose.msra.mxu0 0.0
    %2695 = vmatprep.subr.mxu0 0.0
    %2696 = vmatpush2.xpose.msra.mxu0 0.0
    %2697 = vmatprep.subr.mxu0 0.0
    %2698 = vmatpush2.xpose.msra.mxu0 0.0
    %2699 = vmatprep.subr.mxu0 0.0
    %2700 = vmatpush2.xpose.msra.mxu0 0.0
    %2701 = vmatprep.subr.mxu0 0.0
    %2702 = vmatpush2.xpose.msra.mxu0 0.0
    %2703 = vmatprep.subr.mxu0 0.0
    %2704 = vmatpush2.xpose.msra.mxu0 0.0
    %2705 = vmatprep.subr.mxu0 0.0
    %2706 = vmatpush2.xpose.msra.mxu0 0.0
    %2707 = vmatprep.subr.mxu0 0.0
    %2708 = vmatpush2.xpose.msra.mxu0 0.0
    %2709 = vmatprep.subr.mxu0 0.0
    %2710 = vmatpush2.xpose.msra.mxu0 0.0
    %2711 = vmatprep.subr.mxu0 0.0
    %2712 = vmatpush2.xpose.msra.mxu0 0.0
    %2713 = vmatprep.subr.mxu0 0.0
    %2714 = vmatpush2.xpose.msra.mxu0 0.0
    %2715 = vmatprep.subr.mxu0 0.0
    %2716 = vmatpush2.xpose.msra.mxu0 0.0
    %2717 = vmatprep.subr.mxu0 0.0
    %2718 = vmatpush2.xpose.msra.mxu0 0.0
    %2719 = vmatprep.subr.mxu0 0.0
    %2720 = vmatpush2.xpose.msra.mxu0 0.0
    %2721 = vmatprep.subr.mxu0 0.0
    %2722 = vmatpush2.xpose.msra.mxu0 0.0
    %2723 = vmatprep.mubr.f32.mxu0 0.0
    %2724 = vmatmul.mubr.f32.gmra.mxu0 %v2655
    %v2725 = vpop.f32.mrf.mxu0
    %v2726 = vadd.f32 %v169, %v2725
    %v2727 = vpop.f32.mrf.mxu0
    %2728 = vdwg.mxu0
    %v2729 = vsel %vm371, %v2648, -inf
    %2730 = vmax.xlane.f32.xlu0 %v2729
    %v2731 = vpop.xlane.xlu0 %2730
    %v2732 = vsel %vm371, %v2726, -inf
    %2733 = vmax.xlane.f32.xlu0 %v2732
    %v2734 = vpop.xlane.xlu0 %2733
    %v2735 = vsub.f32 %v2648, %v2731
    %v2736 = vsub.f32 %v2726, %v2734
    %v2737 = vmul.f32 %v2735, 1.442695
    %v2738 = vpow.pop %v2737
    %v2739 = vmul.f32 %v2736, 1.442695
    %v2740 = vpow.pop %v2739
    %v2741 = vsel %vm371, %v2738, 0.0
    %2742 = vadd.xlane.f32.xlu0 %v2741
    %v2743 = vpop.xlane.xlu0 %2742
    %v2744 = vsel %vm371, %v2740, 0.0
    %2745 = vadd.xlane.f32.xlu0 %v2744
    %v2746 = vpop.xlane.xlu0 %2745
    %v2747 = vrcp.pop %v2743
    %v2748 = vrcp.pop %v2746
    %v2749 = vmul.f32 %v2738, %v2747
    %v2750 = vmul.f32 %v2740, %v2748
    %2752 = vrot.lane.b32.xlu0 %v2243, 120
    %v2753 = vpop.permute.xlu0 %2752
    %v2756 = vsel %vm371, %v2749, 0
    %2758 = vmatprep.subr.mxu0 0.0
    %2759 = vmatpush1.msra.mxu0 0.0
    %2760 = vmatprep.subr.mxu0 0.0
    %2761 = vmatpush1.msra.mxu0 0.0
    %2762 = vmatprep.subr.mxu0 0.0
    %2763 = vmatpush1.msra.mxu0 0.0
    %2764 = vmatprep.subr.mxu0 0.0
    %2765 = vmatpush1.msra.mxu0 0.0
    %2766 = vmatprep.subr.mxu0 0.0
    %2767 = vmatpush1.msra.mxu0 0.0
    %2768 = vmatprep.subr.mxu0 0.0
    %2769 = vmatpush1.msra.mxu0 0.0
    %2770 = vmatprep.subr.mxu0 0.0
    %2771 = vmatpush1.msra.mxu0 0.0
    %2772 = vmatprep.subr.mxu0 0.0
    %2773 = vmatpush1.msra.mxu0 0.0
    %2774 = vmatprep.subr.mxu0 0.0
    %2775 = vmatpush1.msra.mxu0 0.0
    %2776 = vmatprep.subr.mxu0 0.0
    %2777 = vmatpush1.msra.mxu0 0.0
    %2778 = vmatprep.subr.mxu0 0.0
    %2779 = vmatpush1.msra.mxu0 0.0
    %2780 = vmatprep.subr.mxu0 0.0
    %2781 = vmatpush1.msra.mxu0 0.0
    %2782 = vmatprep.subr.mxu0 0.0
    %2783 = vmatpush1.msra.mxu0 0.0
    %2784 = vmatprep.subr.mxu0 0.0
    %2785 = vmatpush1.msra.mxu0 0.0
    %2786 = vmatprep.subr.mxu0 0.0
    %2787 = vmatpush1.msra.mxu0 0.0
    %2788 = vmatprep.subr.mxu0 0.0
    %2789 = vmatpush1.msra.mxu0 %v2753
    %2790 = vmatprep.subr.mxu0 0.0
    %2791 = vmatpush2.msra.mxu0 0.0
    %2792 = vmatprep.subr.mxu0 0.0
    %2793 = vmatpush2.msra.mxu0 0.0
    %2794 = vmatprep.subr.mxu0 0.0
    %2795 = vmatpush2.msra.mxu0 0.0
    %2796 = vmatprep.subr.mxu0 0.0
    %2797 = vmatpush2.msra.mxu0 0.0
    %2798 = vmatprep.subr.mxu0 0.0
    %2799 = vmatpush2.msra.mxu0 0.0
    %2800 = vmatprep.subr.mxu0 0.0
    %2801 = vmatpush2.msra.mxu0 0.0
    %2802 = vmatprep.subr.mxu0 0.0
    %2803 = vmatpush2.msra.mxu0 0.0
    %2804 = vmatprep.subr.mxu0 0.0
    %2805 = vmatpush2.msra.mxu0 0.0
    %2806 = vmatprep.subr.mxu0 0.0
    %2807 = vmatpush2.msra.mxu0 0.0
    %2808 = vmatprep.subr.mxu0 0.0
    %2809 = vmatpush2.msra.mxu0 0.0
    %2810 = vmatprep.subr.mxu0 0.0
    %2811 = vmatpush2.msra.mxu0 0.0
    %2812 = vmatprep.subr.mxu0 0.0
    %2813 = vmatpush2.msra.mxu0 0.0
    %2814 = vmatprep.subr.mxu0 0.0
    %2815 = vmatpush2.msra.mxu0 0.0
    %2816 = vmatprep.subr.mxu0 0.0
    %2817 = vmatpush2.msra.mxu0 0.0
    %2818 = vmatprep.subr.mxu0 0.0
    %2819 = vmatpush2.msra.mxu0 0.0
    %2820 = vmatprep.subr.mxu0 0.0
    %2821 = vmatpush2.msra.mxu0 0.0
    %2822 = vmatprep.mubr.f32.mxu0 0.0
    %2823 = vmatmul.mubr.f32.gmra.mxu0 %v2756
    %v2824 = vpop.f32.mrf.mxu0
    %v2825 = vadd.f32 0.0, %v2824
    %v2826 = vpop.f32.mrf.mxu0
    %2827 = vdwg.mxu0
    %2829 = vrot.lane.b32.xlu0 %v2246, 120
    %v2830 = vpop.permute.xlu0 %2829
    %v2833 = vsel %vm371, %v2750, 0
    %2835 = vmatprep.subr.mxu0 0.0
    %2836 = vmatpush1.msra.mxu0 0.0
    %2837 = vmatprep.subr.mxu0 0.0
    %2838 = vmatpush1.msra.mxu0 0.0
    %2839 = vmatprep.subr.mxu0 0.0
    %2840 = vmatpush1.msra.mxu0 0.0
    %2841 = vmatprep.subr.mxu0 0.0
    %2842 = vmatpush1.msra.mxu0 0.0
    %2843 = vmatprep.subr.mxu0 0.0
    %2844 = vmatpush1.msra.mxu0 0.0
    %2845 = vmatprep.subr.mxu0 0.0
    %2846 = vmatpush1.msra.mxu0 0.0
    %2847 = vmatprep.subr.mxu0 0.0
    %2848 = vmatpush1.msra.mxu0 0.0
    %2849 = vmatprep.subr.mxu0 0.0
    %2850 = vmatpush1.msra.mxu0 0.0
    %2851 = vmatprep.subr.mxu0 0.0
    %2852 = vmatpush1.msra.mxu0 0.0
    %2853 = vmatprep.subr.mxu0 0.0
    %2854 = vmatpush1.msra.mxu0 0.0
    %2855 = vmatprep.subr.mxu0 0.0
    %2856 = vmatpush1.msra.mxu0 0.0
    %2857 = vmatprep.subr.mxu0 0.0
    %2858 = vmatpush1.msra.mxu0 0.0
    %2859 = vmatprep.subr.mxu0 0.0
    %2860 = vmatpush1.msra.mxu0 0.0
    %2861 = vmatprep.subr.mxu0 0.0
    %2862 = vmatpush1.msra.mxu0 0.0
    %2863 = vmatprep.subr.mxu0 0.0
    %2864 = vmatpush1.msra.mxu0 0.0
    %2865 = vmatprep.subr.mxu0 0.0
    %2866 = vmatpush1.msra.mxu0 %v2830
    %2867 = vmatprep.subr.mxu0 0.0
    %2868 = vmatpush2.msra.mxu0 0.0
    %2869 = vmatprep.subr.mxu0 0.0
    %2870 = vmatpush2.msra.mxu0 0.0
    %2871 = vmatprep.subr.mxu0 0.0
    %2872 = vmatpush2.msra.mxu0 0.0
    %2873 = vmatprep.subr.mxu0 0.0
    %2874 = vmatpush2.msra.mxu0 0.0
    %2875 = vmatprep.subr.mxu0 0.0
    %2876 = vmatpush2.msra.mxu0 0.0
    %2877 = vmatprep.subr.mxu0 0.0
    %2878 = vmatpush2.msra.mxu0 0.0
    %2879 = vmatprep.subr.mxu0 0.0
    %2880 = vmatpush2.msra.mxu0 0.0
    %2881 = vmatprep.subr.mxu0 0.0
    %2882 = vmatpush2.msra.mxu0 0.0
    %2883 = vmatprep.subr.mxu0 0.0
    %2884 = vmatpush2.msra.mxu0 0.0
    %2885 = vmatprep.subr.mxu0 0.0
    %2886 = vmatpush2.msra.mxu0 0.0
    %2887 = vmatprep.subr.mxu0 0.0
    %2888 = vmatpush2.msra.mxu0 0.0
    %2889 = vmatprep.subr.mxu0 0.0
    %2890 = vmatpush2.msra.mxu0 0.0
    %2891 = vmatprep.subr.mxu0 0.0
    %2892 = vmatpush2.msra.mxu0 0.0
    %2893 = vmatprep.subr.mxu0 0.0
    %2894 = vmatpush2.msra.mxu0 0.0
    %2895 = vmatprep.subr.mxu0 0.0
    %2896 = vmatpush2.msra.mxu0 0.0
    %2897 = vmatprep.subr.mxu0 0.0
    %2898 = vmatpush2.msra.mxu0 0.0
    %2899 = vmatprep.mubr.f32.mxu0 0.0
    %2900 = vmatmul.mubr.f32.gmra.mxu0 %v2833
    %v2901 = vpop.f32.mrf.mxu0
    %v2902 = vadd.f32 0.0, %v2901
    %v2903 = vpop.f32.mrf.mxu0
    %2904 = vdwg.mxu0
    %2907 = vrot.lane.b32.xlu0 %v2825, 8
    %v2908 = vpop.permute.xlu0 %2907
    %2909 = vrot.lane.b32.xlu0 %v2902, 8
    %v2910 = vpop.permute.xlu0 %2909
    %2913 = vst.msk [vmem:[#allocation2] sm:$0xff] %vm1034, %v2908
    %2914 = vst.msk [vmem:[#allocation2 + $0x8] sm:$0xff] %vm1034, %v2910
    %2915 = vrot.lane.b32.xlu0 %v2249, 112
    %v2916 = vpop.permute.xlu0 %2915
    %2917 = vrot.lane.b32.xlu0 %v2179, 112
    %v2918 = vpop.permute.xlu0 %2917
    %v2919 = vsel %vm371, %v2916, 0
    %v2921 = vsel %vm371, %v2918, 0
    %2923 = vmatprep.subr.mxu0 0.0
    %2924 = vmatpush1.xpose.msra.mxu0 0.0
    %2925 = vmatprep.subr.mxu0 0.0
    %2926 = vmatpush1.xpose.msra.mxu0 0.0
    %2927 = vmatprep.subr.mxu0 0.0
    %2928 = vmatpush1.xpose.msra.mxu0 0.0
    %2929 = vmatprep.subr.mxu0 0.0
    %2930 = vmatpush1.xpose.msra.mxu0 0.0
    %2931 = vmatprep.subr.mxu0 0.0
    %2932 = vmatpush1.xpose.msra.mxu0 0.0
    %2933 = vmatprep.subr.mxu0 0.0
    %2934 = vmatpush1.xpose.msra.mxu0 0.0
    %2935 = vmatprep.subr.mxu0 0.0
    %2936 = vmatpush1.xpose.msra.mxu0 0.0
    %2937 = vmatprep.subr.mxu0 0.0
    %2938 = vmatpush1.xpose.msra.mxu0 0.0
    %2939 = vmatprep.subr.mxu0 0.0
    %2940 = vmatpush1.xpose.msra.mxu0 0.0
    %2941 = vmatprep.subr.mxu0 0.0
    %2942 = vmatpush1.xpose.msra.mxu0 0.0
    %2943 = vmatprep.subr.mxu0 0.0
    %2944 = vmatpush1.xpose.msra.mxu0 0.0
    %2945 = vmatprep.subr.mxu0 0.0
    %2946 = vmatpush1.xpose.msra.mxu0 0.0
    %2947 = vmatprep.subr.mxu0 0.0
    %2948 = vmatpush1.xpose.msra.mxu0 0.0
    %2949 = vmatprep.subr.mxu0 0.0
    %2950 = vmatpush1.xpose.msra.mxu0 0.0
    %2951 = vmatprep.subr.mxu0 0.0
    %2952 = vmatpush1.xpose.msra.mxu0 0.0
    %2953 = vmatprep.subr.mxu0 0.0
    %2954 = vmatpush1.xpose.msra.mxu0 %v2921
    %2955 = vmatprep.subr.mxu0 0.0
    %2956 = vmatpush2.xpose.msra.mxu0 0.0
    %2957 = vmatprep.subr.mxu0 0.0
    %2958 = vmatpush2.xpose.msra.mxu0 0.0
    %2959 = vmatprep.subr.mxu0 0.0
    %2960 = vmatpush2.xpose.msra.mxu0 0.0
    %2961 = vmatprep.subr.mxu0 0.0
    %2962 = vmatpush2.xpose.msra.mxu0 0.0
    %2963 = vmatprep.subr.mxu0 0.0
    %2964 = vmatpush2.xpose.msra.mxu0 0.0
    %2965 = vmatprep.subr.mxu0 0.0
    %2966 = vmatpush2.xpose.msra.mxu0 0.0
    %2967 = vmatprep.subr.mxu0 0.0
    %2968 = vmatpush2.xpose.msra.mxu0 0.0
    %2969 = vmatprep.subr.mxu0 0.0
    %2970 = vmatpush2.xpose.msra.mxu0 0.0
    %2971 = vmatprep.subr.mxu0 0.0
    %2972 = vmatpush2.xpose.msra.mxu0 0.0
    %2973 = vmatprep.subr.mxu0 0.0
    %2974 = vmatpush2.xpose.msra.mxu0 0.0
    %2975 = vmatprep.subr.mxu0 0.0
    %2976 = vmatpush2.xpose.msra.mxu0 0.0
    %2977 = vmatprep.subr.mxu0 0.0
    %2978 = vmatpush2.xpose.msra.mxu0 0.0
    %2979 = vmatprep.subr.mxu0 0.0
    %2980 = vmatpush2.xpose.msra.mxu0 0.0
    %2981 = vmatprep.subr.mxu0 0.0
    %2982 = vmatpush2.xpose.msra.mxu0 0.0
    %2983 = vmatprep.subr.mxu0 0.0
    %2984 = vmatpush2.xpose.msra.mxu0 0.0
    %2985 = vmatprep.subr.mxu0 0.0
    %2986 = vmatpush2.xpose.msra.mxu0 0.0
    %2987 = vmatprep.mubr.f32.mxu0 0.0
    %2988 = vmatmul.mubr.f32.gmra.mxu0 %v2919
    %v2989 = vpop.f32.mrf.mxu0
    %v2990 = vadd.f32 %v165, %v2989
    %v2991 = vpop.f32.mrf.mxu0
    %2992 = vdwg.mxu0
    %2993 = vrot.lane.b32.xlu0 %v2250, 112
    %v2994 = vpop.permute.xlu0 %2993
    %2995 = vrot.lane.b32.xlu0 %v2182, 112
    %v2996 = vpop.permute.xlu0 %2995
    %v2997 = vsel %vm371, %v2994, 0
    %v2999 = vsel %vm371, %v2996, 0
    %3001 = vmatprep.subr.mxu0 0.0
    %3002 = vmatpush1.xpose.msra.mxu0 0.0
    %3003 = vmatprep.subr.mxu0 0.0
    %3004 = vmatpush1.xpose.msra.mxu0 0.0
    %3005 = vmatprep.subr.mxu0 0.0
    %3006 = vmatpush1.xpose.msra.mxu0 0.0
    %3007 = vmatprep.subr.mxu0 0.0
    %3008 = vmatpush1.xpose.msra.mxu0 0.0
    %3009 = vmatprep.subr.mxu0 0.0
    %3010 = vmatpush1.xpose.msra.mxu0 0.0
    %3011 = vmatprep.subr.mxu0 0.0
    %3012 = vmatpush1.xpose.msra.mxu0 0.0
    %3013 = vmatprep.subr.mxu0 0.0
    %3014 = vmatpush1.xpose.msra.mxu0 0.0
    %3015 = vmatprep.subr.mxu0 0.0
    %3016 = vmatpush1.xpose.msra.mxu0 0.0
    %3017 = vmatprep.subr.mxu0 0.0
    %3018 = vmatpush1.xpose.msra.mxu0 0.0
    %3019 = vmatprep.subr.mxu0 0.0
    %3020 = vmatpush1.xpose.msra.mxu0 0.0
    %3021 = vmatprep.subr.mxu0 0.0
    %3022 = vmatpush1.xpose.msra.mxu0 0.0
    %3023 = vmatprep.subr.mxu0 0.0
    %3024 = vmatpush1.xpose.msra.mxu0 0.0
    %3025 = vmatprep.subr.mxu0 0.0
    %3026 = vmatpush1.xpose.msra.mxu0 0.0
    %3027 = vmatprep.subr.mxu0 0.0
    %3028 = vmatpush1.xpose.msra.mxu0 0.0
    %3029 = vmatprep.subr.mxu0 0.0
    %3030 = vmatpush1.xpose.msra.mxu0 0.0
    %3031 = vmatprep.subr.mxu0 0.0
    %3032 = vmatpush1.xpose.msra.mxu0 %v2999
    %3033 = vmatprep.subr.mxu0 0.0
    %3034 = vmatpush2.xpose.msra.mxu0 0.0
    %3035 = vmatprep.subr.mxu0 0.0
    %3036 = vmatpush2.xpose.msra.mxu0 0.0
    %3037 = vmatprep.subr.mxu0 0.0
    %3038 = vmatpush2.xpose.msra.mxu0 0.0
    %3039 = vmatprep.subr.mxu0 0.0
    %3040 = vmatpush2.xpose.msra.mxu0 0.0
    %3041 = vmatprep.subr.mxu0 0.0
    %3042 = vmatpush2.xpose.msra.mxu0 0.0
    %3043 = vmatprep.subr.mxu0 0.0
    %3044 = vmatpush2.xpose.msra.mxu0 0.0
    %3045 = vmatprep.subr.mxu0 0.0
    %3046 = vmatpush2.xpose.msra.mxu0 0.0
    %3047 = vmatprep.subr.mxu0 0.0
    %3048 = vmatpush2.xpose.msra.mxu0 0.0
    %3049 = vmatprep.subr.mxu0 0.0
    %3050 = vmatpush2.xpose.msra.mxu0 0.0
    %3051 = vmatprep.subr.mxu0 0.0
    %3052 = vmatpush2.xpose.msra.mxu0 0.0
    %3053 = vmatprep.subr.mxu0 0.0
    %3054 = vmatpush2.xpose.msra.mxu0 0.0
    %3055 = vmatprep.subr.mxu0 0.0
    %3056 = vmatpush2.xpose.msra.mxu0 0.0
    %3057 = vmatprep.subr.mxu0 0.0
    %3058 = vmatpush2.xpose.msra.mxu0 0.0
    %3059 = vmatprep.subr.mxu0 0.0
    %3060 = vmatpush2.xpose.msra.mxu0 0.0
    %3061 = vmatprep.subr.mxu0 0.0
    %3062 = vmatpush2.xpose.msra.mxu0 0.0
    %3063 = vmatprep.subr.mxu0 0.0
    %3064 = vmatpush2.xpose.msra.mxu0 0.0
    %3065 = vmatprep.mubr.f32.mxu0 0.0
    %3066 = vmatmul.mubr.f32.gmra.mxu0 %v2997
    %v3067 = vpop.f32.mrf.mxu0
    %v3068 = vadd.f32 %v169, %v3067
    %v3069 = vpop.f32.mrf.mxu0
    %3070 = vdwg.mxu0
    %v3071 = vsel %vm371, %v2990, -inf
    %3072 = vmax.xlane.f32.xlu0 %v3071
    %v3073 = vpop.xlane.xlu0 %3072
    %v3074 = vsel %vm371, %v3068, -inf
    %3075 = vmax.xlane.f32.xlu0 %v3074
    %v3076 = vpop.xlane.xlu0 %3075
    %v3077 = vsub.f32 %v2990, %v3073
    %v3078 = vsub.f32 %v3068, %v3076
    %v3079 = vmul.f32 %v3077, 1.442695
    %v3080 = vpow.pop %v3079
    %v3081 = vmul.f32 %v3078, 1.442695
    %v3082 = vpow.pop %v3081
    %v3083 = vsel %vm371, %v3080, 0.0
    %3084 = vadd.xlane.f32.xlu0 %v3083
    %v3085 = vpop.xlane.xlu0 %3084
    %v3086 = vsel %vm371, %v3082, 0.0
    %3087 = vadd.xlane.f32.xlu0 %v3086
    %v3088 = vpop.xlane.xlu0 %3087
    %v3089 = vrcp.pop %v3085
    %v3090 = vrcp.pop %v3088
    %v3091 = vmul.f32 %v3080, %v3089
    %v3092 = vmul.f32 %v3082, %v3090
    %3093 = vrot.lane.b32.xlu0 %v2243, 112
    %v3094 = vpop.permute.xlu0 %3093
    %v3097 = vsel %vm371, %v3091, 0
    %3099 = vmatprep.subr.mxu0 0.0
    %3100 = vmatpush1.msra.mxu0 0.0
    %3101 = vmatprep.subr.mxu0 0.0
    %3102 = vmatpush1.msra.mxu0 0.0
    %3103 = vmatprep.subr.mxu0 0.0
    %3104 = vmatpush1.msra.mxu0 0.0
    %3105 = vmatprep.subr.mxu0 0.0
    %3106 = vmatpush1.msra.mxu0 0.0
    %3107 = vmatprep.subr.mxu0 0.0
    %3108 = vmatpush1.msra.mxu0 0.0
    %3109 = vmatprep.subr.mxu0 0.0
    %3110 = vmatpush1.msra.mxu0 0.0
    %3111 = vmatprep.subr.mxu0 0.0
    %3112 = vmatpush1.msra.mxu0 0.0
    %3113 = vmatprep.subr.mxu0 0.0
    %3114 = vmatpush1.msra.mxu0 0.0
    %3115 = vmatprep.subr.mxu0 0.0
    %3116 = vmatpush1.msra.mxu0 0.0
    %3117 = vmatprep.subr.mxu0 0.0
    %3118 = vmatpush1.msra.mxu0 0.0
    %3119 = vmatprep.subr.mxu0 0.0
    %3120 = vmatpush1.msra.mxu0 0.0
    %3121 = vmatprep.subr.mxu0 0.0
    %3122 = vmatpush1.msra.mxu0 0.0
    %3123 = vmatprep.subr.mxu0 0.0
    %3124 = vmatpush1.msra.mxu0 0.0
    %3125 = vmatprep.subr.mxu0 0.0
    %3126 = vmatpush1.msra.mxu0 0.0
    %3127 = vmatprep.subr.mxu0 0.0
    %3128 = vmatpush1.msra.mxu0 0.0
    %3129 = vmatprep.subr.mxu0 0.0
    %3130 = vmatpush1.msra.mxu0 %v3094
    %3131 = vmatprep.subr.mxu0 0.0
    %3132 = vmatpush2.msra.mxu0 0.0
    %3133 = vmatprep.subr.mxu0 0.0
    %3134 = vmatpush2.msra.mxu0 0.0
    %3135 = vmatprep.subr.mxu0 0.0
    %3136 = vmatpush2.msra.mxu0 0.0
    %3137 = vmatprep.subr.mxu0 0.0
    %3138 = vmatpush2.msra.mxu0 0.0
    %3139 = vmatprep.subr.mxu0 0.0
    %3140 = vmatpush2.msra.mxu0 0.0
    %3141 = vmatprep.subr.mxu0 0.0
    %3142 = vmatpush2.msra.mxu0 0.0
    %3143 = vmatprep.subr.mxu0 0.0
    %3144 = vmatpush2.msra.mxu0 0.0
    %3145 = vmatprep.subr.mxu0 0.0
    %3146 = vmatpush2.msra.mxu0 0.0
    %3147 = vmatprep.subr.mxu0 0.0
    %3148 = vmatpush2.msra.mxu0 0.0
    %3149 = vmatprep.subr.mxu0 0.0
    %3150 = vmatpush2.msra.mxu0 0.0
    %3151 = vmatprep.subr.mxu0 0.0
    %3152 = vmatpush2.msra.mxu0 0.0
    %3153 = vmatprep.subr.mxu0 0.0
    %3154 = vmatpush2.msra.mxu0 0.0
    %3155 = vmatprep.subr.mxu0 0.0
    %3156 = vmatpush2.msra.mxu0 0.0
    %3157 = vmatprep.subr.mxu0 0.0
    %3158 = vmatpush2.msra.mxu0 0.0
    %3159 = vmatprep.subr.mxu0 0.0
    %3160 = vmatpush2.msra.mxu0 0.0
    %3161 = vmatprep.subr.mxu0 0.0
    %3162 = vmatpush2.msra.mxu0 0.0
    %3163 = vmatprep.mubr.f32.mxu0 0.0
    %3164 = vmatmul.mubr.f32.gmra.mxu0 %v3097
    %v3165 = vpop.f32.mrf.mxu0
    %v3166 = vadd.f32 0.0, %v3165
    %v3167 = vpop.f32.mrf.mxu0
    %3168 = vdwg.mxu0
    %3169 = vrot.lane.b32.xlu0 %v2246, 112
    %v3170 = vpop.permute.xlu0 %3169
    %v3173 = vsel %vm371, %v3092, 0
    %3175 = vmatprep.subr.mxu0 0.0
    %3176 = vmatpush1.msra.mxu0 0.0
    %3177 = vmatprep.subr.mxu0 0.0
    %3178 = vmatpush1.msra.mxu0 0.0
    %3179 = vmatprep.subr.mxu0 0.0
    %3180 = vmatpush1.msra.mxu0 0.0
    %3181 = vmatprep.subr.mxu0 0.0
    %3182 = vmatpush1.msra.mxu0 0.0
    %3183 = vmatprep.subr.mxu0 0.0
    %3184 = vmatpush1.msra.mxu0 0.0
    %3185 = vmatprep.subr.mxu0 0.0
    %3186 = vmatpush1.msra.mxu0 0.0
    %3187 = vmatprep.subr.mxu0 0.0
    %3188 = vmatpush1.msra.mxu0 0.0
    %3189 = vmatprep.subr.mxu0 0.0
    %3190 = vmatpush1.msra.mxu0 0.0
    %3191 = vmatprep.subr.mxu0 0.0
    %3192 = vmatpush1.msra.mxu0 0.0
    %3193 = vmatprep.subr.mxu0 0.0
    %3194 = vmatpush1.msra.mxu0 0.0
    %3195 = vmatprep.subr.mxu0 0.0
    %3196 = vmatpush1.msra.mxu0 0.0
    %3197 = vmatprep.subr.mxu0 0.0
    %3198 = vmatpush1.msra.mxu0 0.0
    %3199 = vmatprep.subr.mxu0 0.0
    %3200 = vmatpush1.msra.mxu0 0.0
    %3201 = vmatprep.subr.mxu0 0.0
    %3202 = vmatpush1.msra.mxu0 0.0
    %3203 = vmatprep.subr.mxu0 0.0
    %3204 = vmatpush1.msra.mxu0 0.0
    %3205 = vmatprep.subr.mxu0 0.0
    %3206 = vmatpush1.msra.mxu0 %v3170
    %3207 = vmatprep.subr.mxu0 0.0
    %3208 = vmatpush2.msra.mxu0 0.0
    %3209 = vmatprep.subr.mxu0 0.0
    %3210 = vmatpush2.msra.mxu0 0.0
    %3211 = vmatprep.subr.mxu0 0.0
    %3212 = vmatpush2.msra.mxu0 0.0
    %3213 = vmatprep.subr.mxu0 0.0
    %3214 = vmatpush2.msra.mxu0 0.0
    %3215 = vmatprep.subr.mxu0 0.0
    %3216 = vmatpush2.msra.mxu0 0.0
    %3217 = vmatprep.subr.mxu0 0.0
    %3218 = vmatpush2.msra.mxu0 0.0
    %3219 = vmatprep.subr.mxu0 0.0
    %3220 = vmatpush2.msra.mxu0 0.0
    %3221 = vmatprep.subr.mxu0 0.0
    %3222 = vmatpush2.msra.mxu0 0.0
    %3223 = vmatprep.subr.mxu0 0.0
    %3224 = vmatpush2.msra.mxu0 0.0
    %3225 = vmatprep.subr.mxu0 0.0
    %3226 = vmatpush2.msra.mxu0 0.0
    %3227 = vmatprep.subr.mxu0 0.0
    %3228 = vmatpush2.msra.mxu0 0.0
    %3229 = vmatprep.subr.mxu0 0.0
    %3230 = vmatpush2.msra.mxu0 0.0
    %3231 = vmatprep.subr.mxu0 0.0
    %3232 = vmatpush2.msra.mxu0 0.0
    %3233 = vmatprep.subr.mxu0 0.0
    %3234 = vmatpush2.msra.mxu0 0.0
    %3235 = vmatprep.subr.mxu0 0.0
    %3236 = vmatpush2.msra.mxu0 0.0
    %3237 = vmatprep.subr.mxu0 0.0
    %3238 = vmatpush2.msra.mxu0 0.0
    %3239 = vmatprep.mubr.f32.mxu0 0.0
    %3240 = vmatmul.mubr.f32.gmra.mxu0 %v3173
    %v3241 = vpop.f32.mrf.mxu0
    %v3242 = vadd.f32 0.0, %v3241
    %v3243 = vpop.f32.mrf.mxu0
    %3244 = vdwg.mxu0
    %3247 = vrot.lane.b32.xlu0 %v3166, 16
    %v3248 = vpop.permute.xlu0 %3247
    %3249 = vrot.lane.b32.xlu0 %v3242, 16
    %v3250 = vpop.permute.xlu0 %3249
    %3253 = vst.msk [vmem:[#allocation2] sm:$0xff] %vm1375, %v3248
    %3254 = vst.msk [vmem:[#allocation2 + $0x8] sm:$0xff] %vm1375, %v3250
    %3255 = vrot.lane.b32.xlu0 %v2249, 104
    %v3256 = vpop.permute.xlu0 %3255
    %3257 = vrot.lane.b32.xlu0 %v2179, 104
    %v3258 = vpop.permute.xlu0 %3257
    %v3259 = vsel %vm371, %v3256, 0
    %v3261 = vsel %vm371, %v3258, 0
    %3263 = vmatprep.subr.mxu0 0.0
    %3264 = vmatpush1.xpose.msra.mxu0 0.0
    %3265 = vmatprep.subr.mxu0 0.0
    %3266 = vmatpush1.xpose.msra.mxu0 0.0
    %3267 = vmatprep.subr.mxu0 0.0
    %3268 = vmatpush1.xpose.msra.mxu0 0.0
    %3269 = vmatprep.subr.mxu0 0.0
    %3270 = vmatpush1.xpose.msra.mxu0 0.0
    %3271 = vmatprep.subr.mxu0 0.0
    %3272 = vmatpush1.xpose.msra.mxu0 0.0
    %3273 = vmatprep.subr.mxu0 0.0
    %3274 = vmatpush1.xpose.msra.mxu0 0.0
    %3275 = vmatprep.subr.mxu0 0.0
    %3276 = vmatpush1.xpose.msra.mxu0 0.0
    %3277 = vmatprep.subr.mxu0 0.0
    %3278 = vmatpush1.xpose.msra.mxu0 0.0
    %3279 = vmatprep.subr.mxu0 0.0
    %3280 = vmatpush1.xpose.msra.mxu0 0.0
    %3281 = vmatprep.subr.mxu0 0.0
    %3282 = vmatpush1.xpose.msra.mxu0 0.0
    %3283 = vmatprep.subr.mxu0 0.0
    %3284 = vmatpush1.xpose.msra.mxu0 0.0
    %3285 = vmatprep.subr.mxu0 0.0
    %3286 = vmatpush1.xpose.msra.mxu0 0.0
    %3287 = vmatprep.subr.mxu0 0.0
    %3288 = vmatpush1.xpose.msra.mxu0 0.0
    %3289 = vmatprep.subr.mxu0 0.0
    %3290 = vmatpush1.xpose.msra.mxu0 0.0
    %3291 = vmatprep.subr.mxu0 0.0
    %3292 = vmatpush1.xpose.msra.mxu0 0.0
    %3293 = vmatprep.subr.mxu0 0.0
    %3294 = vmatpush1.xpose.msra.mxu0 %v3261
    %3295 = vmatprep.subr.mxu0 0.0
    %3296 = vmatpush2.xpose.msra.mxu0 0.0
    %3297 = vmatprep.subr.mxu0 0.0
    %3298 = vmatpush2.xpose.msra.mxu0 0.0
    %3299 = vmatprep.subr.mxu0 0.0
    %3300 = vmatpush2.xpose.msra.mxu0 0.0
    %3301 = vmatprep.subr.mxu0 0.0
    %3302 = vmatpush2.xpose.msra.mxu0 0.0
    %3303 = vmatprep.subr.mxu0 0.0
    %3304 = vmatpush2.xpose.msra.mxu0 0.0
    %3305 = vmatprep.subr.mxu0 0.0
    %3306 = vmatpush2.xpose.msra.mxu0 0.0
    %3307 = vmatprep.subr.mxu0 0.0
    %3308 = vmatpush2.xpose.msra.mxu0 0.0
    %3309 = vmatprep.subr.mxu0 0.0
    %3310 = vmatpush2.xpose.msra.mxu0 0.0
    %3311 = vmatprep.subr.mxu0 0.0
    %3312 = vmatpush2.xpose.msra.mxu0 0.0
    %3313 = vmatprep.subr.mxu0 0.0
    %3314 = vmatpush2.xpose.msra.mxu0 0.0
    %3315 = vmatprep.subr.mxu0 0.0
    %3316 = vmatpush2.xpose.msra.mxu0 0.0
    %3317 = vmatprep.subr.mxu0 0.0
    %3318 = vmatpush2.xpose.msra.mxu0 0.0
    %3319 = vmatprep.subr.mxu0 0.0
    %3320 = vmatpush2.xpose.msra.mxu0 0.0
    %3321 = vmatprep.subr.mxu0 0.0
    %3322 = vmatpush2.xpose.msra.mxu0 0.0
    %3323 = vmatprep.subr.mxu0 0.0
    %3324 = vmatpush2.xpose.msra.mxu0 0.0
    %3325 = vmatprep.subr.mxu0 0.0
    %3326 = vmatpush2.xpose.msra.mxu0 0.0
    %3327 = vmatprep.mubr.f32.mxu0 0.0
    %3328 = vmatmul.mubr.f32.gmra.mxu0 %v3259
    %v3329 = vpop.f32.mrf.mxu0
    %v3330 = vadd.f32 %v165, %v3329
    %v3331 = vpop.f32.mrf.mxu0
    %3332 = vdwg.mxu0
    %3333 = vrot.lane.b32.xlu0 %v2250, 104
    %v3334 = vpop.permute.xlu0 %3333
    %3335 = vrot.lane.b32.xlu0 %v2182, 104
    %v3336 = vpop.permute.xlu0 %3335
    %v3337 = vsel %vm371, %v3334, 0
    %v3339 = vsel %vm371, %v3336, 0
    %3341 = vmatprep.subr.mxu0 0.0
    %3342 = vmatpush1.xpose.msra.mxu0 0.0
    %3343 = vmatprep.subr.mxu0 0.0
    %3344 = vmatpush1.xpose.msra.mxu0 0.0
    %3345 = vmatprep.subr.mxu0 0.0
    %3346 = vmatpush1.xpose.msra.mxu0 0.0
    %3347 = vmatprep.subr.mxu0 0.0
    %3348 = vmatpush1.xpose.msra.mxu0 0.0
    %3349 = vmatprep.subr.mxu0 0.0
    %3350 = vmatpush1.xpose.msra.mxu0 0.0
    %3351 = vmatprep.subr.mxu0 0.0
    %3352 = vmatpush1.xpose.msra.mxu0 0.0
    %3353 = vmatprep.subr.mxu0 0.0
    %3354 = vmatpush1.xpose.msra.mxu0 0.0
    %3355 = vmatprep.subr.mxu0 0.0
    %3356 = vmatpush1.xpose.msra.mxu0 0.0
    %3357 = vmatprep.subr.mxu0 0.0
    %3358 = vmatpush1.xpose.msra.mxu0 0.0
    %3359 = vmatprep.subr.mxu0 0.0
    %3360 = vmatpush1.xpose.msra.mxu0 0.0
    %3361 = vmatprep.subr.mxu0 0.0
    %3362 = vmatpush1.xpose.msra.mxu0 0.0
    %3363 = vmatprep.subr.mxu0 0.0
    %3364 = vmatpush1.xpose.msra.mxu0 0.0
    %3365 = vmatprep.subr.mxu0 0.0
    %3366 = vmatpush1.xpose.msra.mxu0 0.0
    %3367 = vmatprep.subr.mxu0 0.0
    %3368 = vmatpush1.xpose.msra.mxu0 0.0
    %3369 = vmatprep.subr.mxu0 0.0
    %3370 = vmatpush1.xpose.msra.mxu0 0.0
    %3371 = vmatprep.subr.mxu0 0.0
    %3372 = vmatpush1.xpose.msra.mxu0 %v3339
    %3373 = vmatprep.subr.mxu0 0.0
    %3374 = vmatpush2.xpose.msra.mxu0 0.0
    %3375 = vmatprep.subr.mxu0 0.0
    %3376 = vmatpush2.xpose.msra.mxu0 0.0
    %3377 = vmatprep.subr.mxu0 0.0
    %3378 = vmatpush2.xpose.msra.mxu0 0.0
    %3379 = vmatprep.subr.mxu0 0.0
    %3380 = vmatpush2.xpose.msra.mxu0 0.0
    %3381 = vmatprep.subr.mxu0 0.0
    %3382 = vmatpush2.xpose.msra.mxu0 0.0
    %3383 = vmatprep.subr.mxu0 0.0
    %3384 = vmatpush2.xpose.msra.mxu0 0.0
    %3385 = vmatprep.subr.mxu0 0.0
    %3386 = vmatpush2.xpose.msra.mxu0 0.0
    %3387 = vmatprep.subr.mxu0 0.0
    %3388 = vmatpush2.xpose.msra.mxu0 0.0
    %3389 = vmatprep.subr.mxu0 0.0
    %3390 = vmatpush2.xpose.msra.mxu0 0.0
    %3391 = vmatprep.subr.mxu0 0.0
    %3392 = vmatpush2.xpose.msra.mxu0 0.0
    %3393 = vmatprep.subr.mxu0 0.0
    %3394 = vmatpush2.xpose.msra.mxu0 0.0
    %3395 = vmatprep.subr.mxu0 0.0
    %3396 = vmatpush2.xpose.msra.mxu0 0.0
    %3397 = vmatprep.subr.mxu0 0.0
    %3398 = vmatpush2.xpose.msra.mxu0 0.0
    %3399 = vmatprep.subr.mxu0 0.0
    %3400 = vmatpush2.xpose.msra.mxu0 0.0
    %3401 = vmatprep.subr.mxu0 0.0
    %3402 = vmatpush2.xpose.msra.mxu0 0.0
    %3403 = vmatprep.subr.mxu0 0.0
    %3404 = vmatpush2.xpose.msra.mxu0 0.0
    %3405 = vmatprep.mubr.f32.mxu0 0.0
    %3406 = vmatmul.mubr.f32.gmra.mxu0 %v3337
    %v3407 = vpop.f32.mrf.mxu0
    %v3408 = vadd.f32 %v169, %v3407
    %v3409 = vpop.f32.mrf.mxu0
    %3410 = vdwg.mxu0
    %v3411 = vsel %vm371, %v3330, -inf
    %3412 = vmax.xlane.f32.xlu0 %v3411
    %v3413 = vpop.xlane.xlu0 %3412
    %v3414 = vsel %vm371, %v3408, -inf
    %3415 = vmax.xlane.f32.xlu0 %v3414
    %v3416 = vpop.xlane.xlu0 %3415
    %v3417 = vsub.f32 %v3330, %v3413
    %v3418 = vsub.f32 %v3408, %v3416
    %v3419 = vmul.f32 %v3417, 1.442695
    %v3420 = vpow.pop %v3419
    %v3421 = vmul.f32 %v3418, 1.442695
    %v3422 = vpow.pop %v3421
    %v3423 = vsel %vm371, %v3420, 0.0
    %3424 = vadd.xlane.f32.xlu0 %v3423
    %v3425 = vpop.xlane.xlu0 %3424
    %v3426 = vsel %vm371, %v3422, 0.0
    %3427 = vadd.xlane.f32.xlu0 %v3426
    %v3428 = vpop.xlane.xlu0 %3427
    %v3429 = vrcp.pop %v3425
    %v3430 = vrcp.pop %v3428
    %v3431 = vmul.f32 %v3420, %v3429
    %v3432 = vmul.f32 %v3422, %v3430
    %3433 = vrot.lane.b32.xlu0 %v2243, 104
    %v3434 = vpop.permute.xlu0 %3433
    %v3437 = vsel %vm371, %v3431, 0
    %3439 = vmatprep.subr.mxu0 0.0
    %3440 = vmatpush1.msra.mxu0 0.0
    %3441 = vmatprep.subr.mxu0 0.0
    %3442 = vmatpush1.msra.mxu0 0.0
    %3443 = vmatprep.subr.mxu0 0.0
    %3444 = vmatpush1.msra.mxu0 0.0
    %3445 = vmatprep.subr.mxu0 0.0
    %3446 = vmatpush1.msra.mxu0 0.0
    %3447 = vmatprep.subr.mxu0 0.0
    %3448 = vmatpush1.msra.mxu0 0.0
    %3449 = vmatprep.subr.mxu0 0.0
    %3450 = vmatpush1.msra.mxu0 0.0
    %3451 = vmatprep.subr.mxu0 0.0
    %3452 = vmatpush1.msra.mxu0 0.0
    %3453 = vmatprep.subr.mxu0 0.0
    %3454 = vmatpush1.msra.mxu0 0.0
    %3455 = vmatprep.subr.mxu0 0.0
    %3456 = vmatpush1.msra.mxu0 0.0
    %3457 = vmatprep.subr.mxu0 0.0
    %3458 = vmatpush1.msra.mxu0 0.0
    %3459 = vmatprep.subr.mxu0 0.0
    %3460 = vmatpush1.msra.mxu0 0.0
    %3461 = vmatprep.subr.mxu0 0.0
    %3462 = vmatpush1.msra.mxu0 0.0
    %3463 = vmatprep.subr.mxu0 0.0
    %3464 = vmatpush1.msra.mxu0 0.0
    %3465 = vmatprep.subr.mxu0 0.0
    %3466 = vmatpush1.msra.mxu0 0.0
    %3467 = vmatprep.subr.mxu0 0.0
    %3468 = vmatpush1.msra.mxu0 0.0
    %3469 = vmatprep.subr.mxu0 0.0
    %3470 = vmatpush1.msra.mxu0 %v3434
    %3471 = vmatprep.subr.mxu0 0.0
    %3472 = vmatpush2.msra.mxu0 0.0
    %3473 = vmatprep.subr.mxu0 0.0
    %3474 = vmatpush2.msra.mxu0 0.0
    %3475 = vmatprep.subr.mxu0 0.0
    %3476 = vmatpush2.msra.mxu0 0.0
    %3477 = vmatprep.subr.mxu0 0.0
    %3478 = vmatpush2.msra.mxu0 0.0
    %3479 = vmatprep.subr.mxu0 0.0
    %3480 = vmatpush2.msra.mxu0 0.0
    %3481 = vmatprep.subr.mxu0 0.0
    %3482 = vmatpush2.msra.mxu0 0.0
    %3483 = vmatprep.subr.mxu0 0.0
    %3484 = vmatpush2.msra.mxu0 0.0
    %3485 = vmatprep.subr.mxu0 0.0
    %3486 = vmatpush2.msra.mxu0 0.0
    %3487 = vmatprep.subr.mxu0 0.0
    %3488 = vmatpush2.msra.mxu0 0.0
    %3489 = vmatprep.subr.mxu0 0.0
    %3490 = vmatpush2.msra.mxu0 0.0
    %3491 = vmatprep.subr.mxu0 0.0
    %3492 = vmatpush2.msra.mxu0 0.0
    %3493 = vmatprep.subr.mxu0 0.0
    %3494 = vmatpush2.msra.mxu0 0.0
    %3495 = vmatprep.subr.mxu0 0.0
    %3496 = vmatpush2.msra.mxu0 0.0
    %3497 = vmatprep.subr.mxu0 0.0
    %3498 = vmatpush2.msra.mxu0 0.0
    %3499 = vmatprep.subr.mxu0 0.0
    %3500 = vmatpush2.msra.mxu0 0.0
    %3501 = vmatprep.subr.mxu0 0.0
    %3502 = vmatpush2.msra.mxu0 0.0
    %3503 = vmatprep.mubr.f32.mxu0 0.0
    %3504 = vmatmul.mubr.f32.gmra.mxu0 %v3437
    %v3505 = vpop.f32.mrf.mxu0
    %v3506 = vadd.f32 0.0, %v3505
    %v3507 = vpop.f32.mrf.mxu0
    %3508 = vdwg.mxu0
    %3509 = vrot.lane.b32.xlu0 %v2246, 104
    %v3510 = vpop.permute.xlu0 %3509
    %v3513 = vsel %vm371, %v3432, 0
    %3515 = vmatprep.subr.mxu0 0.0
    %3516 = vmatpush1.msra.mxu0 0.0
    %3517 = vmatprep.subr.mxu0 0.0
    %3518 = vmatpush1.msra.mxu0 0.0
    %3519 = vmatprep.subr.mxu0 0.0
    %3520 = vmatpush1.msra.mxu0 0.0
    %3521 = vmatprep.subr.mxu0 0.0
    %3522 = vmatpush1.msra.mxu0 0.0
    %3523 = vmatprep.subr.mxu0 0.0
    %3524 = vmatpush1.msra.mxu0 0.0
    %3525 = vmatprep.subr.mxu0 0.0
    %3526 = vmatpush1.msra.mxu0 0.0
    %3527 = vmatprep.subr.mxu0 0.0
    %3528 = vmatpush1.msra.mxu0 0.0
    %3529 = vmatprep.subr.mxu0 0.0
    %3530 = vmatpush1.msra.mxu0 0.0
    %3531 = vmatprep.subr.mxu0 0.0
    %3532 = vmatpush1.msra.mxu0 0.0
    %3533 = vmatprep.subr.mxu0 0.0
    %3534 = vmatpush1.msra.mxu0 0.0
    %3535 = vmatprep.subr.mxu0 0.0
    %3536 = vmatpush1.msra.mxu0 0.0
    %3537 = vmatprep.subr.mxu0 0.0
    %3538 = vmatpush1.msra.mxu0 0.0
    %3539 = vmatprep.subr.mxu0 0.0
    %3540 = vmatpush1.msra.mxu0 0.0
    %3541 = vmatprep.subr.mxu0 0.0
    %3542 = vmatpush1.msra.mxu0 0.0
    %3543 = vmatprep.subr.mxu0 0.0
    %3544 = vmatpush1.msra.mxu0 0.0
    %3545 = vmatprep.subr.mxu0 0.0
    %3546 = vmatpush1.msra.mxu0 %v3510
    %3547 = vmatprep.subr.mxu0 0.0
    %3548 = vmatpush2.msra.mxu0 0.0
    %3549 = vmatprep.subr.mxu0 0.0
    %3550 = vmatpush2.msra.mxu0 0.0
    %3551 = vmatprep.subr.mxu0 0.0
    %3552 = vmatpush2.msra.mxu0 0.0
    %3553 = vmatprep.subr.mxu0 0.0
    %3554 = vmatpush2.msra.mxu0 0.0
    %3555 = vmatprep.subr.mxu0 0.0
    %3556 = vmatpush2.msra.mxu0 0.0
    %3557 = vmatprep.subr.mxu0 0.0
    %3558 = vmatpush2.msra.mxu0 0.0
    %3559 = vmatprep.subr.mxu0 0.0
    %3560 = vmatpush2.msra.mxu0 0.0
    %3561 = vmatprep.subr.mxu0 0.0
    %3562 = vmatpush2.msra.mxu0 0.0
    %3563 = vmatprep.subr.mxu0 0.0
    %3564 = vmatpush2.msra.mxu0 0.0
    %3565 = vmatprep.subr.mxu0 0.0
    %3566 = vmatpush2.msra.mxu0 0.0
    %3567 = vmatprep.subr.mxu0 0.0
    %3568 = vmatpush2.msra.mxu0 0.0
    %3569 = vmatprep.subr.mxu0 0.0
    %3570 = vmatpush2.msra.mxu0 0.0
    %3571 = vmatprep.subr.mxu0 0.0
    %3572 = vmatpush2.msra.mxu0 0.0
    %3573 = vmatprep.subr.mxu0 0.0
    %3574 = vmatpush2.msra.mxu0 0.0
    %3575 = vmatprep.subr.mxu0 0.0
    %3576 = vmatpush2.msra.mxu0 0.0
    %3577 = vmatprep.subr.mxu0 0.0
    %3578 = vmatpush2.msra.mxu0 0.0
    %3579 = vmatprep.mubr.f32.mxu0 0.0
    %3580 = vmatmul.mubr.f32.gmra.mxu0 %v3513
    %v3581 = vpop.f32.mrf.mxu0
    %v3582 = vadd.f32 0.0, %v3581
    %v3583 = vpop.f32.mrf.mxu0
    %3584 = vdwg.mxu0
    %3587 = vrot.lane.b32.xlu0 %v3506, 24
    %v3588 = vpop.permute.xlu0 %3587
    %3589 = vrot.lane.b32.xlu0 %v3582, 24
    %v3590 = vpop.permute.xlu0 %3589
    %3593 = vst.msk [vmem:[#allocation2] sm:$0xff] %vm1716, %v3588
    %3594 = vst.msk [vmem:[#allocation2 + $0x8] sm:$0xff] %vm1716, %v3590
    %v3595 = vld [vmem:[#allocation2] sm:$0xff]
    %v3596 = vld [vmem:[#allocation2 + $0x8] sm:$0xff]
    %v3597 = vpack.c.bf16 %v3596, %v3595
    %v3598 = vld [vmem:[%s51] sm:$0xf]
    %v3599 = vld [vmem:[%s51 + $0x4] sm:$0xf]
    %v3600 = vld [vmem:[%s51 + $0x8] sm:$0xf]
    %v3601 = vld [vmem:[%s51 + $0xc] sm:$0xf]
    %v3602 = vld [vmem:[%s53] sm:$0x1]
    %v3604 = vlaneseq
    %v3605 = vshrl.u32 %v3604, 7
    %v3606 = vsub.s32 0, %v3605
    %v3607 = vrot.slane %v3602, %v3606
    %v3613 = vunpack.c.l.b16 %v3598
    %v3614 = vunpack.c.l.b16 %v3599
    %v3615 = vunpack.c.l.b16 %v3600
    %v3616 = vunpack.c.l.b16 %v3601
    %v3617 = vpack.c.b16 %v3614, %v3613
    %v3618 = vpack.c.b16 %v3616, %v3615
    %v3622 = vsel %vm196, %v3597, 0
    %3624 = vmatprep.subr.bf16.mxu0 0
    %3625 = vmatpush1.bf16.msra.mxu0 0
    %3626 = vmatprep.subr.bf16.mxu0 0
    %3627 = vmatpush1.bf16.msra.mxu0 0
    %3628 = vmatprep.subr.bf16.mxu0 0
    %3629 = vmatpush1.bf16.msra.mxu0 0
    %3630 = vmatprep.subr.bf16.mxu0 0
    %3631 = vmatpush1.bf16.msra.mxu0 0
    %3632 = vmatprep.subr.bf16.mxu0 0
    %3633 = vmatpush1.bf16.msra.mxu0 0
    %3634 = vmatprep.subr.bf16.mxu0 0
    %3635 = vmatpush1.bf16.msra.mxu0 0
    %3636 = vmatprep.subr.bf16.mxu0 0
    %3637 = vmatpush1.bf16.msra.mxu0 %v3618
    %3638 = vmatprep.subr.bf16.mxu0 0
    %3639 = vmatpush1.bf16.msra.mxu0 %v3617
    %3640 = vmatprep.subr.bf16.mxu0 0
    %3641 = vmatpush2.bf16.msra.mxu0 0
    %3642 = vmatprep.subr.bf16.mxu0 0
    %3643 = vmatpush2.bf16.msra.mxu0 0
    %3644 = vmatprep.subr.bf16.mxu0 0
    %3645 = vmatpush2.bf16.msra.mxu0 0
    %3646 = vmatprep.subr.bf16.mxu0 0
    %3647 = vmatpush2.bf16.msra.mxu0 0
    %3648 = vmatprep.subr.bf16.mxu0 0
    %3649 = vmatpush2.bf16.msra.mxu0 0
    %3650 = vmatprep.subr.bf16.mxu0 0
    %3651 = vmatpush2.bf16.msra.mxu0 0
    %3652 = vmatprep.subr.bf16.mxu0 0
    %3653 = vmatpush2.bf16.msra.mxu0 0
    %3654 = vmatprep.subr.bf16.mxu0 0
    %3655 = vmatpush2.bf16.msra.mxu0 0
    %3656 = vmatprep.mubr.bf16.mxu0 0
    %3657 = vmatmul.mubr.bf16.gmra.mxu0 %v3622
    %v3658 = vpop.f32.mrf.mxu0
    %v3659 = vadd.f32 %v3607, %v3658
    %v3660 = vpop.f32.mrf.mxu0
    %v3661 = vpop.f32.mrf.mxu0
    %v3662 = vadd.f32 %v3607, %v3661
    %v3663 = vpop.f32.mrf.mxu0
    %3664 = vdwg.mxu0
    %v3665 = vadd.f32 %v2051, %v3659
    %v3666 = vadd.f32 %v2052, %v3662
    %v3667 = vld [vmem:[%s55] sm:$0x1]
    %v3668 = vld [vmem:[%s57] sm:$0x1]
    %v3669 = vsel %vm196, %v3665, 0.0
    %3670 = vadd.xlane.f32.xlu0 %v3669
    %v3671 = vpop.xlane.xlu0 %3670
    %v3672 = vsel %vm196, %v3666, 0.0
    %3673 = vadd.xlane.f32.xlu0 %v3672
    %v3674 = vpop.xlane.xlu0 %3673
    %v3675 = vmul.f32 %v3671, %v1799
    %v3676 = vmul.f32 %v3674, %v1799
    %v3677 = vsub.f32 %v3665, %v3675
    %v3678 = vsub.f32 %v3666, %v3676
    %v3679 = vmul.f32 %v3677, %v3677
    %v3680 = vmul.f32 %v3678, %v3678
    %v3681 = vsel %vm196, %v3679, 0.0
    %3682 = vadd.xlane.f32.xlu0 %v3681
    %v3683 = vpop.xlane.xlu0 %3682
    %v3684 = vsel %vm196, %v3680, 0.0
    %3685 = vadd.xlane.f32.xlu0 %v3684
    %v3686 = vpop.xlane.xlu0 %3685
    %v3687 = vmul.f32 %v3683, %v1799
    %v3688 = vmul.f32 %v3686, %v1799
    %v3689 = vadd.f32 %v3687, 1e-05
    %v3690 = vadd.f32 %v3688, 1e-05
    %v3691 = vrsqrt.pop %v3689
    %v3692 = vrsqrt.pop %v3690
    %v3693 = vmul.f32 %v3677, %v3691
    %v3694 = vmul.f32 %v3678, %v3692
    %v3696 = vlaneseq
    %v3697 = vshrl.u32 %v3696, 7
    %v3698 = vsub.s32 0, %v3697
    %v3699 = vrot.slane %v3667, %v3698
    %v3701 = vmul.f32 %v3693, %v3699
    %v3702 = vmul.f32 %v3694, %v3699
    %v3704 = vlaneseq
    %v3705 = vshrl.u32 %v3704, 7
    %v3706 = vsub.s32 0, %v3705
    %v3707 = vrot.slane %v3668, %v3706
    %v3709 = vadd.f32 %v3701, %v3707
    %v3710 = vadd.f32 %v3702, %v3707
    %v3711 = vpack.c.bf16 %v3710, %v3709
    %v3712 = vld [vmem:[%s59] sm:$0xf]
    %v3713 = vld [vmem:[%s59 + $0x4] sm:$0xf]
    %v3714 = vld [vmem:[%s59 + $0x8] sm:$0xf]
    %v3715 = vld [vmem:[%s59 + $0xc] sm:$0xf]
    %v3716 = vld [vmem:[%s61] sm:$0x1]
    %v3718 = vlaneseq
    %v3719 = vshrl.u32 %v3718, 7
    %v3720 = vsub.s32 0, %v3719
    %v3721 = vrot.slane %v3716, %v3720
    %v3727 = vunpack.c.l.b16 %v3712
    %v3728 = vunpack.c.l.b16 %v3713
    %v3729 = vunpack.c.l.b16 %v3714
    %v3730 = vunpack.c.l.b16 %v3715
    %v3731 = vpack.c.b16 %v3728, %v3727
    %v3732 = vpack.c.b16 %v3730, %v3729
    %v3736 = vsel %vm196, %v3711, 0
    %3738 = vmatprep.subr.bf16.mxu0 0
    %3739 = vmatpush1.bf16.msra.mxu0 0
    %3740 = vmatprep.subr.bf16.mxu0 0
    %3741 = vmatpush1.bf16.msra.mxu0 0
    %3742 = vmatprep.subr.bf16.mxu0 0
    %3743 = vmatpush1.bf16.msra.mxu0 0
    %3744 = vmatprep.subr.bf16.mxu0 0
    %3745 = vmatpush1.bf16.msra.mxu0 0
    %3746 = vmatprep.subr.bf16.mxu0 0
    %3747 = vmatpush1.bf16.msra.mxu0 0
    %3748 = vmatprep.subr.bf16.mxu0 0
    %3749 = vmatpush1.bf16.msra.mxu0 0
    %3750 = vmatprep.subr.bf16.mxu0 0
    %3751 = vmatpush1.bf16.msra.mxu0 %v3732
    %3752 = vmatprep.subr.bf16.mxu0 0
    %3753 = vmatpush1.bf16.msra.mxu0 %v3731
    %3754 = vmatprep.subr.bf16.mxu0 0
    %3755 = vmatpush2.bf16.msra.mxu0 0
    %3756 = vmatprep.subr.bf16.mxu0 0
    %3757 = vmatpush2.bf16.msra.mxu0 0
    %3758 = vmatprep.subr.bf16.mxu0 0
    %3759 = vmatpush2.bf16.msra.mxu0 0
    %3760 = vmatprep.subr.bf16.mxu0 0
    %3761 = vmatpush2.bf16.msra.mxu0 0
    %3762 = vmatprep.subr.bf16.mxu0 0
    %3763 = vmatpush2.bf16.msra.mxu0 0
    %3764 = vmatprep.subr.bf16.mxu0 0
    %3765 = vmatpush2.bf16.msra.mxu0 0
    %3766 = vmatprep.subr.bf16.mxu0 0
    %3767 = vmatpush2.bf16.msra.mxu0 0
    %3768 = vmatprep.subr.bf16.mxu0 0
    %3769 = vmatpush2.bf16.msra.mxu0 0
    %3770 = vmatprep.mubr.bf16.mxu0 0
    %3771 = vmatmul.mubr.bf16.gmra.mxu0 %v3736
    %v3772 = vpop.f32.mrf.mxu0
    %v3773 = vadd.f32 %v3721, %v3772
    %v3774 = vpop.f32.mrf.mxu0
    %v3775 = vpop.f32.mrf.mxu0
    %v3776 = vadd.f32 %v3721, %v3775
    %v3777 = vpop.f32.mrf.mxu0
    %3778 = vdwg.mxu0
    %v3779 = vmul.f32 %v3773, %v3773
    %v3780 = vmul.f32 %v3776, %v3776
    %v3781 = vmul.f32 %v3773, %v3779
    %v3782 = vmul.f32 %v3776, %v3780
    %v3783 = vmul.f32 %v3781, 0.044715
    %v3784 = vmul.f32 %v3782, 0.044715
    %v3785 = vadd.f32 %v3773, %v3783
    %v3786 = vadd.f32 %v3776, %v3784
    %v3787 = vmul.f32 %v3785, 0.7978846
    %v3788 = vmul.f32 %v3786, 0.7978846
    %v3789 = vtanh.pop %v3787
    %v3790 = vtanh.pop %v3788
    %v3791 = vadd.f32 %v3789, 1.0
    %v3792 = vadd.f32 %v3790, 1.0
    %v3793 = vmul.f32 %v3791, 0.5
    %v3794 = vmul.f32 %v3792, 0.5
    %v3795 = vmul.f32 %v3773, %v3793
    %v3796 = vmul.f32 %v3776, %v3794
    %v3797 = vpack.c.bf16 %v3796, %v3795
    %v3798 = vld [vmem:[%s63] sm:$0xf]
    %v3799 = vld [vmem:[%s63 + $0x4] sm:$0xf]
    %v3800 = vld [vmem:[%s63 + $0x8] sm:$0xf]
    %v3801 = vld [vmem:[%s63 + $0xc] sm:$0xf]
    %v3802 = vld [vmem:[%s63 + $0x10] sm:$0xf]
    %v3803 = vld [vmem:[%s63 + $0x14] sm:$0xf]
    %v3804 = vld [vmem:[%s63 + $0x18] sm:$0xf]
    %v3805 = vld [vmem:[%s63 + $0x1c] sm:$0xf]
    %v3806 = vld [vmem:[%s65] sm:$0x1]
    %v3808 = vlaneseq
    %v3809 = vshrl.u32 %v3808, 7
    %v3810 = vsub.s32 0, %v3809
    %v3811 = vrot.slane %v3806, %v3810
    %v3821 = vunpack.c.l.b16 %v3798
    %v3822 = vunpack.c.l.b16 %v3799
    %v3823 = vunpack.c.l.b16 %v3800
    %v3824 = vunpack.c.l.b16 %v3801
    %v3825 = vunpack.c.l.b16 %v3802
    %v3826 = vunpack.c.l.b16 %v3803
    %v3827 = vunpack.c.l.b16 %v3804
    %v3828 = vunpack.c.l.b16 %v3805
    %v3829 = vpack.c.b16 %v3822, %v3821
    %v3830 = vpack.c.b16 %v3824, %v3823
    %v3831 = vpack.c.b16 %v3826, %v3825
    %v3832 = vpack.c.b16 %v3828, %v3827
    %v3838 = vsel %vm1962, %v3797, 0
    %3840 = vmatprep.subr.bf16.mxu0 0
    %3841 = vmatpush1.bf16.msra.mxu0 0
    %3842 = vmatprep.subr.bf16.mxu0 0
    %3843 = vmatpush1.bf16.msra.mxu0 0
    %3844 = vmatprep.subr.bf16.mxu0 0
    %3845 = vmatpush1.bf16.msra.mxu0 0
    %3846 = vmatprep.subr.bf16.mxu0 0
    %3847 = vmatpush1.bf16.msra.mxu0 0
    %3848 = vmatprep.subr.bf16.mxu0 0
    %3849 = vmatpush1.bf16.msra.mxu0 %v3832
    %3850 = vmatprep.subr.bf16.mxu0 0
    %3851 = vmatpush1.bf16.msra.mxu0 %v3831
    %3852 = vmatprep.subr.bf16.mxu0 0
    %3853 = vmatpush1.bf16.msra.mxu0 %v3830
    %3854 = vmatprep.subr.bf16.mxu0 0
    %3855 = vmatpush1.bf16.msra.mxu0 %v3829
    %3856 = vmatprep.subr.bf16.mxu0 0
    %3857 = vmatpush2.bf16.msra.mxu0 0
    %3858 = vmatprep.subr.bf16.mxu0 0
    %3859 = vmatpush2.bf16.msra.mxu0 0
    %3860 = vmatprep.subr.bf16.mxu0 0
    %3861 = vmatpush2.bf16.msra.mxu0 0
    %3862 = vmatprep.subr.bf16.mxu0 0
    %3863 = vmatpush2.bf16.msra.mxu0 0
    %3864 = vmatprep.subr.bf16.mxu0 0
    %3865 = vmatpush2.bf16.msra.mxu0 0
    %3866 = vmatprep.subr.bf16.mxu0 0
    %3867 = vmatpush2.bf16.msra.mxu0 0
    %3868 = vmatprep.subr.bf16.mxu0 0
    %3869 = vmatpush2.bf16.msra.mxu0 0
    %3870 = vmatprep.subr.bf16.mxu0 0
    %3871 = vmatpush2.bf16.msra.mxu0 0
    %3872 = vmatprep.mubr.bf16.mxu0 0
    %3873 = vmatmul.mubr.bf16.gmra.mxu0 %v3838
    %v3874 = vpop.f32.mrf.mxu0
    %v3875 = vadd.f32 %v3811, %v3874
    %v3876 = vpop.f32.mrf.mxu0
    %v3877 = vpop.f32.mrf.mxu0
    %v3878 = vadd.f32 %v3811, %v3877
    %v3879 = vpop.f32.mrf.mxu0
    %3880 = vdwg.mxu0
    %v3881 = vadd.f32 %v3709, %v3875
    %v3882 = vadd.f32 %v3710, %v3878
    %v3883 = vld [vmem:[%s67] sm:$0x1]
    %v3884 = vld [vmem:[%s69] sm:$0x1]
    %v3885 = vsel %vm196, %v3881, 0.0
    %3886 = vadd.xlane.f32.xlu0 %v3885
    %v3887 = vpop.xlane.xlu0 %3886
    %v3888 = vsel %vm196, %v3882, 0.0
    %3889 = vadd.xlane.f32.xlu0 %v3888
    %v3890 = vpop.xlane.xlu0 %3889
    %v3891 = vmul.f32 %v3887, %v1799
    %v3892 = vmul.f32 %v3890, %v1799
    %v3893 = vsub.f32 %v3881, %v3891
    %v3894 = vsub.f32 %v3882, %v3892
    %v3895 = vmul.f32 %v3893, %v3893
    %v3896 = vmul.f32 %v3894, %v3894
    %v3897 = vsel %vm196, %v3895, 0.0
    %3898 = vadd.xlane.f32.xlu0 %v3897
    %v3899 = vpop.xlane.xlu0 %3898
    %v3900 = vsel %vm196, %v3896, 0.0
    %3901 = vadd.xlane.f32.xlu0 %v3900
    %v3902 = vpop.xlane.xlu0 %3901
    %v3903 = vmul.f32 %v3899, %v1799
    %v3904 = vmul.f32 %v3902, %v1799
    %v3905 = vadd.f32 %v3903, 1e-05
    %v3906 = vadd.f32 %v3904, 1e-05
    %v3907 = vrsqrt.pop %v3905
    %v3908 = vrsqrt.pop %v3906
    %v3909 = vmul.f32 %v3893, %v3907
    %v3910 = vmul.f32 %v3894, %v3908
    %v3912 = vlaneseq
    %v3913 = vshrl.u32 %v3912, 7
    %v3914 = vsub.s32 0, %v3913
    %v3915 = vrot.slane %v3883, %v3914
    %v3917 = vmul.f32 %v3909, %v3915
    %v3918 = vmul.f32 %v3910, %v3915
    %v3920 = vlaneseq
    %v3921 = vshrl.u32 %v3920, 7
    %v3922 = vsub.s32 0, %v3921
    %v3923 = vrot.slane %v3884, %v3922
    %v3925 = vadd.f32 %v3917, %v3923
    %v3926 = vadd.f32 %v3918, %v3923
    %v3927 = vld [vmem:[%s5] sm:$0xff]
    %v3928 = vld [vmem:[%s5 + $0x8] sm:$0xff]
    %3930 = vset.pattern.permute.xlu0 0
    %3931 = vperm.xlu0 %3930, %v3927
    %v3932 = vpop.permute.xlu0 %3931
    %3935 = vset.pattern.permute.xlu0 0
    %3936 = vperm.xlu0 %3935, %v3928
    %v3937 = vpop.permute.xlu0 %3936
    %v3939 = vmul.f32 %v3925, %v3932
    %v3940 = vmul.f32 %v3926, %v3937
    %v3941 = vsel %vm196, %v3939, 0.0
    %v3942 = vrot.slane %v3941, 4
    %v3943 = vadd.f32 %v3941, %v3942
    %v3944 = vrot.slane %v3943, 2
    %v3945 = vadd.f32 %v3943, %v3944
    %v3946 = vrot.slane %v3945, 1
    %v3947 = vadd.f32 %v3945, %v3946
    %v3948 = vsel %vm196, %v3940, 0.0
    %v3949 = vrot.slane %v3948, 4
    %v3950 = vadd.f32 %v3948, %v3949
    %v3951 = vrot.slane %v3950, 2
    %v3952 = vadd.f32 %v3950, %v3951
    %v3953 = vrot.slane %v3952, 1
    %v3954 = vadd.f32 %v3952, %v3953
    %vm3955 = vcmask 7168
    %v3956 = vsel %vm3955, %v3927, 0.0
    %v3957 = vrot.slane %v3956, 4
    %v3958 = vadd.f32 %v3956, %v3957
    %v3959 = vrot.slane %v3958, 2
    %v3960 = vadd.f32 %v3958, %v3959
    %v3961 = vrot.slane %v3960, 1
    %v3962 = vadd.f32 %v3960, %v3961
    %v3963 = vsel %vm3955, %v3928, 0.0
    %v3964 = vrot.slane %v3963, 4
    %v3965 = vadd.f32 %v3963, %v3964
    %v3966 = vrot.slane %v3965, 2
    %v3967 = vadd.f32 %v3965, %v3966
    %v3968 = vrot.slane %v3967, 1
    %v3969 = vadd.f32 %v3967, %v3968
    %v3970 = vmax.f32 %v3962, 1.0
    %v3971 = vmax.f32 %v3969, 1.0
    %v3972 = vrcp.pop %v3970
    %v3973 = vrcp.pop %v3971
    %3975 = vset.pattern.permute.xlu0 0
    %3976 = vperm.xlu0 %3975, %v3972
    %v3977 = vpop.permute.xlu0 %3976
    %3980 = vset.pattern.permute.xlu0 0
    %3981 = vperm.xlu0 %3980, %v3973
    %v3982 = vpop.permute.xlu0 %3981
    %v3984 = vmul.f32 %v3947, %v3977
    %v3985 = vmul.f32 %v3954, %v3982
    %v3986 = vpack.c.bf16 %v3984, %v3984
    %v3987 = vpack.c.bf16 %v3985, %v3985
    %v3988 = vld [vmem:[%s71] sm:$0xf]
    %v3989 = vld [vmem:[%s71 + $0x4] sm:$0xf]
    %v3990 = vld [vmem:[%s71 + $0x8] sm:$0xf]
    %v3991 = vld [vmem:[%s71 + $0xc] sm:$0xf]
    %v3994 = vunpack.c.l.b16 %v3986
    %v3995 = vunpack.c.l.b16 %v3987
    %vm3996 = vcmask 1041409
    %v3997 = vsel %vm3996, %v3995, %v3994
    %v3998 = vpack.c.b16 %v3997, %v3997
    %v4003 = vunpack.c.l.b16 %v3988
    %v4004 = vunpack.c.l.b16 %v3989
    %v4005 = vunpack.c.l.b16 %v3990
    %v4006 = vunpack.c.l.b16 %v3991
    %v4007 = vpack.c.b16 %v4004, %v4003
    %v4008 = vpack.c.b16 %v4006, %v4005
    %v4012 = vsel %vm196, %v3998, 0
    %4014 = vmatprep.subr.bf16.mxu0 0
    %4015 = vmatpush1.bf16.msra.mxu0 0
    %4016 = vmatprep.subr.bf16.mxu0 0
    %4017 = vmatpush1.bf16.msra.mxu0 0
    %4018 = vmatprep.subr.bf16.mxu0 0
    %4019 = vmatpush1.bf16.msra.mxu0 0
    %4020 = vmatprep.subr.bf16.mxu0 0
    %4021 = vmatpush1.bf16.msra.mxu0 0
    %4022 = vmatprep.subr.bf16.mxu0 0
    %4023 = vmatpush1.bf16.msra.mxu0 0
    %4024 = vmatprep.subr.bf16.mxu0 0
    %4025 = vmatpush1.bf16.msra.mxu0 0
    %4026 = vmatprep.subr.bf16.mxu0 0
    %4027 = vmatpush1.bf16.msra.mxu0 %v4008
    %4028 = vmatprep.subr.bf16.mxu0 0
    %4029 = vmatpush1.bf16.msra.mxu0 %v4007
    %4030 = vmatprep.subr.bf16.mxu0 0
    %4031 = vmatpush2.bf16.msra.mxu0 0
    %4032 = vmatprep.subr.bf16.mxu0 0
    %4033 = vmatpush2.bf16.msra.mxu0 0
    %4034 = vmatprep.subr.bf16.mxu0 0
    %4035 = vmatpush2.bf16.msra.mxu0 0
    %4036 = vmatprep.subr.bf16.mxu0 0
    %4037 = vmatpush2.bf16.msra.mxu0 0
    %4038 = vmatprep.subr.bf16.mxu0 0
    %4039 = vmatpush2.bf16.msra.mxu0 0
    %4040 = vmatprep.subr.bf16.mxu0 0
    %4041 = vmatpush2.bf16.msra.mxu0 0
    %4042 = vmatprep.subr.bf16.mxu0 0
    %4043 = vmatpush2.bf16.msra.mxu0 0
    %4044 = vmatprep.subr.bf16.mxu0 0
    %4045 = vmatpush2.bf16.msra.mxu0 0
    %4046 = vmatprep.mubr.bf16.mxu0 0
    %4047 = vmatmul.mubr.bf16.gmra.mxu0 %v4012
    %v4048 = vpop.f32.mrf.mxu0
    %v4049 = vadd.f32 0.0, %v4048
    %v4050 = vpop.f32.mrf.mxu0
    %v4051 = vpop.f32.mrf.mxu0
    %v4052 = vpop.f32.mrf.mxu0
    %4053 = vdwg.mxu0
    %v4054 = vmul.f32 %v4049, %v4049
    %v4055 = vmul.f32 %v4049, %v4054
    %v4056 = vmul.f32 %v4055, 0.044715
    %v4057 = vadd.f32 %v4049, %v4056
    %v4058 = vmul.f32 %v4057, 0.7978846
    %v4059 = vtanh.pop %v4058
    %v4060 = vadd.f32 %v4059, 1.0
    %v4061 = vmul.f32 %v4060, 0.5
    %v4062 = vmul.f32 %v4049, %v4061
    %v4063 = vpack.c.bf16 %v4062, %v4062
    %v4064 = vld [vmem:[%s73] sm:$0xf]
    %v4065 = vld [vmem:[%s73 + $0x4] sm:$0xf]
    %v4066 = vld [vmem:[%s73 + $0x8] sm:$0xf]
    %v4070 = vunpack.c.l.b16 %v4064
    %v4071 = vunpack.c.l.b16 %v4065
    %v4072 = vunpack.c.l.b16 %v4066
    %v4073 = vpack.c.b16 %v4071, %v4070
    %v4074 = vpack.c.b16 %v4072, %v4072
    %vm4076 = vcmask 195584
    %v4078 = vsel %vm4076, %v4063, 0
    %vm4080 = vcmask 1043456
    %v4082 = vsel %vm4080, %v4074, 0
    %4084 = vmatprep.subr.bf16.mxu0 0
    %4085 = vmatpush1.bf16.msra.mxu0 0
    %4086 = vmatprep.subr.bf16.mxu0 0
    %4087 = vmatpush1.bf16.msra.mxu0 0
    %4088 = vmatprep.subr.bf16.mxu0 0
    %4089 = vmatpush1.bf16.msra.mxu0 0
    %4090 = vmatprep.subr.bf16.mxu0 0
    %4091 = vmatpush1.bf16.msra.mxu0 0
    %4092 = vmatprep.subr.bf16.mxu0 0
    %4093 = vmatpush1.bf16.msra.mxu0 0
    %4094 = vmatprep.subr.bf16.mxu0 0
    %4095 = vmatpush1.bf16.msra.mxu0 0
    %4096 = vmatprep.subr.bf16.mxu0 0
    %4097 = vmatpush1.bf16.msra.mxu0 %v4082
    %4098 = vmatprep.subr.bf16.mxu0 0
    %4099 = vmatpush1.bf16.msra.mxu0 %v4073
    %4100 = vmatprep.subr.bf16.mxu0 0
    %4101 = vmatpush2.bf16.msra.mxu0 0
    %4102 = vmatprep.subr.bf16.mxu0 0
    %4103 = vmatpush2.bf16.msra.mxu0 0
    %4104 = vmatprep.subr.bf16.mxu0 0
    %4105 = vmatpush2.bf16.msra.mxu0 0
    %4106 = vmatprep.subr.bf16.mxu0 0
    %4107 = vmatpush2.bf16.msra.mxu0 0
    %4108 = vmatprep.subr.bf16.mxu0 0
    %4109 = vmatpush2.bf16.msra.mxu0 0
    %4110 = vmatprep.subr.bf16.mxu0 0
    %4111 = vmatpush2.bf16.msra.mxu0 0
    %4112 = vmatprep.subr.bf16.mxu0 0
    %4113 = vmatpush2.bf16.msra.mxu0 0
    %4114 = vmatprep.subr.bf16.mxu0 0
    %4115 = vmatpush2.bf16.msra.mxu0 0
    %4116 = vmatprep.mubr.bf16.mxu0 0
    %4117 = vmatmul.mubr.bf16.gmra.mxu0 %v4078
    %v4118 = vpop.f32.mrf.mxu0
    %v4119 = vadd.f32 0.0, %v4118
    %v4120 = vpop.f32.mrf.mxu0
    %v4121 = vpop.f32.mrf.mxu0
    %v4122 = vpop.f32.mrf.mxu0
    %4123 = vdwg.mxu0
    %4124 = vst [vmem:[#allocation3] sm:$0x3] %v4119
    // Predicated region
    $region150: #{forward.1} parent=1 // pred_check
      _
    $region151: #{forward.1} parent=1 // pred_check_branch
      %4126 = sbr.rel (0) target = $region153
    $region152: #{forward.1} parent=1 // pred_region
      %s4128 = ssub.s32 32, 32
      %4129 = vsyncadd [#allocation4], %s4128
      %s4131 = sshll.u32 [#allocation3], 4
      %s4132 = int_to_ptr.vmem [resolvable:$true] %s4131
      %4134 = dma.vmem_to_hbm [thread:$0]  %s4132, 32, %s75, [#allocation4]
    $region153: #{forward.1} parent=1 // pred_fallthru
      _
    // Predicated region
    $region154: #{forward.1} parent=1 // pred_check
      _
    $region155: #{forward.1} parent=1 // pred_check_branch
      %4136 = sbr.rel (0) target = $region157
    $region156: #{forward.1} parent=1 // pred_region
      %4137 = dma.done [#allocation4], 32
    $region157: #{forward.1} parent=1 // pred_fallthru
      _
    %4138 = vsyncpa [#allocation4], 1

</llo_original>
